<compile_context>
chip_gen: v6e
topology: v6e:2x2x1
jax: 0.10.0
libtpu: 0.0.40
codegen_flags: <defaults>
</compile_context>

<pallas_src>
import numpy as np

import jax
import jax.numpy as jnp
from jax import lax
from jax.experimental import pallas as pl
from jax.experimental.pallas import tpu as pltpu

_BN_EPS = 1e-5


# ----------------------------- small helpers --------------------------------
def _swish(x):
    return x * jax.nn.sigmoid(x)


def _relu(x):
    return jnp.maximum(x, 0.0)


def _make_col_masks(H, W, radius):
    """hm[d+radius, 0, m] = 1 iff col(m) + d in [0, W)  (numpy constant).

    Staging the plane for horizontal tap offset dx pre-multiplies by hm[-dx]:
    columns whose shifted read would wrap into an adjacent image row are zeroed
    once per staging write instead of once per tap.
    """
    col = np.tile(np.arange(W), H)
    hm = np.zeros((2 * radius + 1, 1, H * W), np.float32)
    for d in range(-radius, radius + 1):
        hm[d + radius, 0] = ((col + d >= 0) & (col + d < W)).astype(np.float32)
    return hm


# ----------------------------- fused Pallas kernel ---------------------------
def _make_fused_kernel(n, bb, H, W, S, ch_first, ch_mid, ch_hid, ch_out, c_scr):
    """Whole CSPStage_RTM forward; `bb` batch elements per grid step.

    Activations are channel-major (C, M=H*W) slabs.  Spatial convs read shifted
    lane windows of a zero-halo'd VMEM scratch that holds one pre-column-masked
    copy of the plane per horizontal tap offset dx (5 bands of c_scr rows).
    """
    M = H * W
    ROWS = 5 * c_scr

    def kernel(x_ref, hm_ref, w12_ref, b12_ref, *rest):
        blk_refs = rest[:6 * n]
        w3_ref, b3_ref, o_ref, pad_ref = rest[6 * n:]

        # Zero only the two halo-border lane regions (interior is always fully
        # overwritten before it is read).  Unconditional: each core owns its
        # scratch when the grid axis is "parallel".
        pad_ref[:, 0:S] = jnp.zeros((ROWS, S), jnp.float32)
        pad_ref[:, S + M:S + M + S] = jnp.zeros((ROWS, S), jnp.float32)

        def stage(plane, ch, dxs):
            # One pre-masked copy of `plane` per horizontal offset dx.
            for dx in dxs:
                v = plane if dx == 0 else plane * hm_ref[2 - dx]
                r0 = (dx + 2) * c_scr
                pad_ref[r0:r0 + ch, S:S + M] = v

        def window(ch, dy, dx):
            r0 = (dx + 2) * c_scr
            s = dy * W + dx
            return pad_ref[r0:r0 + ch, S + s:S + s + M]

        for b in range(bb):
            x = x_ref[b]                                           # (Cin, M)

            # conv1 + conv2 (both 1x1 ConvBNAct, swish) fused into one matmul.
            t = _swish(jnp.dot(w12_ref[...], x,
                               preferred_element_type=jnp.float32)
                       + b12_ref[...])
            y1 = t[0:ch_first]
            y2 = t[ch_first:ch_first + ch_mid]

            mids = [y1]
            for i in range(n):
                wc_ref, bc_ref, wdw_ref, bdw_ref, wpw_ref, bpw_ref = \
                    blk_refs[6 * i:6 * i + 6]

                # ---- ConvBNAct 3x3 (ch_mid -> ch_hid, swish): per dx the 3
                #      vertical taps are concatenated along the contraction dim
                #      (free sublane stack) -> 3 matmuls of K = 3*ch_mid.
                stage(y2, ch_mid, (-1, 0, 1))
                acc3 = None
                for dx in (-1, 0, 1):
                    stack = jnp.concatenate(
                        [window(ch_mid, dy, dx) for dy in (-1, 0, 1)], axis=0)
                    part = jnp.dot(wc_ref[dx + 1], stack,
                                   preferred_element_type=jnp.float32)
                    acc3 = part if acc3 is None else acc3 + part
                h = _swish(acc3 + bc_ref[...])

                # ---- depthwise 5x5 (ch_hid), BN + ReLU: 25 unmasked per-channel
                #      FMAs on lane-dense slabs (VPU work).
                stage(h, ch_hid, (-2, -1, 0, 1, 2))
                d = None
                for dy in (-2, -1, 0, 1, 2):
                    for dx in (-2, -1, 0, 1, 2):
                        tap = (dy + 2) * 5 + (dx + 2)
                        term = window(ch_hid, dy, dx) * wdw_ref[tap]
                        d = term if d is None else d + term
                h = _relu(d + bdw_ref[...])

                # ---- pointwise 1x1 (ch_hid -> ch_mid), BN + ReLU.
                h = _relu(jnp.dot(wpw_ref[...], h,
                                  preferred_element_type=jnp.float32)
                          + bpw_ref[...])

                # ---- residual shortcut.
                y2 = y2 + h
                mids.append(y2)

            # conv3: 1x1 over the channel concat -> single K = ch_first+n*ch_mid
            # matmul; the concat is a free sublane stack of full vregs.
            cat = jnp.concatenate(mids, axis=0)
            out = _swish(jnp.dot(w3_ref[...], cat,
                                 preferred_element_type=jnp.float32)
                         + b3_ref[...])
            o_ref[b] = out.astype(o_ref.dtype)

    return kernel


# ----------------------------- Pallas wrapper --------------------------------
@jax.jit
def cspstage_rtm_forward(x_nchw, params):
    """CSPStage_RTM forward via a single fused Pallas TPU kernel (NCHW in/out)."""
    B, Cin, H, W = x_nchw.shape
    M = H * W

    w1 = params["conv1_w"][0, 0]              # (Cin, ch_first)  HWIO[0,0]
    b1 = params["conv1_b"]
    w2 = params["conv2_w"][0, 0]
    b2 = params["conv2_b"]
    w3 = params["conv3_w"][0, 0]
    b3 = params["conv3_b"]

    ch_first = w1.shape[1]
    ch_mid = w2.shape[1]
    ch_out = w3.shape[1]
    n = len(params["blocks"])
    ch_hid = params["blocks"][0]["cv_w"].shape[-1]
    c_scr = max(ch_mid, ch_hid)

    # Halo width (lanes) each side of the staged plane; covers the largest
    # flattened tap shift (2*W + 2 for the 5x5) and is lane-aligned so the
    # interior staging stores are unmasked.
    S = ((2 * W + 2 + 127) // 128) * 128

    hmask = jnp.asarray(_make_col_masks(H, W, 2))                    # (5,1,M)

    # Channel-major weights: (Cout, Cin) matrices / per-tap vectors.
    w12 = jnp.concatenate([w1.T, w2.T], axis=0)                      # (cf+cm, Cin)
    b12 = jnp.concatenate([b1, b2]).reshape(-1, 1)
    w3t = w3.T                                                       # (ch_out, cat)
    b3t = b3.reshape(-1, 1)

    # NCHW flattens directly to channel-major (B, C, H*W): no transpose.
    x2 = x_nchw.reshape(B, Cin, M)

    # Single-TC chips (v5e/v6e): fold batch into one grid step; multi-core
    # chips (v4/v5p megacore, v7x): one element per "parallel" step.
    kind = jax.devices()[0].device_kind.lower()
    single_tc = any(tag in kind for tag in
                    ("v5e", "v5 lite", "v5lite", "v6e", "v6 lite", "v6lite"))
    bb = B if single_tc else 1

    def _full(shape):
        zeros = (0,) * len(shape)
        return pl.BlockSpec(shape, lambda i, _z=zeros: _z)

    inputs = [x2, hmask, w12, b12]
    in_specs = [
        pl.BlockSpec((bb, Cin, M), lambda i: (i, 0, 0)),
        _full(hmask.shape),
        _full(w12.shape),
        _full(b12.shape),
    ]
    for blk in params["blocks"]:
        # (3,3,cm,ch) -> (kx, cout, ky*cm+ci) so each dx slice is a (ch, 3*cm)
        # matmul weight matching the [dy=-1,0,1] sublane-stacked input.
        wc = jnp.transpose(blk["cv_w"], (1, 3, 0, 2)).reshape(3, ch_hid, 3 * ch_mid)
        bc = blk["cv_b"].reshape(-1, 1)
        wdw = blk["dw_w"].reshape(25, ch_hid)[:, :, None]            # (25, ch, 1)
        bdw = blk["dw_b"].reshape(-1, 1)
        wpw = blk["pw_w"][0, 0].T                                    # (cm, ch)
        bpw = blk["pw_b"].reshape(-1, 1)
        for a in (wc, bc, wdw, bdw, wpw, bpw):
            inputs.append(a)
            in_specs.append(_full(a.shape))
    inputs += [w3t, b3t]
    in_specs += [_full(w3t.shape), _full(b3t.shape)]

    kernel = _make_fused_kernel(n, bb, H, W, S, ch_first, ch_mid, ch_hid,
                                ch_out, c_scr)

    out = pl.pallas_call(
        kernel,
        out_shape=jax.ShapeDtypeStruct((B, ch_out, M), jnp.float32),
        grid=(B // bb,),
        in_specs=in_specs,
        out_specs=pl.BlockSpec((bb, ch_out, M), lambda i: (i, 0, 0)),
        scratch_shapes=[pltpu.VMEM((5 * c_scr, 2 * S + M), jnp.float32)],
        compiler_params=pltpu.CompilerParams(
            dimension_semantics=("parallel",),
            vmem_limit_bytes=32 * 1024 * 1024),
    )(*inputs)

    return out.reshape(B, ch_out, H, W)


# ----------------------------- parameter setup -------------------------------
def _init_conv_bn(key, kh, kw, cin, cout):
    """conv(kh x kw, no bias) + BatchNorm (eval mode), folded to (w_hwio, bias)."""
    kw_, kg, kb, km, kv = jax.random.split(key, 5)
    w = 0.1 * jax.random.normal(kw_, (kh, kw, cin, cout), jnp.float32)
    gamma = 1.0 + 0.1 * jax.random.normal(kg, (cout,), jnp.float32)
    beta = 0.1 * jax.random.normal(kb, (cout,), jnp.float32)
    mean = 0.1 * jax.random.normal(km, (cout,), jnp.float32)
    var = 0.5 + 0.5 * jnp.abs(jax.random.normal(kv, (cout,), jnp.float32))
    scale = gamma / jnp.sqrt(var + _BN_EPS)
    return w * scale, beta - mean * scale


def make_params(key, ch_in, ch_hidden_ratio, ch_out, n):
    ch_first = ch_out // 2
    ch_mid = ch_out - ch_first
    ch_hid = int(ch_mid * ch_hidden_ratio)
    keys = jax.random.split(key, 3 + 3 * n)

    w1, b1 = _init_conv_bn(keys[0], 1, 1, ch_in, ch_first)
    w2, b2 = _init_conv_bn(keys[1], 1, 1, ch_in, ch_mid)
    blocks = []
    for i in range(n):
        kc, kd, kp = keys[3 + 3 * i], keys[4 + 3 * i], keys[5 + 3 * i]
        cv_w, cv_b = _init_conv_bn(kc, 3, 3, ch_mid, ch_hid)     # 3x3 ConvBNAct
        dw_w, dw_b = _init_conv_bn(kd, 5, 5, 1, ch_hid)          # 5x5 depthwise
        pw_w, pw_b = _init_conv_bn(kp, 1, 1, ch_hid, ch_mid)     # 1x1 pointwise
        blocks.append({"cv_w": cv_w, "cv_b": cv_b,
                       "dw_w": dw_w, "dw_b": dw_b,
                       "pw_w": pw_w, "pw_b": pw_b})
    w3, b3 = _init_conv_bn(keys[2], 1, 1, ch_first + n * ch_mid, ch_out)
    return {"conv1_w": w1, "conv1_b": b1,
            "conv2_w": w2, "conv2_b": b2,
            "conv3_w": w3, "conv3_b": b3,
            "blocks": blocks}


# ----------------------------- pure-JAX reference ----------------------------
def _ref_conv(x, w_hwio, b, act, groups=1):
    y = lax.conv_general_dilated(
        x, w_hwio, (1, 1), "SAME",
        dimension_numbers=("NHWC", "HWIO", "NHWC"),
        feature_group_count=groups)
    y = y + b.reshape(1, 1, 1, -1)
    return _swish(y) if act == "swish" else _relu(y)


@jax.jit
def cspstage_rtm_reference(x_nchw, params):
    """Pure-JAX (XLA conv) reference, same eval-mode-BN semantics."""
    x = jnp.transpose(x_nchw, (0, 2, 3, 1))
    y1 = _ref_conv(x, params["conv1_w"], params["conv1_b"], "swish")
    y2 = _ref_conv(x, params["conv2_w"], params["conv2_b"], "swish")
    mids = [y1]
    for blk in params["blocks"]:
        ch_hid = blk["cv_w"].shape[-1]
        t = _ref_conv(y2, blk["cv_w"], blk["cv_b"], "swish")
        d = _ref_conv(t, blk["dw_w"], blk["dw_b"], "relu", groups=ch_hid)
        p = _ref_conv(d, blk["pw_w"], blk["pw_b"], "relu")
        y2 = y2 + p
        mids.append(y2)
    cat = jnp.concatenate(mids, axis=-1)
    out = _ref_conv(cat, params["conv3_w"], params["conv3_b"], "swish")
    return jnp.transpose(out, (0, 3, 1, 2))


# --------------------------------- main ---------------------------------------
if __name__ == "__main__":
    # CSPStage_RTM('Depth', ch_in=16, ch_hidden_ratio=1.0, ch_out=32, n=2,
    #              act='swish', spp=False)
    B, ch_in, H, W = 2, 16, 16, 16
    ch_out, ch_hidden_ratio, n = 32, 1.0, 2

    root = jax.random.PRNGKey(0)
    k_x, k_p = jax.random.split(root)
    x = jax.random.normal(k_x, (B, ch_in, H, W), jnp.float32)   # NCHW like PyTorch
    params = make_params(k_p, ch_in, ch_hidden_ratio, ch_out, n)

    out = jax.block_until_ready(cspstage_rtm_forward(x, params))
    ref = jax.block_until_ready(cspstage_rtm_reference(x, params))

    assert out.shape == (B, ch_out, H, W), out.shape
    np.testing.assert_allclose(np.asarray(out), np.asarray(ref),
                               rtol=2e-4, atol=2e-4)
    print("KERNEL_OK")
</pallas_src>

<mosaic_0001>
module attributes {stable_mosaic.version = 11 : i64} {
  func.func @kernel(%arg0: i32, %arg1: memref<1x16x256xf32, #tpu.memory_space<vmem>>, %arg2: memref<5x1x256xf32, #tpu.memory_space<vmem>>, %arg3: memref<32x16xf32, #tpu.memory_space<vmem>>, %arg4: memref<32x1xf32, #tpu.memory_space<vmem>>, %arg5: memref<3x16x48xf32, #tpu.memory_space<vmem>>, %arg6: memref<16x1xf32, #tpu.memory_space<vmem>>, %arg7: memref<25x16x1xf32, #tpu.memory_space<vmem>>, %arg8: memref<16x1xf32, #tpu.memory_space<vmem>>, %arg9: memref<16x16xf32, #tpu.memory_space<vmem>>, %arg10: memref<16x1xf32, #tpu.memory_space<vmem>>, %arg11: memref<3x16x48xf32, #tpu.memory_space<vmem>>, %arg12: memref<16x1xf32, #tpu.memory_space<vmem>>, %arg13: memref<25x16x1xf32, #tpu.memory_space<vmem>>, %arg14: memref<16x1xf32, #tpu.memory_space<vmem>>, %arg15: memref<16x16xf32, #tpu.memory_space<vmem>>, %arg16: memref<16x1xf32, #tpu.memory_space<vmem>>, %arg17: memref<32x48xf32, #tpu.memory_space<vmem>>, %arg18: memref<32x1xf32, #tpu.memory_space<vmem>>, %arg19: memref<1x32x256xf32, #tpu.memory_space<vmem>>, %arg20: memref<80x512xf32, #tpu.memory_space<vmem>>) attributes {dimension_semantics = [#tpu.dimension_semantics<parallel>], iteration_bounds = array<i64: 2>, scalar_prefetch = 0 : i64, scratch_operands = 1 : i64, tpu.core_type = #tpu.core_type<tc>, window_params = [{transform_indices = @transform_0, window_bounds = array<i64: 1, 16, 256>}, {pipeline_mode = #tpu.pipeline_mode<synchronous>, transform_indices = @transform_1, window_bounds = array<i64: 5, 1, 256>}, {pipeline_mode = #tpu.pipeline_mode<synchronous>, transform_indices = @transform_2, window_bounds = array<i64: 32, 16>}, {pipeline_mode = #tpu.pipeline_mode<synchronous>, transform_indices = @transform_3, window_bounds = array<i64: 32, 1>}, {pipeline_mode = #tpu.pipeline_mode<synchronous>, transform_indices = @transform_4, window_bounds = array<i64: 3, 16, 48>}, {pipeline_mode = #tpu.pipeline_mode<synchronous>, transform_indices = @transform_5, window_bounds = array<i64: 16, 1>}, {pipeline_mode = #tpu.pipeline_mode<synchronous>, transform_indices = @transform_6, window_bounds = array<i64: 25, 16, 1>}, {pipeline_mode = #tpu.pipeline_mode<synchronous>, transform_indices = @transform_7, window_bounds = array<i64: 16, 1>}, {pipeline_mode = #tpu.pipeline_mode<synchronous>, transform_indices = @transform_8, window_bounds = array<i64: 16, 16>}, {pipeline_mode = #tpu.pipeline_mode<synchronous>, transform_indices = @transform_9, window_bounds = array<i64: 16, 1>}, {pipeline_mode = #tpu.pipeline_mode<synchronous>, transform_indices = @transform_10, window_bounds = array<i64: 3, 16, 48>}, {pipeline_mode = #tpu.pipeline_mode<synchronous>, transform_indices = @transform_11, window_bounds = array<i64: 16, 1>}, {pipeline_mode = #tpu.pipeline_mode<synchronous>, transform_indices = @transform_12, window_bounds = array<i64: 25, 16, 1>}, {pipeline_mode = #tpu.pipeline_mode<synchronous>, transform_indices = @transform_13, window_bounds = array<i64: 16, 1>}, {pipeline_mode = #tpu.pipeline_mode<synchronous>, transform_indices = @transform_14, window_bounds = array<i64: 16, 16>}, {pipeline_mode = #tpu.pipeline_mode<synchronous>, transform_indices = @transform_15, window_bounds = array<i64: 16, 1>}, {pipeline_mode = #tpu.pipeline_mode<synchronous>, transform_indices = @transform_16, window_bounds = array<i64: 32, 48>}, {pipeline_mode = #tpu.pipeline_mode<synchronous>, transform_indices = @transform_17, window_bounds = array<i64: 32, 1>}, {transform_indices = @transform_18, window_bounds = array<i64: 1, 32, 256>}]} {
    %cst = arith.constant 0.000000e+00 : f32
    %0 = vector.broadcast %cst : f32 to vector<80x128xf32>
    %c0 = arith.constant 0 : index
    %c0_0 = arith.constant 0 : index
    %1 = vector.load %arg20[%c0, %c0_0] : memref<80x512xf32, #tpu.memory_space<vmem>>, vector<80x128xf32>
    tpu.vector_store %arg20[%c0, %c0_0], %0 {strides = array<i32>} : memref<80x512xf32, #tpu.memory_space<vmem>>, vector<80x128xf32>,
    %cst_1 = arith.constant 0.000000e+00 : f32
    %2 = vector.broadcast %cst_1 : f32 to vector<80x128xf32>
    %c0_2 = arith.constant 0 : index
    %c384 = arith.constant 384 : index
    %3 = vector.load %arg20[%c0_2, %c384] : memref<80x512xf32, #tpu.memory_space<vmem>>, vector<80x128xf32>
    tpu.vector_store %arg20[%c0_2, %c384], %2 {strides = array<i32>} : memref<80x512xf32, #tpu.memory_space<vmem>>, vector<80x128xf32>,
    %c0_3 = arith.constant 0 : index
    %c0_4 = arith.constant 0 : index
    %c0_5 = arith.constant 0 : index
    %4 = vector.load %arg1[%c0_3, %c0_4, %c0_5] : memref<1x16x256xf32, #tpu.memory_space<vmem>>, vector<1x16x256xf32>
    %5 = vector.shape_cast %4 : vector<1x16x256xf32> to vector<16x256xf32>
    %c0_6 = arith.constant 0 : index
    %c0_7 = arith.constant 0 : index
    %6 = vector.load %arg3[%c0_6, %c0_7] : memref<32x16xf32, #tpu.memory_space<vmem>>, vector<32x16xf32>
    %cst_8 = arith.constant dense<0.000000e+00> : vector<32x256xf32>
    %7 = tpu.matmul %6, %5, %cst_8 {dimension_numbers = #tpu.dot_dimension_numbers<[1], [0], [0], [1], [0, 0, 1, 1], [], []>} : vector<32x16xf32>, vector<16x256xf32>, vector<32x256xf32> -> vector<32x256xf32>
    %c0_9 = arith.constant 0 : index
    %c0_10 = arith.constant 0 : index
    %8 = vector.load %arg4[%c0_9, %c0_10] : memref<32x1xf32, #tpu.memory_space<vmem>>, vector<32x1xf32>
    %9 = vector.broadcast %8 : vector<32x1xf32> to vector<32x256xf32>
    %10 = arith.addf %7, %9 : vector<32x256xf32>
    %11 = arith.negf %10 : vector<32x256xf32>
    %12 = math.exp %11 : vector<32x256xf32>
    %cst_11 = arith.constant 1.000000e+00 : f32
    %13 = vector.broadcast %cst_11 : f32 to vector<32x256xf32>
    %14 = arith.addf %13, %12 : vector<32x256xf32>
    %15 = arith.divf %13, %14 : vector<32x256xf32>
    %16 = arith.mulf %10, %15 : vector<32x256xf32>
    %17 = vector.extract_strided_slice %16 {offsets = [0, 0], sizes = [16, 256], strides = [1, 1]} : vector<32x256xf32> to vector<16x256xf32>
    %18 = vector.extract_strided_slice %16 {offsets = [16, 0], sizes = [16, 256], strides = [1, 1]} : vector<32x256xf32> to vector<16x256xf32>
    %c3 = arith.constant 3 : index
    %c0_12 = arith.constant 0 : index
    %c0_13 = arith.constant 0 : index
    %19 = vector.load %arg2[%c3, %c0_12, %c0_13] : memref<5x1x256xf32, #tpu.memory_space<vmem>>, vector<1x1x256xf32>
    %20 = vector.shape_cast %19 : vector<1x1x256xf32> to vector<1x256xf32>
    %21 = vector.broadcast %20 : vector<1x256xf32> to vector<16x256xf32>
    %22 = arith.mulf %18, %21 : vector<16x256xf32>
    %c16 = arith.constant 16 : index
    %c128 = arith.constant 128 : index
    %23 = vector.load %arg20[%c16, %c128] : memref<80x512xf32, #tpu.memory_space<vmem>>, vector<16x256xf32>
    tpu.vector_store %arg20[%c16, %c128], %22 {strides = array<i32>} : memref<80x512xf32, #tpu.memory_space<vmem>>, vector<16x256xf32>,
    %c32 = arith.constant 32 : index
    %c128_14 = arith.constant 128 : index
    %24 = vector.load %arg20[%c32, %c128_14] : memref<80x512xf32, #tpu.memory_space<vmem>>, vector<16x256xf32>
    tpu.vector_store %arg20[%c32, %c128_14], %18 {strides = array<i32>} : memref<80x512xf32, #tpu.memory_space<vmem>>, vector<16x256xf32>,
    %c1 = arith.constant 1 : index
    %c0_15 = arith.constant 0 : index
    %c0_16 = arith.constant 0 : index
    %25 = vector.load %arg2[%c1, %c0_15, %c0_16] : memref<5x1x256xf32, #tpu.memory_space<vmem>>, vector<1x1x256xf32>
    %26 = vector.shape_cast %25 : vector<1x1x256xf32> to vector<1x256xf32>
    %27 = vector.broadcast %26 : vector<1x256xf32> to vector<16x256xf32>
    %28 = arith.mulf %18, %27 : vector<16x256xf32>
    %c48 = arith.constant 48 : index
    %c128_17 = arith.constant 128 : index
    %29 = vector.load %arg20[%c48, %c128_17] : memref<80x512xf32, #tpu.memory_space<vmem>>, vector<16x256xf32>
    tpu.vector_store %arg20[%c48, %c128_17], %28 {strides = array<i32>} : memref<80x512xf32, #tpu.memory_space<vmem>>, vector<16x256xf32>,
    %c16_18 = arith.constant 16 : index
    %c111 = arith.constant 111 : index
    %30 = vector.load %arg20[%c16_18, %c111] : memref<80x512xf32, #tpu.memory_space<vmem>>, vector<16x256xf32>
    %c16_19 = arith.constant 16 : index
    %c127 = arith.constant 127 : index
    %31 = vector.load %arg20[%c16_19, %c127] : memref<80x512xf32, #tpu.memory_space<vmem>>, vector<16x256xf32>
    %c16_20 = arith.constant 16 : index
    %c143 = arith.constant 143 : index
    %32 = vector.load %arg20[%c16_20, %c143] : memref<80x512xf32, #tpu.memory_space<vmem>>, vector<16x256xf32>
    %33 = tpu.concatenate %30, %31, %32 in 0 : vector<16x256xf32>, vector<16x256xf32>, vector<16x256xf32> -> vector<48x256xf32>
    %c0_21 = arith.constant 0 : index
    %c0_22 = arith.constant 0 : index
    %c0_23 = arith.constant 0 : index
    %34 = vector.load %arg5[%c0_21, %c0_22, %c0_23] : memref<3x16x48xf32, #tpu.memory_space<vmem>>, vector<1x16x48xf32>
    %35 = vector.shape_cast %34 : vector<1x16x48xf32> to vector<16x48xf32>
    %cst_24 = arith.constant dense<0.000000e+00> : vector<16x256xf32>
    %36 = tpu.matmul %35, %33, %cst_24 {dimension_numbers = #tpu.dot_dimension_numbers<[1], [0], [0], [1], [0, 0, 1, 1], [], []>} : vector<16x48xf32>, vector<48x256xf32>, vector<16x256xf32> -> vector<16x256xf32>
    %c32_25 = arith.constant 32 : index
    %c112 = arith.constant 112 : index
    %37 = vector.load %arg20[%c32_25, %c112] : memref<80x512xf32, #tpu.memory_space<vmem>>, vector<16x256xf32>
    %c32_26 = arith.constant 32 : index
    %c128_27 = arith.constant 128 : index
    %38 = vector.load %arg20[%c32_26, %c128_27] : memref<80x512xf32, #tpu.memory_space<vmem>>, vector<16x256xf32>
    %c32_28 = arith.constant 32 : index
    %c144 = arith.constant 144 : index
    %39 = vector.load %arg20[%c32_28, %c144] : memref<80x512xf32, #tpu.memory_space<vmem>>, vector<16x256xf32>
    %40 = tpu.concatenate %37, %38, %39 in 0 : vector<16x256xf32>, vector<16x256xf32>, vector<16x256xf32> -> vector<48x256xf32>
    %c1_29 = arith.constant 1 : index
    %c0_30 = arith.constant 0 : index
    %c0_31 = arith.constant 0 : index
    %41 = vector.load %arg5[%c1_29, %c0_30, %c0_31] : memref<3x16x48xf32, #tpu.memory_space<vmem>>, vector<1x16x48xf32>
    %42 = vector.shape_cast %41 : vector<1x16x48xf32> to vector<16x48xf32>
    %cst_32 = arith.constant dense<0.000000e+00> : vector<16x256xf32>
    %43 = tpu.matmul %42, %40, %cst_32 {dimension_numbers = #tpu.dot_dimension_numbers<[1], [0], [0], [1], [0, 0, 1, 1], [], []>} : vector<16x48xf32>, vector<48x256xf32>, vector<16x256xf32> -> vector<16x256xf32>
    %44 = arith.addf %36, %43 : vector<16x256xf32>
    %c48_33 = arith.constant 48 : index
    %c113 = arith.constant 113 : index
    %45 = vector.load %arg20[%c48_33, %c113] : memref<80x512xf32, #tpu.memory_space<vmem>>, vector<16x256xf32>
    %c48_34 = arith.constant 48 : index
    %c129 = arith.constant 129 : index
    %46 = vector.load %arg20[%c48_34, %c129] : memref<80x512xf32, #tpu.memory_space<vmem>>, vector<16x256xf32>
    %c48_35 = arith.constant 48 : index
    %c145 = arith.constant 145 : index
    %47 = vector.load %arg20[%c48_35, %c145] : memref<80x512xf32, #tpu.memory_space<vmem>>, vector<16x256xf32>
    %48 = tpu.concatenate %45, %46, %47 in 0 : vector<16x256xf32>, vector<16x256xf32>, vector<16x256xf32> -> vector<48x256xf32>
    %c2 = arith.constant 2 : index
    %c0_36 = arith.constant 0 : index
    %c0_37 = arith.constant 0 : index
    %49 = vector.load %arg5[%c2, %c0_36, %c0_37] : memref<3x16x48xf32, #tpu.memory_space<vmem>>, vector<1x16x48xf32>
    %50 = vector.shape_cast %49 : vector<1x16x48xf32> to vector<16x48xf32>
    %cst_38 = arith.constant dense<0.000000e+00> : vector<16x256xf32>
    %51 = tpu.matmul %50, %48, %cst_38 {dimension_numbers = #tpu.dot_dimension_numbers<[1], [0], [0], [1], [0, 0, 1, 1], [], []>} : vector<16x48xf32>, vector<48x256xf32>, vector<16x256xf32> -> vector<16x256xf32>
    %52 = arith.addf %44, %51 : vector<16x256xf32>
    %c0_39 = arith.constant 0 : index
    %c0_40 = arith.constant 0 : index
    %53 = vector.load %arg6[%c0_39, %c0_40] : memref<16x1xf32, #tpu.memory_space<vmem>>, vector<16x1xf32>
    %54 = vector.broadcast %53 : vector<16x1xf32> to vector<16x256xf32>
    %55 = arith.addf %52, %54 : vector<16x256xf32>
    %56 = arith.negf %55 : vector<16x256xf32>
    %57 = math.exp %56 : vector<16x256xf32>
    %cst_41 = arith.constant 1.000000e+00 : f32
    %58 = vector.broadcast %cst_41 : f32 to vector<16x256xf32>
    %59 = arith.addf %58, %57 : vector<16x256xf32>
    %60 = arith.divf %58, %59 : vector<16x256xf32>
    %61 = arith.mulf %55, %60 : vector<16x256xf32>
    %c4 = arith.constant 4 : index
    %c0_42 = arith.constant 0 : index
    %c0_43 = arith.constant 0 : index
    %62 = vector.load %arg2[%c4, %c0_42, %c0_43] : memref<5x1x256xf32, #tpu.memory_space<vmem>>, vector<1x1x256xf32>
    %63 = vector.shape_cast %62 : vector<1x1x256xf32> to vector<1x256xf32>
    %64 = vector.broadcast %63 : vector<1x256xf32> to vector<16x256xf32>
    %65 = arith.mulf %61, %64 : vector<16x256xf32>
    %c0_44 = arith.constant 0 : index
    %c128_45 = arith.constant 128 : index
    %66 = vector.load %arg20[%c0_44, %c128_45] : memref<80x512xf32, #tpu.memory_space<vmem>>, vector<16x256xf32>
    tpu.vector_store %arg20[%c0_44, %c128_45], %65 {strides = array<i32>} : memref<80x512xf32, #tpu.memory_space<vmem>>, vector<16x256xf32>,
    %c3_46 = arith.constant 3 : index
    %c0_47 = arith.constant 0 : index
    %c0_48 = arith.constant 0 : index
    %67 = vector.load %arg2[%c3_46, %c0_47, %c0_48] : memref<5x1x256xf32, #tpu.memory_space<vmem>>, vector<1x1x256xf32>
    %68 = vector.shape_cast %67 : vector<1x1x256xf32> to vector<1x256xf32>
    %69 = vector.broadcast %68 : vector<1x256xf32> to vector<16x256xf32>
    %70 = arith.mulf %61, %69 : vector<16x256xf32>
    %c16_49 = arith.constant 16 : index
    %c128_50 = arith.constant 128 : index
    %71 = vector.load %arg20[%c16_49, %c128_50] : memref<80x512xf32, #tpu.memory_space<vmem>>, vector<16x256xf32>
    tpu.vector_store %arg20[%c16_49, %c128_50], %70 {strides = array<i32>} : memref<80x512xf32, #tpu.memory_space<vmem>>, vector<16x256xf32>,
    %c32_51 = arith.constant 32 : index
    %c128_52 = arith.constant 128 : index
    %72 = vector.load %arg20[%c32_51, %c128_52] : memref<80x512xf32, #tpu.memory_space<vmem>>, vector<16x256xf32>
    tpu.vector_store %arg20[%c32_51, %c128_52], %61 {strides = array<i32>} : memref<80x512xf32, #tpu.memory_space<vmem>>, vector<16x256xf32>,
    %c1_53 = arith.constant 1 : index
    %c0_54 = arith.constant 0 : index
    %c0_55 = arith.constant 0 : index
    %73 = vector.load %arg2[%c1_53, %c0_54, %c0_55] : memref<5x1x256xf32, #tpu.memory_space<vmem>>, vector<1x1x256xf32>
    %74 = vector.shape_cast %73 : vector<1x1x256xf32> to vector<1x256xf32>
    %75 = vector.broadcast %74 : vector<1x256xf32> to vector<16x256xf32>
    %76 = arith.mulf %61, %75 : vector<16x256xf32>
    %c48_56 = arith.constant 48 : index
    %c128_57 = arith.constant 128 : index
    %77 = vector.load %arg20[%c48_56, %c128_57] : memref<80x512xf32, #tpu.memory_space<vmem>>, vector<16x256xf32>
    tpu.vector_store %arg20[%c48_56, %c128_57], %76 {strides = array<i32>} : memref<80x512xf32, #tpu.memory_space<vmem>>, vector<16x256xf32>,
    %c0_58 = arith.constant 0 : index
    %c0_59 = arith.constant 0 : index
    %c0_60 = arith.constant 0 : index
    %78 = vector.load %arg2[%c0_58, %c0_59, %c0_60] : memref<5x1x256xf32, #tpu.memory_space<vmem>>, vector<1x1x256xf32>
    %79 = vector.shape_cast %78 : vector<1x1x256xf32> to vector<1x256xf32>
    %80 = vector.broadcast %79 : vector<1x256xf32> to vector<16x256xf32>
    %81 = arith.mulf %61, %80 : vector<16x256xf32>
    %c64 = arith.constant 64 : index
    %c128_61 = arith.constant 128 : index
    %82 = vector.load %arg20[%c64, %c128_61] : memref<80x512xf32, #tpu.memory_space<vmem>>, vector<16x256xf32>
    tpu.vector_store %arg20[%c64, %c128_61], %81 {strides = array<i32>} : memref<80x512xf32, #tpu.memory_space<vmem>>, vector<16x256xf32>,
    %c0_62 = arith.constant 0 : index
    %c94 = arith.constant 94 : index
    %83 = vector.load %arg20[%c0_62, %c94] : memref<80x512xf32, #tpu.memory_space<vmem>>, vector<16x256xf32>
    %c0_63 = arith.constant 0 : index
    %c0_64 = arith.constant 0 : index
    %c0_65 = arith.constant 0 : index
    %84 = vector.load %arg7[%c0_63, %c0_64, %c0_65] : memref<25x16x1xf32, #tpu.memory_space<vmem>>, vector<1x16x1xf32>
    %85 = vector.shape_cast %84 : vector<1x16x1xf32> to vector<16x1xf32>
    %86 = vector.broadcast %85 : vector<16x1xf32> to vector<16x256xf32>
    %87 = arith.mulf %83, %86 : vector<16x256xf32>
    %c16_66 = arith.constant 16 : index
    %c95 = arith.constant 95 : index
    %88 = vector.load %arg20[%c16_66, %c95] : memref<80x512xf32, #tpu.memory_space<vmem>>, vector<16x256xf32>
    %c1_67 = arith.constant 1 : index
    %c0_68 = arith.constant 0 : index
    %c0_69 = arith.constant 0 : index
    %89 = vector.load %arg7[%c1_67, %c0_68, %c0_69] : memref<25x16x1xf32, #tpu.memory_space<vmem>>, vector<1x16x1xf32>
    %90 = vector.shape_cast %89 : vector<1x16x1xf32> to vector<16x1xf32>
    %91 = vector.broadcast %90 : vector<16x1xf32> to vector<16x256xf32>
    %92 = arith.mulf %88, %91 : vector<16x256xf32>
    %93 = arith.addf %87, %92 : vector<16x256xf32>
    %c32_70 = arith.constant 32 : index
    %c96 = arith.constant 96 : index
    %94 = vector.load %arg20[%c32_70, %c96] : memref<80x512xf32, #tpu.memory_space<vmem>>, vector<16x256xf32>
    %c2_71 = arith.constant 2 : index
    %c0_72 = arith.constant 0 : index
    %c0_73 = arith.constant 0 : index
    %95 = vector.load %arg7[%c2_71, %c0_72, %c0_73] : memref<25x16x1xf32, #tpu.memory_space<vmem>>, vector<1x16x1xf32>
    %96 = vector.shape_cast %95 : vector<1x16x1xf32> to vector<16x1xf32>
    %97 = vector.broadcast %96 : vector<16x1xf32> to vector<16x256xf32>
    %98 = arith.mulf %94, %97 : vector<16x256xf32>
    %99 = arith.addf %93, %98 : vector<16x256xf32>
    %c48_74 = arith.constant 48 : index
    %c97 = arith.constant 97 : index
    %100 = vector.load %arg20[%c48_74, %c97] : memref<80x512xf32, #tpu.memory_space<vmem>>, vector<16x256xf32>
    %c3_75 = arith.constant 3 : index
    %c0_76 = arith.constant 0 : index
    %c0_77 = arith.constant 0 : index
    %101 = vector.load %arg7[%c3_75, %c0_76, %c0_77] : memref<25x16x1xf32, #tpu.memory_space<vmem>>, vector<1x16x1xf32>
    %102 = vector.shape_cast %101 : vector<1x16x1xf32> to vector<16x1xf32>
    %103 = vector.broadcast %102 : vector<16x1xf32> to vector<16x256xf32>
    %104 = arith.mulf %100, %103 : vector<16x256xf32>
    %105 = arith.addf %99, %104 : vector<16x256xf32>
    %c64_78 = arith.constant 64 : index
    %c98 = arith.constant 98 : index
    %106 = vector.load %arg20[%c64_78, %c98] : memref<80x512xf32, #tpu.memory_space<vmem>>, vector<16x256xf32>
    %c4_79 = arith.constant 4 : index
    %c0_80 = arith.constant 0 : index
    %c0_81 = arith.constant 0 : index
    %107 = vector.load %arg7[%c4_79, %c0_80, %c0_81] : memref<25x16x1xf32, #tpu.memory_space<vmem>>, vector<1x16x1xf32>
    %108 = vector.shape_cast %107 : vector<1x16x1xf32> to vector<16x1xf32>
    %109 = vector.broadcast %108 : vector<16x1xf32> to vector<16x256xf32>
    %110 = arith.mulf %106, %109 : vector<16x256xf32>
    %111 = arith.addf %105, %110 : vector<16x256xf32>
    %c0_82 = arith.constant 0 : index
    %c110 = arith.constant 110 : index
    %112 = vector.load %arg20[%c0_82, %c110] : memref<80x512xf32, #tpu.memory_space<vmem>>, vector<16x256xf32>
    %c5 = arith.constant 5 : index
    %c0_83 = arith.constant 0 : index
    %c0_84 = arith.constant 0 : index
    %113 = vector.load %arg7[%c5, %c0_83, %c0_84] : memref<25x16x1xf32, #tpu.memory_space<vmem>>, vector<1x16x1xf32>
    %114 = vector.shape_cast %113 : vector<1x16x1xf32> to vector<16x1xf32>
    %115 = vector.broadcast %114 : vector<16x1xf32> to vector<16x256xf32>
    %116 = arith.mulf %112, %115 : vector<16x256xf32>
    %117 = arith.addf %111, %116 : vector<16x256xf32>
    %c16_85 = arith.constant 16 : index
    %c111_86 = arith.constant 111 : index
    %118 = vector.load %arg20[%c16_85, %c111_86] : memref<80x512xf32, #tpu.memory_space<vmem>>, vector<16x256xf32>
    %c6 = arith.constant 6 : index
    %c0_87 = arith.constant 0 : index
    %c0_88 = arith.constant 0 : index
    %119 = vector.load %arg7[%c6, %c0_87, %c0_88] : memref<25x16x1xf32, #tpu.memory_space<vmem>>, vector<1x16x1xf32>
    %120 = vector.shape_cast %119 : vector<1x16x1xf32> to vector<16x1xf32>
    %121 = vector.broadcast %120 : vector<16x1xf32> to vector<16x256xf32>
    %122 = arith.mulf %118, %121 : vector<16x256xf32>
    %123 = arith.addf %117, %122 : vector<16x256xf32>
    %c32_89 = arith.constant 32 : index
    %c112_90 = arith.constant 112 : index
    %124 = vector.load %arg20[%c32_89, %c112_90] : memref<80x512xf32, #tpu.memory_space<vmem>>, vector<16x256xf32>
    %c7 = arith.constant 7 : index
    %c0_91 = arith.constant 0 : index
    %c0_92 = arith.constant 0 : index
    %125 = vector.load %arg7[%c7, %c0_91, %c0_92] : memref<25x16x1xf32, #tpu.memory_space<vmem>>, vector<1x16x1xf32>
    %126 = vector.shape_cast %125 : vector<1x16x1xf32> to vector<16x1xf32>
    %127 = vector.broadcast %126 : vector<16x1xf32> to vector<16x256xf32>
    %128 = arith.mulf %124, %127 : vector<16x256xf32>
    %129 = arith.addf %123, %128 : vector<16x256xf32>
    %c48_93 = arith.constant 48 : index
    %c113_94 = arith.constant 113 : index
    %130 = vector.load %arg20[%c48_93, %c113_94] : memref<80x512xf32, #tpu.memory_space<vmem>>, vector<16x256xf32>
    %c8 = arith.constant 8 : index
    %c0_95 = arith.constant 0 : index
    %c0_96 = arith.constant 0 : index
    %131 = vector.load %arg7[%c8, %c0_95, %c0_96] : memref<25x16x1xf32, #tpu.memory_space<vmem>>, vector<1x16x1xf32>
    %132 = vector.shape_cast %131 : vector<1x16x1xf32> to vector<16x1xf32>
    %133 = vector.broadcast %132 : vector<16x1xf32> to vector<16x256xf32>
    %134 = arith.mulf %130, %133 : vector<16x256xf32>
    %135 = arith.addf %129, %134 : vector<16x256xf32>
    %c64_97 = arith.constant 64 : index
    %c114 = arith.constant 114 : index
    %136 = vector.load %arg20[%c64_97, %c114] : memref<80x512xf32, #tpu.memory_space<vmem>>, vector<16x256xf32>
    %c9 = arith.constant 9 : index
    %c0_98 = arith.constant 0 : index
    %c0_99 = arith.constant 0 : index
    %137 = vector.load %arg7[%c9, %c0_98, %c0_99] : memref<25x16x1xf32, #tpu.memory_space<vmem>>, vector<1x16x1xf32>
    %138 = vector.shape_cast %137 : vector<1x16x1xf32> to vector<16x1xf32>
    %139 = vector.broadcast %138 : vector<16x1xf32> to vector<16x256xf32>
    %140 = arith.mulf %136, %139 : vector<16x256xf32>
    %141 = arith.addf %135, %140 : vector<16x256xf32>
    %c0_100 = arith.constant 0 : index
    %c126 = arith.constant 126 : index
    %142 = vector.load %arg20[%c0_100, %c126] : memref<80x512xf32, #tpu.memory_space<vmem>>, vector<16x256xf32>
    %c10 = arith.constant 10 : index
    %c0_101 = arith.constant 0 : index
    %c0_102 = arith.constant 0 : index
    %143 = vector.load %arg7[%c10, %c0_101, %c0_102] : memref<25x16x1xf32, #tpu.memory_space<vmem>>, vector<1x16x1xf32>
    %144 = vector.shape_cast %143 : vector<1x16x1xf32> to vector<16x1xf32>
    %145 = vector.broadcast %144 : vector<16x1xf32> to vector<16x256xf32>
    %146 = arith.mulf %142, %145 : vector<16x256xf32>
    %147 = arith.addf %141, %146 : vector<16x256xf32>
    %c16_103 = arith.constant 16 : index
    %c127_104 = arith.constant 127 : index
    %148 = vector.load %arg20[%c16_103, %c127_104] : memref<80x512xf32, #tpu.memory_space<vmem>>, vector<16x256xf32>
    %c11 = arith.constant 11 : index
    %c0_105 = arith.constant 0 : index
    %c0_106 = arith.constant 0 : index
    %149 = vector.load %arg7[%c11, %c0_105, %c0_106] : memref<25x16x1xf32, #tpu.memory_space<vmem>>, vector<1x16x1xf32>
    %150 = vector.shape_cast %149 : vector<1x16x1xf32> to vector<16x1xf32>
    %151 = vector.broadcast %150 : vector<16x1xf32> to vector<16x256xf32>
    %152 = arith.mulf %148, %151 : vector<16x256xf32>
    %153 = arith.addf %147, %152 : vector<16x256xf32>
    %c32_107 = arith.constant 32 : index
    %c128_108 = arith.constant 128 : index
    %154 = vector.load %arg20[%c32_107, %c128_108] : memref<80x512xf32, #tpu.memory_space<vmem>>, vector<16x256xf32>
    %c12 = arith.constant 12 : index
    %c0_109 = arith.constant 0 : index
    %c0_110 = arith.constant 0 : index
    %155 = vector.load %arg7[%c12, %c0_109, %c0_110] : memref<25x16x1xf32, #tpu.memory_space<vmem>>, vector<1x16x1xf32>
    %156 = vector.shape_cast %155 : vector<1x16x1xf32> to vector<16x1xf32>
    %157 = vector.broadcast %156 : vector<16x1xf32> to vector<16x256xf32>
    %158 = arith.mulf %154, %157 : vector<16x256xf32>
    %159 = arith.addf %153, %158 : vector<16x256xf32>
    %c48_111 = arith.constant 48 : index
    %c129_112 = arith.constant 129 : index
    %160 = vector.load %arg20[%c48_111, %c129_112] : memref<80x512xf32, #tpu.memory_space<vmem>>, vector<16x256xf32>
    %c13 = arith.constant 13 : index
    %c0_113 = arith.constant 0 : index
    %c0_114 = arith.constant 0 : index
    %161 = vector.load %arg7[%c13, %c0_113, %c0_114] : memref<25x16x1xf32, #tpu.memory_space<vmem>>, vector<1x16x1xf32>
    %162 = vector.shape_cast %161 : vector<1x16x1xf32> to vector<16x1xf32>
    %163 = vector.broadcast %162 : vector<16x1xf32> to vector<16x256xf32>
    %164 = arith.mulf %160, %163 : vector<16x256xf32>
    %165 = arith.addf %159, %164 : vector<16x256xf32>
    %c64_115 = arith.constant 64 : index
    %c130 = arith.constant 130 : index
    %166 = vector.load %arg20[%c64_115, %c130] : memref<80x512xf32, #tpu.memory_space<vmem>>, vector<16x256xf32>
    %c14 = arith.constant 14 : index
    %c0_116 = arith.constant 0 : index
    %c0_117 = arith.constant 0 : index
    %167 = vector.load %arg7[%c14, %c0_116, %c0_117] : memref<25x16x1xf32, #tpu.memory_space<vmem>>, vector<1x16x1xf32>
    %168 = vector.shape_cast %167 : vector<1x16x1xf32> to vector<16x1xf32>
    %169 = vector.broadcast %168 : vector<16x1xf32> to vector<16x256xf32>
    %170 = arith.mulf %166, %169 : vector<16x256xf32>
    %171 = arith.addf %165, %170 : vector<16x256xf32>
    %c0_118 = arith.constant 0 : index
    %c142 = arith.constant 142 : index
    %172 = vector.load %arg20[%c0_118, %c142] : memref<80x512xf32, #tpu.memory_space<vmem>>, vector<16x256xf32>
    %c15 = arith.constant 15 : index
    %c0_119 = arith.constant 0 : index
    %c0_120 = arith.constant 0 : index
    %173 = vector.load %arg7[%c15, %c0_119, %c0_120] : memref<25x16x1xf32, #tpu.memory_space<vmem>>, vector<1x16x1xf32>
    %174 = vector.shape_cast %173 : vector<1x16x1xf32> to vector<16x1xf32>
    %175 = vector.broadcast %174 : vector<16x1xf32> to vector<16x256xf32>
    %176 = arith.mulf %172, %175 : vector<16x256xf32>
    %177 = arith.addf %171, %176 : vector<16x256xf32>
    %c16_121 = arith.constant 16 : index
    %c143_122 = arith.constant 143 : index
    %178 = vector.load %arg20[%c16_121, %c143_122] : memref<80x512xf32, #tpu.memory_space<vmem>>, vector<16x256xf32>
    %c16_123 = arith.constant 16 : index
    %c0_124 = arith.constant 0 : index
    %c0_125 = arith.constant 0 : index
    %179 = vector.load %arg7[%c16_123, %c0_124, %c0_125] : memref<25x16x1xf32, #tpu.memory_space<vmem>>, vector<1x16x1xf32>
    %180 = vector.shape_cast %179 : vector<1x16x1xf32> to vector<16x1xf32>
    %181 = vector.broadcast %180 : vector<16x1xf32> to vector<16x256xf32>
    %182 = arith.mulf %178, %181 : vector<16x256xf32>
    %183 = arith.addf %177, %182 : vector<16x256xf32>
    %c32_126 = arith.constant 32 : index
    %c144_127 = arith.constant 144 : index
    %184 = vector.load %arg20[%c32_126, %c144_127] : memref<80x512xf32, #tpu.memory_space<vmem>>, vector<16x256xf32>
    %c17 = arith.constant 17 : index
    %c0_128 = arith.constant 0 : index
    %c0_129 = arith.constant 0 : index
    %185 = vector.load %arg7[%c17, %c0_128, %c0_129] : memref<25x16x1xf32, #tpu.memory_space<vmem>>, vector<1x16x1xf32>
    %186 = vector.shape_cast %185 : vector<1x16x1xf32> to vector<16x1xf32>
    %187 = vector.broadcast %186 : vector<16x1xf32> to vector<16x256xf32>
    %188 = arith.mulf %184, %187 : vector<16x256xf32>
    %189 = arith.addf %183, %188 : vector<16x256xf32>
    %c48_130 = arith.constant 48 : index
    %c145_131 = arith.constant 145 : index
    %190 = vector.load %arg20[%c48_130, %c145_131] : memref<80x512xf32, #tpu.memory_space<vmem>>, vector<16x256xf32>
    %c18 = arith.constant 18 : index
    %c0_132 = arith.constant 0 : index
    %c0_133 = arith.constant 0 : index
    %191 = vector.load %arg7[%c18, %c0_132, %c0_133] : memref<25x16x1xf32, #tpu.memory_space<vmem>>, vector<1x16x1xf32>
    %192 = vector.shape_cast %191 : vector<1x16x1xf32> to vector<16x1xf32>
    %193 = vector.broadcast %192 : vector<16x1xf32> to vector<16x256xf32>
    %194 = arith.mulf %190, %193 : vector<16x256xf32>
    %195 = arith.addf %189, %194 : vector<16x256xf32>
    %c64_134 = arith.constant 64 : index
    %c146 = arith.constant 146 : index
    %196 = vector.load %arg20[%c64_134, %c146] : memref<80x512xf32, #tpu.memory_space<vmem>>, vector<16x256xf32>
    %c19 = arith.constant 19 : index
    %c0_135 = arith.constant 0 : index
    %c0_136 = arith.constant 0 : index
    %197 = vector.load %arg7[%c19, %c0_135, %c0_136] : memref<25x16x1xf32, #tpu.memory_space<vmem>>, vector<1x16x1xf32>
    %198 = vector.shape_cast %197 : vector<1x16x1xf32> to vector<16x1xf32>
    %199 = vector.broadcast %198 : vector<16x1xf32> to vector<16x256xf32>
    %200 = arith.mulf %196, %199 : vector<16x256xf32>
    %201 = arith.addf %195, %200 : vector<16x256xf32>
    %c0_137 = arith.constant 0 : index
    %c158 = arith.constant 158 : index
    %202 = vector.load %arg20[%c0_137, %c158] : memref<80x512xf32, #tpu.memory_space<vmem>>, vector<16x256xf32>
    %c20 = arith.constant 20 : index
    %c0_138 = arith.constant 0 : index
    %c0_139 = arith.constant 0 : index
    %203 = vector.load %arg7[%c20, %c0_138, %c0_139] : memref<25x16x1xf32, #tpu.memory_space<vmem>>, vector<1x16x1xf32>
    %204 = vector.shape_cast %203 : vector<1x16x1xf32> to vector<16x1xf32>
    %205 = vector.broadcast %204 : vector<16x1xf32> to vector<16x256xf32>
    %206 = arith.mulf %202, %205 : vector<16x256xf32>
    %207 = arith.addf %201, %206 : vector<16x256xf32>
    %c16_140 = arith.constant 16 : index
    %c159 = arith.constant 159 : index
    %208 = vector.load %arg20[%c16_140, %c159] : memref<80x512xf32, #tpu.memory_space<vmem>>, vector<16x256xf32>
    %c21 = arith.constant 21 : index
    %c0_141 = arith.constant 0 : index
    %c0_142 = arith.constant 0 : index
    %209 = vector.load %arg7[%c21, %c0_141, %c0_142] : memref<25x16x1xf32, #tpu.memory_space<vmem>>, vector<1x16x1xf32>
    %210 = vector.shape_cast %209 : vector<1x16x1xf32> to vector<16x1xf32>
    %211 = vector.broadcast %210 : vector<16x1xf32> to vector<16x256xf32>
    %212 = arith.mulf %208, %211 : vector<16x256xf32>
    %213 = arith.addf %207, %212 : vector<16x256xf32>
    %c32_143 = arith.constant 32 : index
    %c160 = arith.constant 160 : index
    %214 = vector.load %arg20[%c32_143, %c160] : memref<80x512xf32, #tpu.memory_space<vmem>>, vector<16x256xf32>
    %c22 = arith.constant 22 : index
    %c0_144 = arith.constant 0 : index
    %c0_145 = arith.constant 0 : index
    %215 = vector.load %arg7[%c22, %c0_144, %c0_145] : memref<25x16x1xf32, #tpu.memory_space<vmem>>, vector<1x16x1xf32>
    %216 = vector.shape_cast %215 : vector<1x16x1xf32> to vector<16x1xf32>
    %217 = vector.broadcast %216 : vector<16x1xf32> to vector<16x256xf32>
    %218 = arith.mulf %214, %217 : vector<16x256xf32>
    %219 = arith.addf %213, %218 : vector<16x256xf32>
    %c48_146 = arith.constant 48 : index
    %c161 = arith.constant 161 : index
    %220 = vector.load %arg20[%c48_146, %c161] : memref<80x512xf32, #tpu.memory_space<vmem>>, vector<16x256xf32>
    %c23 = arith.constant 23 : index
    %c0_147 = arith.constant 0 : index
    %c0_148 = arith.constant 0 : index
    %221 = vector.load %arg7[%c23, %c0_147, %c0_148] : memref<25x16x1xf32, #tpu.memory_space<vmem>>, vector<1x16x1xf32>
    %222 = vector.shape_cast %221 : vector<1x16x1xf32> to vector<16x1xf32>
    %223 = vector.broadcast %222 : vector<16x1xf32> to vector<16x256xf32>
    %224 = arith.mulf %220, %223 : vector<16x256xf32>
    %225 = arith.addf %219, %224 : vector<16x256xf32>
    %c64_149 = arith.constant 64 : index
    %c162 = arith.constant 162 : index
    %226 = vector.load %arg20[%c64_149, %c162] : memref<80x512xf32, #tpu.memory_space<vmem>>, vector<16x256xf32>
    %c24 = arith.constant 24 : index
    %c0_150 = arith.constant 0 : index
    %c0_151 = arith.constant 0 : index
    %227 = vector.load %arg7[%c24, %c0_150, %c0_151] : memref<25x16x1xf32, #tpu.memory_space<vmem>>, vector<1x16x1xf32>
    %228 = vector.shape_cast %227 : vector<1x16x1xf32> to vector<16x1xf32>
    %229 = vector.broadcast %228 : vector<16x1xf32> to vector<16x256xf32>
    %230 = arith.mulf %226, %229 : vector<16x256xf32>
    %231 = arith.addf %225, %230 : vector<16x256xf32>
    %c0_152 = arith.constant 0 : index
    %c0_153 = arith.constant 0 : index
    %232 = vector.load %arg8[%c0_152, %c0_153] : memref<16x1xf32, #tpu.memory_space<vmem>>, vector<16x1xf32>
    %233 = vector.broadcast %232 : vector<16x1xf32> to vector<16x256xf32>
    %234 = arith.addf %231, %233 : vector<16x256xf32>
    %cst_154 = arith.constant 0.000000e+00 : f32
    %235 = vector.broadcast %cst_154 : f32 to vector<16x256xf32>
    %236 = arith.maximumf %234, %235 : vector<16x256xf32>
    %c0_155 = arith.constant 0 : index
    %c0_156 = arith.constant 0 : index
    %237 = vector.load %arg9[%c0_155, %c0_156] : memref<16x16xf32, #tpu.memory_space<vmem>>, vector<16x16xf32>
    %cst_157 = arith.constant dense<0.000000e+00> : vector<16x256xf32>
    %238 = tpu.matmul %237, %236, %cst_157 {dimension_numbers = #tpu.dot_dimension_numbers<[1], [0], [0], [1], [0, 0, 1, 1], [], []>} : vector<16x16xf32>, vector<16x256xf32>, vector<16x256xf32> -> vector<16x256xf32>
    %c0_158 = arith.constant 0 : index
    %c0_159 = arith.constant 0 : index
    %239 = vector.load %arg10[%c0_158, %c0_159] : memref<16x1xf32, #tpu.memory_space<vmem>>, vector<16x1xf32>
    %240 = vector.broadcast %239 : vector<16x1xf32> to vector<16x256xf32>
    %241 = arith.addf %238, %240 : vector<16x256xf32>
    %cst_160 = arith.constant 0.000000e+00 : f32
    %242 = vector.broadcast %cst_160 : f32 to vector<16x256xf32>
    %243 = arith.maximumf %241, %242 : vector<16x256xf32>
    %244 = arith.addf %18, %243 : vector<16x256xf32>
    %c3_161 = arith.constant 3 : index
    %c0_162 = arith.constant 0 : index
    %c0_163 = arith.constant 0 : index
    %245 = vector.load %arg2[%c3_161, %c0_162, %c0_163] : memref<5x1x256xf32, #tpu.memory_space<vmem>>, vector<1x1x256xf32>
    %246 = vector.shape_cast %245 : vector<1x1x256xf32> to vector<1x256xf32>
    %247 = vector.broadcast %246 : vector<1x256xf32> to vector<16x256xf32>
    %248 = arith.mulf %244, %247 : vector<16x256xf32>
    %c16_164 = arith.constant 16 : index
    %c128_165 = arith.constant 128 : index
    %249 = vector.load %arg20[%c16_164, %c128_165] : memref<80x512xf32, #tpu.memory_space<vmem>>, vector<16x256xf32>
    tpu.vector_store %arg20[%c16_164, %c128_165], %248 {strides = array<i32>} : memref<80x512xf32, #tpu.memory_space<vmem>>, vector<16x256xf32>,
    %c32_166 = arith.constant 32 : index
    %c128_167 = arith.constant 128 : index
    %250 = vector.load %arg20[%c32_166, %c128_167] : memref<80x512xf32, #tpu.memory_space<vmem>>, vector<16x256xf32>
    tpu.vector_store %arg20[%c32_166, %c128_167], %244 {strides = array<i32>} : memref<80x512xf32, #tpu.memory_space<vmem>>, vector<16x256xf32>,
    %c1_168 = arith.constant 1 : index
    %c0_169 = arith.constant 0 : index
    %c0_170 = arith.constant 0 : index
    %251 = vector.load %arg2[%c1_168, %c0_169, %c0_170] : memref<5x1x256xf32, #tpu.memory_space<vmem>>, vector<1x1x256xf32>
    %252 = vector.shape_cast %251 : vector<1x1x256xf32> to vector<1x256xf32>
    %253 = vector.broadcast %252 : vector<1x256xf32> to vector<16x256xf32>
    %254 = arith.mulf %244, %253 : vector<16x256xf32>
    %c48_171 = arith.constant 48 : index
    %c128_172 = arith.constant 128 : index
    %255 = vector.load %arg20[%c48_171, %c128_172] : memref<80x512xf32, #tpu.memory_space<vmem>>, vector<16x256xf32>
    tpu.vector_store %arg20[%c48_171, %c128_172], %254 {strides = array<i32>} : memref<80x512xf32, #tpu.memory_space<vmem>>, vector<16x256xf32>,
    %c16_173 = arith.constant 16 : index
    %c111_174 = arith.constant 111 : index
    %256 = vector.load %arg20[%c16_173, %c111_174] : memref<80x512xf32, #tpu.memory_space<vmem>>, vector<16x256xf32>
    %c16_175 = arith.constant 16 : index
    %c127_176 = arith.constant 127 : index
    %257 = vector.load %arg20[%c16_175, %c127_176] : memref<80x512xf32, #tpu.memory_space<vmem>>, vector<16x256xf32>
    %c16_177 = arith.constant 16 : index
    %c143_178 = arith.constant 143 : index
    %258 = vector.load %arg20[%c16_177, %c143_178] : memref<80x512xf32, #tpu.memory_space<vmem>>, vector<16x256xf32>
    %259 = tpu.concatenate %256, %257, %258 in 0 : vector<16x256xf32>, vector<16x256xf32>, vector<16x256xf32> -> vector<48x256xf32>
    %c0_179 = arith.constant 0 : index
    %c0_180 = arith.constant 0 : index
    %c0_181 = arith.constant 0 : index
    %260 = vector.load %arg11[%c0_179, %c0_180, %c0_181] : memref<3x16x48xf32, #tpu.memory_space<vmem>>, vector<1x16x48xf32>
    %261 = vector.shape_cast %260 : vector<1x16x48xf32> to vector<16x48xf32>
    %cst_182 = arith.constant dense<0.000000e+00> : vector<16x256xf32>
    %262 = tpu.matmul %261, %259, %cst_182 {dimension_numbers = #tpu.dot_dimension_numbers<[1], [0], [0], [1], [0, 0, 1, 1], [], []>} : vector<16x48xf32>, vector<48x256xf32>, vector<16x256xf32> -> vector<16x256xf32>
    %c32_183 = arith.constant 32 : index
    %c112_184 = arith.constant 112 : index
    %263 = vector.load %arg20[%c32_183, %c112_184] : memref<80x512xf32, #tpu.memory_space<vmem>>, vector<16x256xf32>
    %c32_185 = arith.constant 32 : index
    %c128_186 = arith.constant 128 : index
    %264 = vector.load %arg20[%c32_185, %c128_186] : memref<80x512xf32, #tpu.memory_space<vmem>>, vector<16x256xf32>
    %c32_187 = arith.constant 32 : index
    %c144_188 = arith.constant 144 : index
    %265 = vector.load %arg20[%c32_187, %c144_188] : memref<80x512xf32, #tpu.memory_space<vmem>>, vector<16x256xf32>
    %266 = tpu.concatenate %263, %264, %265 in 0 : vector<16x256xf32>, vector<16x256xf32>, vector<16x256xf32> -> vector<48x256xf32>
    %c1_189 = arith.constant 1 : index
    %c0_190 = arith.constant 0 : index
    %c0_191 = arith.constant 0 : index
    %267 = vector.load %arg11[%c1_189, %c0_190, %c0_191] : memref<3x16x48xf32, #tpu.memory_space<vmem>>, vector<1x16x48xf32>
    %268 = vector.shape_cast %267 : vector<1x16x48xf32> to vector<16x48xf32>
    %cst_192 = arith.constant dense<0.000000e+00> : vector<16x256xf32>
    %269 = tpu.matmul %268, %266, %cst_192 {dimension_numbers = #tpu.dot_dimension_numbers<[1], [0], [0], [1], [0, 0, 1, 1], [], []>} : vector<16x48xf32>, vector<48x256xf32>, vector<16x256xf32> -> vector<16x256xf32>
    %270 = arith.addf %262, %269 : vector<16x256xf32>
    %c48_193 = arith.constant 48 : index
    %c113_194 = arith.constant 113 : index
    %271 = vector.load %arg20[%c48_193, %c113_194] : memref<80x512xf32, #tpu.memory_space<vmem>>, vector<16x256xf32>
    %c48_195 = arith.constant 48 : index
    %c129_196 = arith.constant 129 : index
    %272 = vector.load %arg20[%c48_195, %c129_196] : memref<80x512xf32, #tpu.memory_space<vmem>>, vector<16x256xf32>
    %c48_197 = arith.constant 48 : index
    %c145_198 = arith.constant 145 : index
    %273 = vector.load %arg20[%c48_197, %c145_198] : memref<80x512xf32, #tpu.memory_space<vmem>>, vector<16x256xf32>
    %274 = tpu.concatenate %271, %272, %273 in 0 : vector<16x256xf32>, vector<16x256xf32>, vector<16x256xf32> -> vector<48x256xf32>
    %c2_199 = arith.constant 2 : index
    %c0_200 = arith.constant 0 : index
    %c0_201 = arith.constant 0 : index
    %275 = vector.load %arg11[%c2_199, %c0_200, %c0_201] : memref<3x16x48xf32, #tpu.memory_space<vmem>>, vector<1x16x48xf32>
    %276 = vector.shape_cast %275 : vector<1x16x48xf32> to vector<16x48xf32>
    %cst_202 = arith.constant dense<0.000000e+00> : vector<16x256xf32>
    %277 = tpu.matmul %276, %274, %cst_202 {dimension_numbers = #tpu.dot_dimension_numbers<[1], [0], [0], [1], [0, 0, 1, 1], [], []>} : vector<16x48xf32>, vector<48x256xf32>, vector<16x256xf32> -> vector<16x256xf32>
    %278 = arith.addf %270, %277 : vector<16x256xf32>
    %c0_203 = arith.constant 0 : index
    %c0_204 = arith.constant 0 : index
    %279 = vector.load %arg12[%c0_203, %c0_204] : memref<16x1xf32, #tpu.memory_space<vmem>>, vector<16x1xf32>
    %280 = vector.broadcast %279 : vector<16x1xf32> to vector<16x256xf32>
    %281 = arith.addf %278, %280 : vector<16x256xf32>
    %282 = arith.negf %281 : vector<16x256xf32>
    %283 = math.exp %282 : vector<16x256xf32>
    %cst_205 = arith.constant 1.000000e+00 : f32
    %284 = vector.broadcast %cst_205 : f32 to vector<16x256xf32>
    %285 = arith.addf %284, %283 : vector<16x256xf32>
    %286 = arith.divf %284, %285 : vector<16x256xf32>
    %287 = arith.mulf %281, %286 : vector<16x256xf32>
    %c4_206 = arith.constant 4 : index
    %c0_207 = arith.constant 0 : index
    %c0_208 = arith.constant 0 : index
    %288 = vector.load %arg2[%c4_206, %c0_207, %c0_208] : memref<5x1x256xf32, #tpu.memory_space<vmem>>, vector<1x1x256xf32>
    %289 = vector.shape_cast %288 : vector<1x1x256xf32> to vector<1x256xf32>
    %290 = vector.broadcast %289 : vector<1x256xf32> to vector<16x256xf32>
    %291 = arith.mulf %287, %290 : vector<16x256xf32>
    %c0_209 = arith.constant 0 : index
    %c128_210 = arith.constant 128 : index
    %292 = vector.load %arg20[%c0_209, %c128_210] : memref<80x512xf32, #tpu.memory_space<vmem>>, vector<16x256xf32>
    tpu.vector_store %arg20[%c0_209, %c128_210], %291 {strides = array<i32>} : memref<80x512xf32, #tpu.memory_space<vmem>>, vector<16x256xf32>,
    %c3_211 = arith.constant 3 : index
    %c0_212 = arith.constant 0 : index
    %c0_213 = arith.constant 0 : index
    %293 = vector.load %arg2[%c3_211, %c0_212, %c0_213] : memref<5x1x256xf32, #tpu.memory_space<vmem>>, vector<1x1x256xf32>
    %294 = vector.shape_cast %293 : vector<1x1x256xf32> to vector<1x256xf32>
    %295 = vector.broadcast %294 : vector<1x256xf32> to vector<16x256xf32>
    %296 = arith.mulf %287, %295 : vector<16x256xf32>
    %c16_214 = arith.constant 16 : index
    %c128_215 = arith.constant 128 : index
    %297 = vector.load %arg20[%c16_214, %c128_215] : memref<80x512xf32, #tpu.memory_space<vmem>>, vector<16x256xf32>
    tpu.vector_store %arg20[%c16_214, %c128_215], %296 {strides = array<i32>} : memref<80x512xf32, #tpu.memory_space<vmem>>, vector<16x256xf32>,
    %c32_216 = arith.constant 32 : index
    %c128_217 = arith.constant 128 : index
    %298 = vector.load %arg20[%c32_216, %c128_217] : memref<80x512xf32, #tpu.memory_space<vmem>>, vector<16x256xf32>
    tpu.vector_store %arg20[%c32_216, %c128_217], %287 {strides = array<i32>} : memref<80x512xf32, #tpu.memory_space<vmem>>, vector<16x256xf32>,
    %c1_218 = arith.constant 1 : index
    %c0_219 = arith.constant 0 : index
    %c0_220 = arith.constant 0 : index
    %299 = vector.load %arg2[%c1_218, %c0_219, %c0_220] : memref<5x1x256xf32, #tpu.memory_space<vmem>>, vector<1x1x256xf32>
    %300 = vector.shape_cast %299 : vector<1x1x256xf32> to vector<1x256xf32>
    %301 = vector.broadcast %300 : vector<1x256xf32> to vector<16x256xf32>
    %302 = arith.mulf %287, %301 : vector<16x256xf32>
    %c48_221 = arith.constant 48 : index
    %c128_222 = arith.constant 128 : index
    %303 = vector.load %arg20[%c48_221, %c128_222] : memref<80x512xf32, #tpu.memory_space<vmem>>, vector<16x256xf32>
    tpu.vector_store %arg20[%c48_221, %c128_222], %302 {strides = array<i32>} : memref<80x512xf32, #tpu.memory_space<vmem>>, vector<16x256xf32>,
    %c0_223 = arith.constant 0 : index
    %c0_224 = arith.constant 0 : index
    %c0_225 = arith.constant 0 : index
    %304 = vector.load %arg2[%c0_223, %c0_224, %c0_225] : memref<5x1x256xf32, #tpu.memory_space<vmem>>, vector<1x1x256xf32>
    %305 = vector.shape_cast %304 : vector<1x1x256xf32> to vector<1x256xf32>
    %306 = vector.broadcast %305 : vector<1x256xf32> to vector<16x256xf32>
    %307 = arith.mulf %287, %306 : vector<16x256xf32>
    %c64_226 = arith.constant 64 : index
    %c128_227 = arith.constant 128 : index
    %308 = vector.load %arg20[%c64_226, %c128_227] : memref<80x512xf32, #tpu.memory_space<vmem>>, vector<16x256xf32>
    tpu.vector_store %arg20[%c64_226, %c128_227], %307 {strides = array<i32>} : memref<80x512xf32, #tpu.memory_space<vmem>>, vector<16x256xf32>,
    %c0_228 = arith.constant 0 : index
    %c94_229 = arith.constant 94 : index
    %309 = vector.load %arg20[%c0_228, %c94_229] : memref<80x512xf32, #tpu.memory_space<vmem>>, vector<16x256xf32>
    %c0_230 = arith.constant 0 : index
    %c0_231 = arith.constant 0 : index
    %c0_232 = arith.constant 0 : index
    %310 = vector.load %arg13[%c0_230, %c0_231, %c0_232] : memref<25x16x1xf32, #tpu.memory_space<vmem>>, vector<1x16x1xf32>
    %311 = vector.shape_cast %310 : vector<1x16x1xf32> to vector<16x1xf32>
    %312 = vector.broadcast %311 : vector<16x1xf32> to vector<16x256xf32>
    %313 = arith.mulf %309, %312 : vector<16x256xf32>
    %c16_233 = arith.constant 16 : index
    %c95_234 = arith.constant 95 : index
    %314 = vector.load %arg20[%c16_233, %c95_234] : memref<80x512xf32, #tpu.memory_space<vmem>>, vector<16x256xf32>
    %c1_235 = arith.constant 1 : index
    %c0_236 = arith.constant 0 : index
    %c0_237 = arith.constant 0 : index
    %315 = vector.load %arg13[%c1_235, %c0_236, %c0_237] : memref<25x16x1xf32, #tpu.memory_space<vmem>>, vector<1x16x1xf32>
    %316 = vector.shape_cast %315 : vector<1x16x1xf32> to vector<16x1xf32>
    %317 = vector.broadcast %316 : vector<16x1xf32> to vector<16x256xf32>
    %318 = arith.mulf %314, %317 : vector<16x256xf32>
    %319 = arith.addf %313, %318 : vector<16x256xf32>
    %c32_238 = arith.constant 32 : index
    %c96_239 = arith.constant 96 : index
    %320 = vector.load %arg20[%c32_238, %c96_239] : memref<80x512xf32, #tpu.memory_space<vmem>>, vector<16x256xf32>
    %c2_240 = arith.constant 2 : index
    %c0_241 = arith.constant 0 : index
    %c0_242 = arith.constant 0 : index
    %321 = vector.load %arg13[%c2_240, %c0_241, %c0_242] : memref<25x16x1xf32, #tpu.memory_space<vmem>>, vector<1x16x1xf32>
    %322 = vector.shape_cast %321 : vector<1x16x1xf32> to vector<16x1xf32>
    %323 = vector.broadcast %322 : vector<16x1xf32> to vector<16x256xf32>
    %324 = arith.mulf %320, %323 : vector<16x256xf32>
    %325 = arith.addf %319, %324 : vector<16x256xf32>
    %c48_243 = arith.constant 48 : index
    %c97_244 = arith.constant 97 : index
    %326 = vector.load %arg20[%c48_243, %c97_244] : memref<80x512xf32, #tpu.memory_space<vmem>>, vector<16x256xf32>
    %c3_245 = arith.constant 3 : index
    %c0_246 = arith.constant 0 : index
    %c0_247 = arith.constant 0 : index
    %327 = vector.load %arg13[%c3_245, %c0_246, %c0_247] : memref<25x16x1xf32, #tpu.memory_space<vmem>>, vector<1x16x1xf32>
    %328 = vector.shape_cast %327 : vector<1x16x1xf32> to vector<16x1xf32>
    %329 = vector.broadcast %328 : vector<16x1xf32> to vector<16x256xf32>
    %330 = arith.mulf %326, %329 : vector<16x256xf32>
    %331 = arith.addf %325, %330 : vector<16x256xf32>
    %c64_248 = arith.constant 64 : index
    %c98_249 = arith.constant 98 : index
    %332 = vector.load %arg20[%c64_248, %c98_249] : memref<80x512xf32, #tpu.memory_space<vmem>>, vector<16x256xf32>
    %c4_250 = arith.constant 4 : index
    %c0_251 = arith.constant 0 : index
    %c0_252 = arith.constant 0 : index
    %333 = vector.load %arg13[%c4_250, %c0_251, %c0_252] : memref<25x16x1xf32, #tpu.memory_space<vmem>>, vector<1x16x1xf32>
    %334 = vector.shape_cast %333 : vector<1x16x1xf32> to vector<16x1xf32>
    %335 = vector.broadcast %334 : vector<16x1xf32> to vector<16x256xf32>
    %336 = arith.mulf %332, %335 : vector<16x256xf32>
    %337 = arith.addf %331, %336 : vector<16x256xf32>
    %c0_253 = arith.constant 0 : index
    %c110_254 = arith.constant 110 : index
    %338 = vector.load %arg20[%c0_253, %c110_254] : memref<80x512xf32, #tpu.memory_space<vmem>>, vector<16x256xf32>
    %c5_255 = arith.constant 5 : index
    %c0_256 = arith.constant 0 : index
    %c0_257 = arith.constant 0 : index
    %339 = vector.load %arg13[%c5_255, %c0_256, %c0_257] : memref<25x16x1xf32, #tpu.memory_space<vmem>>, vector<1x16x1xf32>
    %340 = vector.shape_cast %339 : vector<1x16x1xf32> to vector<16x1xf32>
    %341 = vector.broadcast %340 : vector<16x1xf32> to vector<16x256xf32>
    %342 = arith.mulf %338, %341 : vector<16x256xf32>
    %343 = arith.addf %337, %342 : vector<16x256xf32>
    %c16_258 = arith.constant 16 : index
    %c111_259 = arith.constant 111 : index
    %344 = vector.load %arg20[%c16_258, %c111_259] : memref<80x512xf32, #tpu.memory_space<vmem>>, vector<16x256xf32>
    %c6_260 = arith.constant 6 : index
    %c0_261 = arith.constant 0 : index
    %c0_262 = arith.constant 0 : index
    %345 = vector.load %arg13[%c6_260, %c0_261, %c0_262] : memref<25x16x1xf32, #tpu.memory_space<vmem>>, vector<1x16x1xf32>
    %346 = vector.shape_cast %345 : vector<1x16x1xf32> to vector<16x1xf32>
    %347 = vector.broadcast %346 : vector<16x1xf32> to vector<16x256xf32>
    %348 = arith.mulf %344, %347 : vector<16x256xf32>
    %349 = arith.addf %343, %348 : vector<16x256xf32>
    %c32_263 = arith.constant 32 : index
    %c112_264 = arith.constant 112 : index
    %350 = vector.load %arg20[%c32_263, %c112_264] : memref<80x512xf32, #tpu.memory_space<vmem>>, vector<16x256xf32>
    %c7_265 = arith.constant 7 : index
    %c0_266 = arith.constant 0 : index
    %c0_267 = arith.constant 0 : index
    %351 = vector.load %arg13[%c7_265, %c0_266, %c0_267] : memref<25x16x1xf32, #tpu.memory_space<vmem>>, vector<1x16x1xf32>
    %352 = vector.shape_cast %351 : vector<1x16x1xf32> to vector<16x1xf32>
    %353 = vector.broadcast %352 : vector<16x1xf32> to vector<16x256xf32>
    %354 = arith.mulf %350, %353 : vector<16x256xf32>
    %355 = arith.addf %349, %354 : vector<16x256xf32>
    %c48_268 = arith.constant 48 : index
    %c113_269 = arith.constant 113 : index
    %356 = vector.load %arg20[%c48_268, %c113_269] : memref<80x512xf32, #tpu.memory_space<vmem>>, vector<16x256xf32>
    %c8_270 = arith.constant 8 : index
    %c0_271 = arith.constant 0 : index
    %c0_272 = arith.constant 0 : index
    %357 = vector.load %arg13[%c8_270, %c0_271, %c0_272] : memref<25x16x1xf32, #tpu.memory_space<vmem>>, vector<1x16x1xf32>
    %358 = vector.shape_cast %357 : vector<1x16x1xf32> to vector<16x1xf32>
    %359 = vector.broadcast %358 : vector<16x1xf32> to vector<16x256xf32>
    %360 = arith.mulf %356, %359 : vector<16x256xf32>
    %361 = arith.addf %355, %360 : vector<16x256xf32>
    %c64_273 = arith.constant 64 : index
    %c114_274 = arith.constant 114 : index
    %362 = vector.load %arg20[%c64_273, %c114_274] : memref<80x512xf32, #tpu.memory_space<vmem>>, vector<16x256xf32>
    %c9_275 = arith.constant 9 : index
    %c0_276 = arith.constant 0 : index
    %c0_277 = arith.constant 0 : index
    %363 = vector.load %arg13[%c9_275, %c0_276, %c0_277] : memref<25x16x1xf32, #tpu.memory_space<vmem>>, vector<1x16x1xf32>
    %364 = vector.shape_cast %363 : vector<1x16x1xf32> to vector<16x1xf32>
    %365 = vector.broadcast %364 : vector<16x1xf32> to vector<16x256xf32>
    %366 = arith.mulf %362, %365 : vector<16x256xf32>
    %367 = arith.addf %361, %366 : vector<16x256xf32>
    %c0_278 = arith.constant 0 : index
    %c126_279 = arith.constant 126 : index
    %368 = vector.load %arg20[%c0_278, %c126_279] : memref<80x512xf32, #tpu.memory_space<vmem>>, vector<16x256xf32>
    %c10_280 = arith.constant 10 : index
    %c0_281 = arith.constant 0 : index
    %c0_282 = arith.constant 0 : index
    %369 = vector.load %arg13[%c10_280, %c0_281, %c0_282] : memref<25x16x1xf32, #tpu.memory_space<vmem>>, vector<1x16x1xf32>
    %370 = vector.shape_cast %369 : vector<1x16x1xf32> to vector<16x1xf32>
    %371 = vector.broadcast %370 : vector<16x1xf32> to vector<16x256xf32>
    %372 = arith.mulf %368, %371 : vector<16x256xf32>
    %373 = arith.addf %367, %372 : vector<16x256xf32>
    %c16_283 = arith.constant 16 : index
    %c127_284 = arith.constant 127 : index
    %374 = vector.load %arg20[%c16_283, %c127_284] : memref<80x512xf32, #tpu.memory_space<vmem>>, vector<16x256xf32>
    %c11_285 = arith.constant 11 : index
    %c0_286 = arith.constant 0 : index
    %c0_287 = arith.constant 0 : index
    %375 = vector.load %arg13[%c11_285, %c0_286, %c0_287] : memref<25x16x1xf32, #tpu.memory_space<vmem>>, vector<1x16x1xf32>
    %376 = vector.shape_cast %375 : vector<1x16x1xf32> to vector<16x1xf32>
    %377 = vector.broadcast %376 : vector<16x1xf32> to vector<16x256xf32>
    %378 = arith.mulf %374, %377 : vector<16x256xf32>
    %379 = arith.addf %373, %378 : vector<16x256xf32>
    %c32_288 = arith.constant 32 : index
    %c128_289 = arith.constant 128 : index
    %380 = vector.load %arg20[%c32_288, %c128_289] : memref<80x512xf32, #tpu.memory_space<vmem>>, vector<16x256xf32>
    %c12_290 = arith.constant 12 : index
    %c0_291 = arith.constant 0 : index
    %c0_292 = arith.constant 0 : index
    %381 = vector.load %arg13[%c12_290, %c0_291, %c0_292] : memref<25x16x1xf32, #tpu.memory_space<vmem>>, vector<1x16x1xf32>
    %382 = vector.shape_cast %381 : vector<1x16x1xf32> to vector<16x1xf32>
    %383 = vector.broadcast %382 : vector<16x1xf32> to vector<16x256xf32>
    %384 = arith.mulf %380, %383 : vector<16x256xf32>
    %385 = arith.addf %379, %384 : vector<16x256xf32>
    %c48_293 = arith.constant 48 : index
    %c129_294 = arith.constant 129 : index
    %386 = vector.load %arg20[%c48_293, %c129_294] : memref<80x512xf32, #tpu.memory_space<vmem>>, vector<16x256xf32>
    %c13_295 = arith.constant 13 : index
    %c0_296 = arith.constant 0 : index
    %c0_297 = arith.constant 0 : index
    %387 = vector.load %arg13[%c13_295, %c0_296, %c0_297] : memref<25x16x1xf32, #tpu.memory_space<vmem>>, vector<1x16x1xf32>
    %388 = vector.shape_cast %387 : vector<1x16x1xf32> to vector<16x1xf32>
    %389 = vector.broadcast %388 : vector<16x1xf32> to vector<16x256xf32>
    %390 = arith.mulf %386, %389 : vector<16x256xf32>
    %391 = arith.addf %385, %390 : vector<16x256xf32>
    %c64_298 = arith.constant 64 : index
    %c130_299 = arith.constant 130 : index
    %392 = vector.load %arg20[%c64_298, %c130_299] : memref<80x512xf32, #tpu.memory_space<vmem>>, vector<16x256xf32>
    %c14_300 = arith.constant 14 : index
    %c0_301 = arith.constant 0 : index
    %c0_302 = arith.constant 0 : index
    %393 = vector.load %arg13[%c14_300, %c0_301, %c0_302] : memref<25x16x1xf32, #tpu.memory_space<vmem>>, vector<1x16x1xf32>
    %394 = vector.shape_cast %393 : vector<1x16x1xf32> to vector<16x1xf32>
    %395 = vector.broadcast %394 : vector<16x1xf32> to vector<16x256xf32>
    %396 = arith.mulf %392, %395 : vector<16x256xf32>
    %397 = arith.addf %391, %396 : vector<16x256xf32>
    %c0_303 = arith.constant 0 : index
    %c142_304 = arith.constant 142 : index
    %398 = vector.load %arg20[%c0_303, %c142_304] : memref<80x512xf32, #tpu.memory_space<vmem>>, vector<16x256xf32>
    %c15_305 = arith.constant 15 : index
    %c0_306 = arith.constant 0 : index
    %c0_307 = arith.constant 0 : index
    %399 = vector.load %arg13[%c15_305, %c0_306, %c0_307] : memref<25x16x1xf32, #tpu.memory_space<vmem>>, vector<1x16x1xf32>
    %400 = vector.shape_cast %399 : vector<1x16x1xf32> to vector<16x1xf32>
    %401 = vector.broadcast %400 : vector<16x1xf32> to vector<16x256xf32>
    %402 = arith.mulf %398, %401 : vector<16x256xf32>
    %403 = arith.addf %397, %402 : vector<16x256xf32>
    %c16_308 = arith.constant 16 : index
    %c143_309 = arith.constant 143 : index
    %404 = vector.load %arg20[%c16_308, %c143_309] : memref<80x512xf32, #tpu.memory_space<vmem>>, vector<16x256xf32>
    %c16_310 = arith.constant 16 : index
    %c0_311 = arith.constant 0 : index
    %c0_312 = arith.constant 0 : index
    %405 = vector.load %arg13[%c16_310, %c0_311, %c0_312] : memref<25x16x1xf32, #tpu.memory_space<vmem>>, vector<1x16x1xf32>
    %406 = vector.shape_cast %405 : vector<1x16x1xf32> to vector<16x1xf32>
    %407 = vector.broadcast %406 : vector<16x1xf32> to vector<16x256xf32>
    %408 = arith.mulf %404, %407 : vector<16x256xf32>
    %409 = arith.addf %403, %408 : vector<16x256xf32>
    %c32_313 = arith.constant 32 : index
    %c144_314 = arith.constant 144 : index
    %410 = vector.load %arg20[%c32_313, %c144_314] : memref<80x512xf32, #tpu.memory_space<vmem>>, vector<16x256xf32>
    %c17_315 = arith.constant 17 : index
    %c0_316 = arith.constant 0 : index
    %c0_317 = arith.constant 0 : index
    %411 = vector.load %arg13[%c17_315, %c0_316, %c0_317] : memref<25x16x1xf32, #tpu.memory_space<vmem>>, vector<1x16x1xf32>
    %412 = vector.shape_cast %411 : vector<1x16x1xf32> to vector<16x1xf32>
    %413 = vector.broadcast %412 : vector<16x1xf32> to vector<16x256xf32>
    %414 = arith.mulf %410, %413 : vector<16x256xf32>
    %415 = arith.addf %409, %414 : vector<16x256xf32>
    %c48_318 = arith.constant 48 : index
    %c145_319 = arith.constant 145 : index
    %416 = vector.load %arg20[%c48_318, %c145_319] : memref<80x512xf32, #tpu.memory_space<vmem>>, vector<16x256xf32>
    %c18_320 = arith.constant 18 : index
    %c0_321 = arith.constant 0 : index
    %c0_322 = arith.constant 0 : index
    %417 = vector.load %arg13[%c18_320, %c0_321, %c0_322] : memref<25x16x1xf32, #tpu.memory_space<vmem>>, vector<1x16x1xf32>
    %418 = vector.shape_cast %417 : vector<1x16x1xf32> to vector<16x1xf32>
    %419 = vector.broadcast %418 : vector<16x1xf32> to vector<16x256xf32>
    %420 = arith.mulf %416, %419 : vector<16x256xf32>
    %421 = arith.addf %415, %420 : vector<16x256xf32>
    %c64_323 = arith.constant 64 : index
    %c146_324 = arith.constant 146 : index
    %422 = vector.load %arg20[%c64_323, %c146_324] : memref<80x512xf32, #tpu.memory_space<vmem>>, vector<16x256xf32>
    %c19_325 = arith.constant 19 : index
    %c0_326 = arith.constant 0 : index
    %c0_327 = arith.constant 0 : index
    %423 = vector.load %arg13[%c19_325, %c0_326, %c0_327] : memref<25x16x1xf32, #tpu.memory_space<vmem>>, vector<1x16x1xf32>
    %424 = vector.shape_cast %423 : vector<1x16x1xf32> to vector<16x1xf32>
    %425 = vector.broadcast %424 : vector<16x1xf32> to vector<16x256xf32>
    %426 = arith.mulf %422, %425 : vector<16x256xf32>
    %427 = arith.addf %421, %426 : vector<16x256xf32>
    %c0_328 = arith.constant 0 : index
    %c158_329 = arith.constant 158 : index
    %428 = vector.load %arg20[%c0_328, %c158_329] : memref<80x512xf32, #tpu.memory_space<vmem>>, vector<16x256xf32>
    %c20_330 = arith.constant 20 : index
    %c0_331 = arith.constant 0 : index
    %c0_332 = arith.constant 0 : index
    %429 = vector.load %arg13[%c20_330, %c0_331, %c0_332] : memref<25x16x1xf32, #tpu.memory_space<vmem>>, vector<1x16x1xf32>
    %430 = vector.shape_cast %429 : vector<1x16x1xf32> to vector<16x1xf32>
    %431 = vector.broadcast %430 : vector<16x1xf32> to vector<16x256xf32>
    %432 = arith.mulf %428, %431 : vector<16x256xf32>
    %433 = arith.addf %427, %432 : vector<16x256xf32>
    %c16_333 = arith.constant 16 : index
    %c159_334 = arith.constant 159 : index
    %434 = vector.load %arg20[%c16_333, %c159_334] : memref<80x512xf32, #tpu.memory_space<vmem>>, vector<16x256xf32>
    %c21_335 = arith.constant 21 : index
    %c0_336 = arith.constant 0 : index
    %c0_337 = arith.constant 0 : index
    %435 = vector.load %arg13[%c21_335, %c0_336, %c0_337] : memref<25x16x1xf32, #tpu.memory_space<vmem>>, vector<1x16x1xf32>
    %436 = vector.shape_cast %435 : vector<1x16x1xf32> to vector<16x1xf32>
    %437 = vector.broadcast %436 : vector<16x1xf32> to vector<16x256xf32>
    %438 = arith.mulf %434, %437 : vector<16x256xf32>
    %439 = arith.addf %433, %438 : vector<16x256xf32>
    %c32_338 = arith.constant 32 : index
    %c160_339 = arith.constant 160 : index
    %440 = vector.load %arg20[%c32_338, %c160_339] : memref<80x512xf32, #tpu.memory_space<vmem>>, vector<16x256xf32>
    %c22_340 = arith.constant 22 : index
    %c0_341 = arith.constant 0 : index
    %c0_342 = arith.constant 0 : index
    %441 = vector.load %arg13[%c22_340, %c0_341, %c0_342] : memref<25x16x1xf32, #tpu.memory_space<vmem>>, vector<1x16x1xf32>
    %442 = vector.shape_cast %441 : vector<1x16x1xf32> to vector<16x1xf32>
    %443 = vector.broadcast %442 : vector<16x1xf32> to vector<16x256xf32>
    %444 = arith.mulf %440, %443 : vector<16x256xf32>
    %445 = arith.addf %439, %444 : vector<16x256xf32>
    %c48_343 = arith.constant 48 : index
    %c161_344 = arith.constant 161 : index
    %446 = vector.load %arg20[%c48_343, %c161_344] : memref<80x512xf32, #tpu.memory_space<vmem>>, vector<16x256xf32>
    %c23_345 = arith.constant 23 : index
    %c0_346 = arith.constant 0 : index
    %c0_347 = arith.constant 0 : index
    %447 = vector.load %arg13[%c23_345, %c0_346, %c0_347] : memref<25x16x1xf32, #tpu.memory_space<vmem>>, vector<1x16x1xf32>
    %448 = vector.shape_cast %447 : vector<1x16x1xf32> to vector<16x1xf32>
    %449 = vector.broadcast %448 : vector<16x1xf32> to vector<16x256xf32>
    %450 = arith.mulf %446, %449 : vector<16x256xf32>
    %451 = arith.addf %445, %450 : vector<16x256xf32>
    %c64_348 = arith.constant 64 : index
    %c162_349 = arith.constant 162 : index
    %452 = vector.load %arg20[%c64_348, %c162_349] : memref<80x512xf32, #tpu.memory_space<vmem>>, vector<16x256xf32>
    %c24_350 = arith.constant 24 : index
    %c0_351 = arith.constant 0 : index
    %c0_352 = arith.constant 0 : index
    %453 = vector.load %arg13[%c24_350, %c0_351, %c0_352] : memref<25x16x1xf32, #tpu.memory_space<vmem>>, vector<1x16x1xf32>
    %454 = vector.shape_cast %453 : vector<1x16x1xf32> to vector<16x1xf32>
    %455 = vector.broadcast %454 : vector<16x1xf32> to vector<16x256xf32>
    %456 = arith.mulf %452, %455 : vector<16x256xf32>
    %457 = arith.addf %451, %456 : vector<16x256xf32>
    %c0_353 = arith.constant 0 : index
    %c0_354 = arith.constant 0 : index
    %458 = vector.load %arg14[%c0_353, %c0_354] : memref<16x1xf32, #tpu.memory_space<vmem>>, vector<16x1xf32>
    %459 = vector.broadcast %458 : vector<16x1xf32> to vector<16x256xf32>
    %460 = arith.addf %457, %459 : vector<16x256xf32>
    %cst_355 = arith.constant 0.000000e+00 : f32
    %461 = vector.broadcast %cst_355 : f32 to vector<16x256xf32>
    %462 = arith.maximumf %460, %461 : vector<16x256xf32>
    %c0_356 = arith.constant 0 : index
    %c0_357 = arith.constant 0 : index
    %463 = vector.load %arg15[%c0_356, %c0_357] : memref<16x16xf32, #tpu.memory_space<vmem>>, vector<16x16xf32>
    %cst_358 = arith.constant dense<0.000000e+00> : vector<16x256xf32>
    %464 = tpu.matmul %463, %462, %cst_358 {dimension_numbers = #tpu.dot_dimension_numbers<[1], [0], [0], [1], [0, 0, 1, 1], [], []>} : vector<16x16xf32>, vector<16x256xf32>, vector<16x256xf32> -> vector<16x256xf32>
    %c0_359 = arith.constant 0 : index
    %c0_360 = arith.constant 0 : index
    %465 = vector.load %arg16[%c0_359, %c0_360] : memref<16x1xf32, #tpu.memory_space<vmem>>, vector<16x1xf32>
    %466 = vector.broadcast %465 : vector<16x1xf32> to vector<16x256xf32>
    %467 = arith.addf %464, %466 : vector<16x256xf32>
    %cst_361 = arith.constant 0.000000e+00 : f32
    %468 = vector.broadcast %cst_361 : f32 to vector<16x256xf32>
    %469 = arith.maximumf %467, %468 : vector<16x256xf32>
    %470 = arith.addf %244, %469 : vector<16x256xf32>
    %471 = tpu.concatenate %17, %244, %470 in 0 : vector<16x256xf32>, vector<16x256xf32>, vector<16x256xf32> -> vector<48x256xf32>
    %c0_362 = arith.constant 0 : index
    %c0_363 = arith.constant 0 : index
    %472 = vector.load %arg17[%c0_362, %c0_363] : memref<32x48xf32, #tpu.memory_space<vmem>>, vector<32x48xf32>
    %cst_364 = arith.constant dense<0.000000e+00> : vector<32x256xf32>
    %473 = tpu.matmul %472, %471, %cst_364 {dimension_numbers = #tpu.dot_dimension_numbers<[1], [0], [0], [1], [0, 0, 1, 1], [], []>} : vector<32x48xf32>, vector<48x256xf32>, vector<32x256xf32> -> vector<32x256xf32>
    %c0_365 = arith.constant 0 : index
    %c0_366 = arith.constant 0 : index
    %474 = vector.load %arg18[%c0_365, %c0_366] : memref<32x1xf32, #tpu.memory_space<vmem>>, vector<32x1xf32>
    %475 = vector.broadcast %474 : vector<32x1xf32> to vector<32x256xf32>
    %476 = arith.addf %473, %475 : vector<32x256xf32>
    %477 = arith.negf %476 : vector<32x256xf32>
    %478 = math.exp %477 : vector<32x256xf32>
    %cst_367 = arith.constant 1.000000e+00 : f32
    %479 = vector.broadcast %cst_367 : f32 to vector<32x256xf32>
    %480 = arith.addf %479, %478 : vector<32x256xf32>
    %481 = arith.divf %479, %480 : vector<32x256xf32>
    %482 = arith.mulf %476, %481 : vector<32x256xf32>
    %c0_368 = arith.constant 0 : index
    %c0_369 = arith.constant 0 : index
    %c0_370 = arith.constant 0 : index
    %483 = vector.load %arg19[%c0_368, %c0_369, %c0_370] : memref<1x32x256xf32, #tpu.memory_space<vmem>>, vector<1x32x256xf32>
    %484 = vector.shape_cast %483 : vector<1x32x256xf32> to vector<32x256xf32>
    %485 = vector.shape_cast %482 : vector<32x256xf32> to vector<1x32x256xf32>
    tpu.vector_store %arg19[%c0_368, %c0_369, %c0_370], %485 {strides = array<i32>} : memref<1x32x256xf32, #tpu.memory_space<vmem>>, vector<1x32x256xf32>,
    return
  }
  func.func @transform_0(%arg0: i32) -> (i32, i32, i32) {
    %c0_i32 = arith.constant 0 : i32
    %c0_i32_0 = arith.constant 0 : i32
    %c0_i32_1 = arith.constant 0 : i32
    return %arg0, %c0_i32, %c0_i32_0 : i32, i32, i32
  }
  func.func @transform_1(%arg0: i32) -> (i32, i32, i32) {
    %c0_i32 = arith.constant 0 : i32
    %c0_i32_0 = arith.constant 0 : i32
    %c0_i32_1 = arith.constant 0 : i32
    %c0_i32_2 = arith.constant 0 : i32
    return %c0_i32, %c0_i32_0, %c0_i32_1 : i32, i32, i32
  }
  func.func @transform_2(%arg0: i32) -> (i32, i32) {
    %c0_i32 = arith.constant 0 : i32
    %c0_i32_0 = arith.constant 0 : i32
    %c0_i32_1 = arith.constant 0 : i32
    return %c0_i32, %c0_i32_0 : i32, i32
  }
  func.func @transform_3(%arg0: i32) -> (i32, i32) {
    %c0_i32 = arith.constant 0 : i32
    %c0_i32_0 = arith.constant 0 : i32
    %c0_i32_1 = arith.constant 0 : i32
    return %c0_i32, %c0_i32_0 : i32, i32
  }
  func.func @transform_4(%arg0: i32) -> (i32, i32, i32) {
    %c0_i32 = arith.constant 0 : i32
    %c0_i32_0 = arith.constant 0 : i32
    %c0_i32_1 = arith.constant 0 : i32
    %c0_i32_2 = arith.constant 0 : i32
    return %c0_i32, %c0_i32_0, %c0_i32_1 : i32, i32, i32
  }
  func.func @transform_5(%arg0: i32) -> (i32, i32) {
    %c0_i32 = arith.constant 0 : i32
    %c0_i32_0 = arith.constant 0 : i32
    %c0_i32_1 = arith.constant 0 : i32
    return %c0_i32, %c0_i32_0 : i32, i32
  }
  func.func @transform_6(%arg0: i32) -> (i32, i32, i32) {
    %c0_i32 = arith.constant 0 : i32
    %c0_i32_0 = arith.constant 0 : i32
    %c0_i32_1 = arith.constant 0 : i32
    %c0_i32_2 = arith.constant 0 : i32
    return %c0_i32, %c0_i32_0, %c0_i32_1 : i32, i32, i32
  }
  func.func @transform_7(%arg0: i32) -> (i32, i32) {
    %c0_i32 = arith.constant 0 : i32
    %c0_i32_0 = arith.constant 0 : i32
    %c0_i32_1 = arith.constant 0 : i32
    return %c0_i32, %c0_i32_0 : i32, i32
  }
  func.func @transform_8(%arg0: i32) -> (i32, i32) {
    %c0_i32 = arith.constant 0 : i32
    %c0_i32_0 = arith.constant 0 : i32
    %c0_i32_1 = arith.constant 0 : i32
    return %c0_i32, %c0_i32_0 : i32, i32
  }
  func.func @transform_9(%arg0: i32) -> (i32, i32) {
    %c0_i32 = arith.constant 0 : i32
    %c0_i32_0 = arith.constant 0 : i32
    %c0_i32_1 = arith.constant 0 : i32
    return %c0_i32, %c0_i32_0 : i32, i32
  }
  func.func @transform_10(%arg0: i32) -> (i32, i32, i32) {
    %c0_i32 = arith.constant 0 : i32
    %c0_i32_0 = arith.constant 0 : i32
    %c0_i32_1 = arith.constant 0 : i32
    %c0_i32_2 = arith.constant 0 : i32
    return %c0_i32, %c0_i32_0, %c0_i32_1 : i32, i32, i32
  }
  func.func @transform_11(%arg0: i32) -> (i32, i32) {
    %c0_i32 = arith.constant 0 : i32
    %c0_i32_0 = arith.constant 0 : i32
    %c0_i32_1 = arith.constant 0 : i32
    return %c0_i32, %c0_i32_0 : i32, i32
  }
  func.func @transform_12(%arg0: i32) -> (i32, i32, i32) {
    %c0_i32 = arith.constant 0 : i32
    %c0_i32_0 = arith.constant 0 : i32
    %c0_i32_1 = arith.constant 0 : i32
    %c0_i32_2 = arith.constant 0 : i32
    return %c0_i32, %c0_i32_0, %c0_i32_1 : i32, i32, i32
  }
  func.func @transform_13(%arg0: i32) -> (i32, i32) {
    %c0_i32 = arith.constant 0 : i32
    %c0_i32_0 = arith.constant 0 : i32
    %c0_i32_1 = arith.constant 0 : i32
    return %c0_i32, %c0_i32_0 : i32, i32
  }
  func.func @transform_14(%arg0: i32) -> (i32, i32) {
    %c0_i32 = arith.constant 0 : i32
    %c0_i32_0 = arith.constant 0 : i32
    %c0_i32_1 = arith.constant 0 : i32
    return %c0_i32, %c0_i32_0 : i32, i32
  }
  func.func @transform_15(%arg0: i32) -> (i32, i32) {
    %c0_i32 = arith.constant 0 : i32
    %c0_i32_0 = arith.constant 0 : i32
    %c0_i32_1 = arith.constant 0 : i32
    return %c0_i32, %c0_i32_0 : i32, i32
  }
  func.func @transform_16(%arg0: i32) -> (i32, i32) {
    %c0_i32 = arith.constant 0 : i32
    %c0_i32_0 = arith.constant 0 : i32
    %c0_i32_1 = arith.constant 0 : i32
    return %c0_i32, %c0_i32_0 : i32, i32
  }
  func.func @transform_17(%arg0: i32) -> (i32, i32) {
    %c0_i32 = arith.constant 0 : i32
    %c0_i32_0 = arith.constant 0 : i32
    %c0_i32_1 = arith.constant 0 : i32
    return %c0_i32, %c0_i32_0 : i32, i32
  }
  func.func @transform_18(%arg0: i32) -> (i32, i32, i32) {
    %c0_i32 = arith.constant 0 : i32
    %c0_i32_0 = arith.constant 0 : i32
    %c0_i32_1 = arith.constant 0 : i32
    return %arg0, %c0_i32, %c0_i32_0 : i32, i32, i32
  }
}

</mosaic_0001>

<llo_original>
// kernel: cspstage_rtm_forward.1
$region0: #{cspstage_rtm_forward.1}
  #allocation0 [shape = 'u32[]', space=smem, size = 0x4, offset = 0x4, fixed_abs, tag = 'smem constant byte address 0x4 - core index']
  #allocation1 [shape = 'u32[144,128]{1,0:T(1,128)}', space=vmem, size = 0x12000, scoped, tag = 'internal scratch']
  #allocation2 [shape = 'f32[80,512]{1,0:T(8,128)}', space=vmem, size = 0x28000, scoped, tag = 'scratch operand']
  %s0 = inlined_call_operand.vmem [shape: f32[2,16,256], index: 0, kind: input, shape index: {}]
  %s1 = inlined_call_operand.vmem [shape: f32[5,1,256], index: 1, kind: input, shape index: {}]
  %s2 = inlined_call_operand.vmem [shape: f32[32,16], index: 2, kind: input, shape index: {}]
  %s3 = inlined_call_operand.vmem [shape: f32[32,1], index: 3, kind: input, shape index: {}]
  %s4 = inlined_call_operand.vmem [shape: f32[3,16,48], index: 4, kind: input, shape index: {}]
  %s5 = inlined_call_operand.vmem [shape: f32[16,1], index: 5, kind: input, shape index: {}]
  %s6 = inlined_call_operand.vmem [shape: f32[25,16,1], index: 6, kind: input, shape index: {}]
  %s7 = inlined_call_operand.vmem [shape: f32[16,1], index: 7, kind: input, shape index: {}]
  %s8 = inlined_call_operand.vmem [shape: f32[16,16], index: 8, kind: input, shape index: {}]
  %s9 = inlined_call_operand.vmem [shape: f32[16,1], index: 9, kind: input, shape index: {}]
  %s10 = inlined_call_operand.vmem [shape: f32[3,16,48], index: 10, kind: input, shape index: {}]
  %s11 = inlined_call_operand.vmem [shape: f32[16,1], index: 11, kind: input, shape index: {}]
  %s12 = inlined_call_operand.vmem [shape: f32[25,16,1], index: 12, kind: input, shape index: {}]
  %s13 = inlined_call_operand.vmem [shape: f32[16,1], index: 13, kind: input, shape index: {}]
  %s14 = inlined_call_operand.vmem [shape: f32[16,16], index: 14, kind: input, shape index: {}]
  %s15 = inlined_call_operand.vmem [shape: f32[16,1], index: 15, kind: input, shape index: {}]
  %s16 = inlined_call_operand.vmem [shape: f32[32,48], index: 16, kind: input, shape index: {}]
  %s17 = inlined_call_operand.vmem [shape: f32[32,1], index: 17, kind: input, shape index: {}]
  %s18 = inlined_call_operand.vmem [shape: f32[2,32,256], index: 18, kind: output, shape index: {}]
  %s19 = sld [smem:[#allocation0]]
  $region105: #{cspstage_rtm_forward.1} parent=0
    _
  %s21 = ssub.s32 1, %s19
  %s22 = scalar_select 0, %s21, %s19
  loop: start=0, step=1, limit=4
  $region2: #{cspstage_rtm_forward.1} parent=0 // loop_pre_header
    _
  $region3: #{cspstage_rtm_forward.1} parent=0 // loop_header
    %s24 = sphi 0, %s28
    %p25 = scmp.ge.s32.totalorder %s24, 4
    %s34 = sphi 0, %s36
    %s37 = sphi 0, %s34
    %s38 = sphi 0, %s37
    %s54 = sphi 0, %s38
    %s58 = sphi 0, %s58
    %s60 = sphi 0, %s58
    %s61 = sphi 0, %s60
    %s75 = sphi 0, %s61
    %s79 = sphi 0, %s79
    %s81 = sphi 0, %s79
    %s82 = sphi 0, %s81
    %s96 = sphi 0, %s82
    %s100 = sphi 0, %s100
    %s102 = sphi 0, %s100
    %s103 = sphi 0, %s102
    %s117 = sphi 0, %s103
    %s121 = sphi 0, %s121
    %s123 = sphi 0, %s121
    %s124 = sphi 0, %s123
    %s138 = sphi 0, %s124
    %s142 = sphi 0, %s142
    %s144 = sphi 0, %s142
    %s145 = sphi 0, %s144
    %s159 = sphi 0, %s145
    %s163 = sphi 0, %s163
    %s165 = sphi 0, %s163
    %s166 = sphi 0, %s165
    %s180 = sphi 0, %s166
    %s184 = sphi 0, %s184
    %s186 = sphi 0, %s184
    %s187 = sphi 0, %s186
    %s201 = sphi 0, %s187
    %s205 = sphi 0, %s205
    %s207 = sphi 0, %s205
    %s208 = sphi 0, %s207
    %s222 = sphi 0, %s208
    %s226 = sphi 0, %s226
    %s228 = sphi 0, %s226
    %s229 = sphi 0, %s228
    %s243 = sphi 0, %s229
    %s247 = sphi 0, %s247
    %s249 = sphi 0, %s247
    %s250 = sphi 0, %s249
    %s264 = sphi 0, %s250
    %s268 = sphi 0, %s268
    %s270 = sphi 0, %s268
    %s271 = sphi 0, %s270
    %s285 = sphi 0, %s271
    %s289 = sphi 0, %s289
    %s291 = sphi 0, %s289
    %s292 = sphi 0, %s291
    %s306 = sphi 0, %s292
    %s310 = sphi 0, %s310
    %s312 = sphi 0, %s310
    %s313 = sphi 0, %s312
    %s327 = sphi 0, %s313
    %s331 = sphi 0, %s331
    %s333 = sphi 0, %s331
    %s334 = sphi 0, %s333
    %s348 = sphi 0, %s334
    %s352 = sphi 0, %s352
    %s354 = sphi 0, %s352
    %s355 = sphi 0, %s354
    %s369 = sphi 0, %s355
    %s373 = sphi 0, %s373
    %s375 = sphi 0, %s373
    %s376 = sphi 0, %s375
    %s390 = sphi 0, %s376
    %s394 = sphi 0, %s394
    %s396 = sphi 0, %s394
    %s397 = sphi 0, %s396
    %s411 = sphi 0, %s397
    %s417 = sphi 0, %s419
    %s420 = sphi 0, %s417
    %s421 = sphi 0, %s420
    %s437 = sphi 0, %s421
  $region4: #{cspstage_rtm_forward.1} parent=0 // loop_header_branch
    %27 = sbr.rel (%p25) target = $region8
  $region5: #{cspstage_rtm_forward.1} parent=0 // loop_body
    %s29 = ssub.s32 %s24, 1
    %s30 = ssub.s32 %s24, 2
    %s31 = sadd.s32 %s24, 1
    %s32 = ssub.s32 %s24, %s31
    %p33 = scmp.eq.s32.totalorder %s32, 0
    %s35 = sadd.s32 %s34, 1
    %s36 = scalar_select %p33, %s34, %s35
    %p39 = pneg %p33
    %p40 = scmp.eq.s32.totalorder %s24, 1
    %p41 = por %p39, %p40
    %p42 = scmp.ne.s32.totalorder %s34, %s37
    %p43 = scmp.eq.s32.totalorder %s24, 0
    %p44 = por %p42, %p43
    %p45 = scmp.ne.s32.totalorder %s34, %s37
    %p46 = scmp.eq.s32.totalorder %s29, 1
    %p47 = por %p45, %p46
    %p48 = scmp.ne.s32.totalorder %s37, %s38
    %p49 = scmp.eq.s32.totalorder %s29, 0
    %p50 = por %p48, %p49
    %p51 = scmp.ne.s32.totalorder %s37, %s38
    %p52 = scmp.eq.s32.totalorder %s30, 1
    %p53 = por %p51, %p52
    %p55 = scmp.ne.s32.totalorder %s38, %s54
    %p56 = scmp.eq.s32.totalorder %s30, 0
    %p57 = por %p55, %p56
    %s59 = sadd.s32 %s58, 1
    %p62 = scmp.eq.s32.totalorder %s24, 1
    %p63 = scmp.ne.s32.totalorder %s58, %s60
    %p64 = scmp.eq.s32.totalorder %s24, 0
    %p65 = por %p63, %p64
    %p66 = scmp.ne.s32.totalorder %s58, %s60
    %p67 = scmp.eq.s32.totalorder %s29, 1
    %p68 = por %p66, %p67
    %p69 = scmp.ne.s32.totalorder %s60, %s61
    %p70 = scmp.eq.s32.totalorder %s29, 0
    %p71 = por %p69, %p70
    %p72 = scmp.ne.s32.totalorder %s60, %s61
    %p73 = scmp.eq.s32.totalorder %s30, 1
    %p74 = por %p72, %p73
    %p76 = scmp.ne.s32.totalorder %s61, %s75
    %p77 = scmp.eq.s32.totalorder %s30, 0
    %p78 = por %p76, %p77
    %s80 = sadd.s32 %s79, 1
    %p83 = scmp.eq.s32.totalorder %s24, 1
    %p84 = scmp.ne.s32.totalorder %s79, %s81
    %p85 = scmp.eq.s32.totalorder %s24, 0
    %p86 = por %p84, %p85
    %p87 = scmp.ne.s32.totalorder %s79, %s81
    %p88 = scmp.eq.s32.totalorder %s29, 1
    %p89 = por %p87, %p88
    %p90 = scmp.ne.s32.totalorder %s81, %s82
    %p91 = scmp.eq.s32.totalorder %s29, 0
    %p92 = por %p90, %p91
    %p93 = scmp.ne.s32.totalorder %s81, %s82
    %p94 = scmp.eq.s32.totalorder %s30, 1
    %p95 = por %p93, %p94
    %p97 = scmp.ne.s32.totalorder %s82, %s96
    %p98 = scmp.eq.s32.totalorder %s30, 0
    %p99 = por %p97, %p98
    %s101 = sadd.s32 %s100, 1
    %p104 = scmp.eq.s32.totalorder %s24, 1
    %p105 = scmp.ne.s32.totalorder %s100, %s102
    %p106 = scmp.eq.s32.totalorder %s24, 0
    %p107 = por %p105, %p106
    %p108 = scmp.ne.s32.totalorder %s100, %s102
    %p109 = scmp.eq.s32.totalorder %s29, 1
    %p110 = por %p108, %p109
    %p111 = scmp.ne.s32.totalorder %s102, %s103
    %p112 = scmp.eq.s32.totalorder %s29, 0
    %p113 = por %p111, %p112
    %p114 = scmp.ne.s32.totalorder %s102, %s103
    %p115 = scmp.eq.s32.totalorder %s30, 1
    %p116 = por %p114, %p115
    %p118 = scmp.ne.s32.totalorder %s103, %s117
    %p119 = scmp.eq.s32.totalorder %s30, 0
    %p120 = por %p118, %p119
    %s122 = sadd.s32 %s121, 1
    %p125 = scmp.eq.s32.totalorder %s24, 1
    %p126 = scmp.ne.s32.totalorder %s121, %s123
    %p127 = scmp.eq.s32.totalorder %s24, 0
    %p128 = por %p126, %p127
    %p129 = scmp.ne.s32.totalorder %s121, %s123
    %p130 = scmp.eq.s32.totalorder %s29, 1
    %p131 = por %p129, %p130
    %p132 = scmp.ne.s32.totalorder %s123, %s124
    %p133 = scmp.eq.s32.totalorder %s29, 0
    %p134 = por %p132, %p133
    %p135 = scmp.ne.s32.totalorder %s123, %s124
    %p136 = scmp.eq.s32.totalorder %s30, 1
    %p137 = por %p135, %p136
    %p139 = scmp.ne.s32.totalorder %s124, %s138
    %p140 = scmp.eq.s32.totalorder %s30, 0
    %p141 = por %p139, %p140
    %s143 = sadd.s32 %s142, 1
    %p146 = scmp.eq.s32.totalorder %s24, 1
    %p147 = scmp.ne.s32.totalorder %s142, %s144
    %p148 = scmp.eq.s32.totalorder %s24, 0
    %p149 = por %p147, %p148
    %p150 = scmp.ne.s32.totalorder %s142, %s144
    %p151 = scmp.eq.s32.totalorder %s29, 1
    %p152 = por %p150, %p151
    %p153 = scmp.ne.s32.totalorder %s144, %s145
    %p154 = scmp.eq.s32.totalorder %s29, 0
    %p155 = por %p153, %p154
    %p156 = scmp.ne.s32.totalorder %s144, %s145
    %p157 = scmp.eq.s32.totalorder %s30, 1
    %p158 = por %p156, %p157
    %p160 = scmp.ne.s32.totalorder %s145, %s159
    %p161 = scmp.eq.s32.totalorder %s30, 0
    %p162 = por %p160, %p161
    %s164 = sadd.s32 %s163, 1
    %p167 = scmp.eq.s32.totalorder %s24, 1
    %p168 = scmp.ne.s32.totalorder %s163, %s165
    %p169 = scmp.eq.s32.totalorder %s24, 0
    %p170 = por %p168, %p169
    %p171 = scmp.ne.s32.totalorder %s163, %s165
    %p172 = scmp.eq.s32.totalorder %s29, 1
    %p173 = por %p171, %p172
    %p174 = scmp.ne.s32.totalorder %s165, %s166
    %p175 = scmp.eq.s32.totalorder %s29, 0
    %p176 = por %p174, %p175
    %p177 = scmp.ne.s32.totalorder %s165, %s166
    %p178 = scmp.eq.s32.totalorder %s30, 1
    %p179 = por %p177, %p178
    %p181 = scmp.ne.s32.totalorder %s166, %s180
    %p182 = scmp.eq.s32.totalorder %s30, 0
    %p183 = por %p181, %p182
    %s185 = sadd.s32 %s184, 1
    %p188 = scmp.eq.s32.totalorder %s24, 1
    %p189 = scmp.ne.s32.totalorder %s184, %s186
    %p190 = scmp.eq.s32.totalorder %s24, 0
    %p191 = por %p189, %p190
    %p192 = scmp.ne.s32.totalorder %s184, %s186
    %p193 = scmp.eq.s32.totalorder %s29, 1
    %p194 = por %p192, %p193
    %p195 = scmp.ne.s32.totalorder %s186, %s187
    %p196 = scmp.eq.s32.totalorder %s29, 0
    %p197 = por %p195, %p196
    %p198 = scmp.ne.s32.totalorder %s186, %s187
    %p199 = scmp.eq.s32.totalorder %s30, 1
    %p200 = por %p198, %p199
    %p202 = scmp.ne.s32.totalorder %s187, %s201
    %p203 = scmp.eq.s32.totalorder %s30, 0
    %p204 = por %p202, %p203
    %s206 = sadd.s32 %s205, 1
    %p209 = scmp.eq.s32.totalorder %s24, 1
    %p210 = scmp.ne.s32.totalorder %s205, %s207
    %p211 = scmp.eq.s32.totalorder %s24, 0
    %p212 = por %p210, %p211
    %p213 = scmp.ne.s32.totalorder %s205, %s207
    %p214 = scmp.eq.s32.totalorder %s29, 1
    %p215 = por %p213, %p214
    %p216 = scmp.ne.s32.totalorder %s207, %s208
    %p217 = scmp.eq.s32.totalorder %s29, 0
    %p218 = por %p216, %p217
    %p219 = scmp.ne.s32.totalorder %s207, %s208
    %p220 = scmp.eq.s32.totalorder %s30, 1
    %p221 = por %p219, %p220
    %p223 = scmp.ne.s32.totalorder %s208, %s222
    %p224 = scmp.eq.s32.totalorder %s30, 0
    %p225 = por %p223, %p224
    %s227 = sadd.s32 %s226, 1
    %p230 = scmp.eq.s32.totalorder %s24, 1
    %p231 = scmp.ne.s32.totalorder %s226, %s228
    %p232 = scmp.eq.s32.totalorder %s24, 0
    %p233 = por %p231, %p232
    %p234 = scmp.ne.s32.totalorder %s226, %s228
    %p235 = scmp.eq.s32.totalorder %s29, 1
    %p236 = por %p234, %p235
    %p237 = scmp.ne.s32.totalorder %s228, %s229
    %p238 = scmp.eq.s32.totalorder %s29, 0
    %p239 = por %p237, %p238
    %p240 = scmp.ne.s32.totalorder %s228, %s229
    %p241 = scmp.eq.s32.totalorder %s30, 1
    %p242 = por %p240, %p241
    %p244 = scmp.ne.s32.totalorder %s229, %s243
    %p245 = scmp.eq.s32.totalorder %s30, 0
    %p246 = por %p244, %p245
    %s248 = sadd.s32 %s247, 1
    %p251 = scmp.eq.s32.totalorder %s24, 1
    %p252 = scmp.ne.s32.totalorder %s247, %s249
    %p253 = scmp.eq.s32.totalorder %s24, 0
    %p254 = por %p252, %p253
    %p255 = scmp.ne.s32.totalorder %s247, %s249
    %p256 = scmp.eq.s32.totalorder %s29, 1
    %p257 = por %p255, %p256
    %p258 = scmp.ne.s32.totalorder %s249, %s250
    %p259 = scmp.eq.s32.totalorder %s29, 0
    %p260 = por %p258, %p259
    %p261 = scmp.ne.s32.totalorder %s249, %s250
    %p262 = scmp.eq.s32.totalorder %s30, 1
    %p263 = por %p261, %p262
    %p265 = scmp.ne.s32.totalorder %s250, %s264
    %p266 = scmp.eq.s32.totalorder %s30, 0
    %p267 = por %p265, %p266
    %s269 = sadd.s32 %s268, 1
    %p272 = scmp.eq.s32.totalorder %s24, 1
    %p273 = scmp.ne.s32.totalorder %s268, %s270
    %p274 = scmp.eq.s32.totalorder %s24, 0
    %p275 = por %p273, %p274
    %p276 = scmp.ne.s32.totalorder %s268, %s270
    %p277 = scmp.eq.s32.totalorder %s29, 1
    %p278 = por %p276, %p277
    %p279 = scmp.ne.s32.totalorder %s270, %s271
    %p280 = scmp.eq.s32.totalorder %s29, 0
    %p281 = por %p279, %p280
    %p282 = scmp.ne.s32.totalorder %s270, %s271
    %p283 = scmp.eq.s32.totalorder %s30, 1
    %p284 = por %p282, %p283
    %p286 = scmp.ne.s32.totalorder %s271, %s285
    %p287 = scmp.eq.s32.totalorder %s30, 0
    %p288 = por %p286, %p287
    %s290 = sadd.s32 %s289, 1
    %p293 = scmp.eq.s32.totalorder %s24, 1
    %p294 = scmp.ne.s32.totalorder %s289, %s291
    %p295 = scmp.eq.s32.totalorder %s24, 0
    %p296 = por %p294, %p295
    %p297 = scmp.ne.s32.totalorder %s289, %s291
    %p298 = scmp.eq.s32.totalorder %s29, 1
    %p299 = por %p297, %p298
    %p300 = scmp.ne.s32.totalorder %s291, %s292
    %p301 = scmp.eq.s32.totalorder %s29, 0
    %p302 = por %p300, %p301
    %p303 = scmp.ne.s32.totalorder %s291, %s292
    %p304 = scmp.eq.s32.totalorder %s30, 1
    %p305 = por %p303, %p304
    %p307 = scmp.ne.s32.totalorder %s292, %s306
    %p308 = scmp.eq.s32.totalorder %s30, 0
    %p309 = por %p307, %p308
    %s311 = sadd.s32 %s310, 1
    %p314 = scmp.eq.s32.totalorder %s24, 1
    %p315 = scmp.ne.s32.totalorder %s310, %s312
    %p316 = scmp.eq.s32.totalorder %s24, 0
    %p317 = por %p315, %p316
    %p318 = scmp.ne.s32.totalorder %s310, %s312
    %p319 = scmp.eq.s32.totalorder %s29, 1
    %p320 = por %p318, %p319
    %p321 = scmp.ne.s32.totalorder %s312, %s313
    %p322 = scmp.eq.s32.totalorder %s29, 0
    %p323 = por %p321, %p322
    %p324 = scmp.ne.s32.totalorder %s312, %s313
    %p325 = scmp.eq.s32.totalorder %s30, 1
    %p326 = por %p324, %p325
    %p328 = scmp.ne.s32.totalorder %s313, %s327
    %p329 = scmp.eq.s32.totalorder %s30, 0
    %p330 = por %p328, %p329
    %s332 = sadd.s32 %s331, 1
    %p335 = scmp.eq.s32.totalorder %s24, 1
    %p336 = scmp.ne.s32.totalorder %s331, %s333
    %p337 = scmp.eq.s32.totalorder %s24, 0
    %p338 = por %p336, %p337
    %p339 = scmp.ne.s32.totalorder %s331, %s333
    %p340 = scmp.eq.s32.totalorder %s29, 1
    %p341 = por %p339, %p340
    %p342 = scmp.ne.s32.totalorder %s333, %s334
    %p343 = scmp.eq.s32.totalorder %s29, 0
    %p344 = por %p342, %p343
    %p345 = scmp.ne.s32.totalorder %s333, %s334
    %p346 = scmp.eq.s32.totalorder %s30, 1
    %p347 = por %p345, %p346
    %p349 = scmp.ne.s32.totalorder %s334, %s348
    %p350 = scmp.eq.s32.totalorder %s30, 0
    %p351 = por %p349, %p350
    %s353 = sadd.s32 %s352, 1
    %p356 = scmp.eq.s32.totalorder %s24, 1
    %p357 = scmp.ne.s32.totalorder %s352, %s354
    %p358 = scmp.eq.s32.totalorder %s24, 0
    %p359 = por %p357, %p358
    %p360 = scmp.ne.s32.totalorder %s352, %s354
    %p361 = scmp.eq.s32.totalorder %s29, 1
    %p362 = por %p360, %p361
    %p363 = scmp.ne.s32.totalorder %s354, %s355
    %p364 = scmp.eq.s32.totalorder %s29, 0
    %p365 = por %p363, %p364
    %p366 = scmp.ne.s32.totalorder %s354, %s355
    %p367 = scmp.eq.s32.totalorder %s30, 1
    %p368 = por %p366, %p367
    %p370 = scmp.ne.s32.totalorder %s355, %s369
    %p371 = scmp.eq.s32.totalorder %s30, 0
    %p372 = por %p370, %p371
    %s374 = sadd.s32 %s373, 1
    %p377 = scmp.eq.s32.totalorder %s24, 1
    %p378 = scmp.ne.s32.totalorder %s373, %s375
    %p379 = scmp.eq.s32.totalorder %s24, 0
    %p380 = por %p378, %p379
    %p381 = scmp.ne.s32.totalorder %s373, %s375
    %p382 = scmp.eq.s32.totalorder %s29, 1
    %p383 = por %p381, %p382
    %p384 = scmp.ne.s32.totalorder %s375, %s376
    %p385 = scmp.eq.s32.totalorder %s29, 0
    %p386 = por %p384, %p385
    %p387 = scmp.ne.s32.totalorder %s375, %s376
    %p388 = scmp.eq.s32.totalorder %s30, 1
    %p389 = por %p387, %p388
    %p391 = scmp.ne.s32.totalorder %s376, %s390
    %p392 = scmp.eq.s32.totalorder %s30, 0
    %p393 = por %p391, %p392
    %s395 = sadd.s32 %s394, 1
    %p398 = scmp.eq.s32.totalorder %s24, 1
    %p399 = scmp.ne.s32.totalorder %s394, %s396
    %p400 = scmp.eq.s32.totalorder %s24, 0
    %p401 = por %p399, %p400
    %p402 = scmp.ne.s32.totalorder %s394, %s396
    %p403 = scmp.eq.s32.totalorder %s29, 1
    %p404 = por %p402, %p403
    %p405 = scmp.ne.s32.totalorder %s396, %s397
    %p406 = scmp.eq.s32.totalorder %s29, 0
    %p407 = por %p405, %p406
    %p408 = scmp.ne.s32.totalorder %s396, %s397
    %p409 = scmp.eq.s32.totalorder %s30, 1
    %p410 = por %p408, %p409
    %p412 = scmp.ne.s32.totalorder %s397, %s411
    %p413 = scmp.eq.s32.totalorder %s30, 0
    %p414 = por %p412, %p413
    %s415 = ssub.s32 %s24, %s31
    %p416 = scmp.eq.s32.totalorder %s415, 0
    %s418 = sadd.s32 %s417, 1
    %s419 = scalar_select %p416, %s417, %s418
    %p422 = pneg %p416
    %p423 = scmp.eq.s32.totalorder %s24, 1
    %p424 = por %p422, %p423
    %p425 = scmp.ne.s32.totalorder %s417, %s420
    %p426 = scmp.eq.s32.totalorder %s24, 0
    %p427 = por %p425, %p426
    %p428 = scmp.ne.s32.totalorder %s417, %s420
    %p429 = scmp.eq.s32.totalorder %s29, 1
    %p430 = por %p428, %p429
    %p431 = scmp.ne.s32.totalorder %s420, %s421
    %p432 = scmp.eq.s32.totalorder %s29, 0
    %p433 = por %p431, %p432
    %p434 = scmp.ne.s32.totalorder %s420, %s421
    %p435 = scmp.eq.s32.totalorder %s30, 1
    %p436 = por %p434, %p435
    %p438 = scmp.ne.s32.totalorder %s421, %s437
    %p439 = scmp.eq.s32.totalorder %s30, 0
    %p440 = por %p438, %p439
    %p441 = scmp.le.s32.totalorder 1, %s24
    %p442 = scmp.lt.s32.totalorder %s24, 3
    %p443 = pnand %p441, %p442
    %p444 = pneg %p443
    // Predicated region
    $region9: #{cspstage_rtm_forward.1} parent=5 // pred_check
      _
    $region10: #{cspstage_rtm_forward.1} parent=5 // pred_check_branch
      %446 = sbr.rel (%p443) target = $region12
    $region11: #{cspstage_rtm_forward.1} parent=5 // pred_region
      %s447 = ssub.s32 %s24, 1
      // Predicated region
      $region13: #{cspstage_rtm_forward.1} parent=11 // pred_check
        %p448 = pneg %p71
      $region14: #{cspstage_rtm_forward.1} parent=11 // pred_check_branch
        %450 = sbr.rel (%p448) target = $region16
      $region15: #{cspstage_rtm_forward.1} parent=11 // pred_region
        _
      $region16: #{cspstage_rtm_forward.1} parent=11 // pred_fallthru
        _
      // Predicated region
      $region17: #{cspstage_rtm_forward.1} parent=11 // pred_check
        %p451 = pneg %p92
      $region18: #{cspstage_rtm_forward.1} parent=11 // pred_check_branch
        %453 = sbr.rel (%p451) target = $region20
      $region19: #{cspstage_rtm_forward.1} parent=11 // pred_region
        _
      $region20: #{cspstage_rtm_forward.1} parent=11 // pred_fallthru
        _
      // Predicated region
      $region21: #{cspstage_rtm_forward.1} parent=11 // pred_check
        %p454 = pneg %p113
      $region22: #{cspstage_rtm_forward.1} parent=11 // pred_check_branch
        %456 = sbr.rel (%p454) target = $region24
      $region23: #{cspstage_rtm_forward.1} parent=11 // pred_region
        _
      $region24: #{cspstage_rtm_forward.1} parent=11 // pred_fallthru
        _
      // Predicated region
      $region25: #{cspstage_rtm_forward.1} parent=11 // pred_check
        %p457 = pneg %p134
      $region26: #{cspstage_rtm_forward.1} parent=11 // pred_check_branch
        %459 = sbr.rel (%p457) target = $region28
      $region27: #{cspstage_rtm_forward.1} parent=11 // pred_region
        _
      $region28: #{cspstage_rtm_forward.1} parent=11 // pred_fallthru
        _
      // Predicated region
      $region29: #{cspstage_rtm_forward.1} parent=11 // pred_check
        %p460 = pneg %p155
      $region30: #{cspstage_rtm_forward.1} parent=11 // pred_check_branch
        %462 = sbr.rel (%p460) target = $region32
      $region31: #{cspstage_rtm_forward.1} parent=11 // pred_region
        _
      $region32: #{cspstage_rtm_forward.1} parent=11 // pred_fallthru
        _
      // Predicated region
      $region33: #{cspstage_rtm_forward.1} parent=11 // pred_check
        %p463 = pneg %p176
      $region34: #{cspstage_rtm_forward.1} parent=11 // pred_check_branch
        %465 = sbr.rel (%p463) target = $region36
      $region35: #{cspstage_rtm_forward.1} parent=11 // pred_region
        _
      $region36: #{cspstage_rtm_forward.1} parent=11 // pred_fallthru
        _
      // Predicated region
      $region37: #{cspstage_rtm_forward.1} parent=11 // pred_check
        %p466 = pneg %p197
      $region38: #{cspstage_rtm_forward.1} parent=11 // pred_check_branch
        %468 = sbr.rel (%p466) target = $region40
      $region39: #{cspstage_rtm_forward.1} parent=11 // pred_region
        _
      $region40: #{cspstage_rtm_forward.1} parent=11 // pred_fallthru
        _
      // Predicated region
      $region41: #{cspstage_rtm_forward.1} parent=11 // pred_check
        %p469 = pneg %p218
      $region42: #{cspstage_rtm_forward.1} parent=11 // pred_check_branch
        %471 = sbr.rel (%p469) target = $region44
      $region43: #{cspstage_rtm_forward.1} parent=11 // pred_region
        _
      $region44: #{cspstage_rtm_forward.1} parent=11 // pred_fallthru
        _
      // Predicated region
      $region45: #{cspstage_rtm_forward.1} parent=11 // pred_check
        %p472 = pneg %p239
      $region46: #{cspstage_rtm_forward.1} parent=11 // pred_check_branch
        %474 = sbr.rel (%p472) target = $region48
      $region47: #{cspstage_rtm_forward.1} parent=11 // pred_region
        _
      $region48: #{cspstage_rtm_forward.1} parent=11 // pred_fallthru
        _
      // Predicated region
      $region49: #{cspstage_rtm_forward.1} parent=11 // pred_check
        %p475 = pneg %p260
      $region50: #{cspstage_rtm_forward.1} parent=11 // pred_check_branch
        %477 = sbr.rel (%p475) target = $region52
      $region51: #{cspstage_rtm_forward.1} parent=11 // pred_region
        _
      $region52: #{cspstage_rtm_forward.1} parent=11 // pred_fallthru
        _
      // Predicated region
      $region53: #{cspstage_rtm_forward.1} parent=11 // pred_check
        %p478 = pneg %p281
      $region54: #{cspstage_rtm_forward.1} parent=11 // pred_check_branch
        %480 = sbr.rel (%p478) target = $region56
      $region55: #{cspstage_rtm_forward.1} parent=11 // pred_region
        _
      $region56: #{cspstage_rtm_forward.1} parent=11 // pred_fallthru
        _
      // Predicated region
      $region57: #{cspstage_rtm_forward.1} parent=11 // pred_check
        %p481 = pneg %p302
      $region58: #{cspstage_rtm_forward.1} parent=11 // pred_check_branch
        %483 = sbr.rel (%p481) target = $region60
      $region59: #{cspstage_rtm_forward.1} parent=11 // pred_region
        _
      $region60: #{cspstage_rtm_forward.1} parent=11 // pred_fallthru
        _
      // Predicated region
      $region61: #{cspstage_rtm_forward.1} parent=11 // pred_check
        %p484 = pneg %p323
      $region62: #{cspstage_rtm_forward.1} parent=11 // pred_check_branch
        %486 = sbr.rel (%p484) target = $region64
      $region63: #{cspstage_rtm_forward.1} parent=11 // pred_region
        _
      $region64: #{cspstage_rtm_forward.1} parent=11 // pred_fallthru
        _
      // Predicated region
      $region65: #{cspstage_rtm_forward.1} parent=11 // pred_check
        %p487 = pneg %p344
      $region66: #{cspstage_rtm_forward.1} parent=11 // pred_check_branch
        %489 = sbr.rel (%p487) target = $region68
      $region67: #{cspstage_rtm_forward.1} parent=11 // pred_region
        _
      $region68: #{cspstage_rtm_forward.1} parent=11 // pred_fallthru
        _
      // Predicated region
      $region69: #{cspstage_rtm_forward.1} parent=11 // pred_check
        %p490 = pneg %p365
      $region70: #{cspstage_rtm_forward.1} parent=11 // pred_check_branch
        %492 = sbr.rel (%p490) target = $region72
      $region71: #{cspstage_rtm_forward.1} parent=11 // pred_region
        _
      $region72: #{cspstage_rtm_forward.1} parent=11 // pred_fallthru
        _
      // Predicated region
      $region73: #{cspstage_rtm_forward.1} parent=11 // pred_check
        %p493 = pneg %p386
      $region74: #{cspstage_rtm_forward.1} parent=11 // pred_check_branch
        %495 = sbr.rel (%p493) target = $region76
      $region75: #{cspstage_rtm_forward.1} parent=11 // pred_region
        _
      $region76: #{cspstage_rtm_forward.1} parent=11 // pred_fallthru
        _
      // Predicated region
      $region77: #{cspstage_rtm_forward.1} parent=11 // pred_check
        %p496 = pneg %p407
      $region78: #{cspstage_rtm_forward.1} parent=11 // pred_check_branch
        %498 = sbr.rel (%p496) target = $region80
      $region79: #{cspstage_rtm_forward.1} parent=11 // pred_region
        _
      $region80: #{cspstage_rtm_forward.1} parent=11 // pred_fallthru
        _
    $region12: #{cspstage_rtm_forward.1} parent=5 // pred_fallthru
      _
    %p499 = scmp.lt.s32.totalorder %s24, 2
    // Predicated region
    $region81: #{cspstage_rtm_forward.1} parent=5 // pred_check
      %p500 = pneg %p499
    $region82: #{cspstage_rtm_forward.1} parent=5 // pred_check_branch
      %502 = sbr.rel (%p500) target = $region84
    $region83: #{cspstage_rtm_forward.1} parent=5 // pred_region
      // Predicated region
      $region85: #{cspstage_rtm_forward.1} parent=83 // pred_check
        %p503 = pneg %p44
      $region86: #{cspstage_rtm_forward.1} parent=83 // pred_check_branch
        %505 = sbr.rel (%p503) target = $region88
      $region87: #{cspstage_rtm_forward.1} parent=83 // pred_region
        %p506 = scmp.lt.s32.totalorder %s24, 1
        %s507 = scalar_select %p506, %s24, 1
        %s508 = smul.addr %s507, 4
        %s509 = smul.addr %s508, 8
        %s510 = scalar_lea.vmem %s0, %s509
      $region88: #{cspstage_rtm_forward.1} parent=83 // pred_fallthru
        _
    $region84: #{cspstage_rtm_forward.1} parent=5 // pred_fallthru
      _
    %p511 = scmp.le.s32.totalorder 1, %s24
    %p512 = scmp.lt.s32.totalorder %s24, 3
    %p513 = pnand %p511, %p512
    %p514 = pneg %p513
    // Predicated region
    $region89: #{cspstage_rtm_forward.1} parent=5 // pred_check
      _
    $region90: #{cspstage_rtm_forward.1} parent=5 // pred_check_branch
      %516 = sbr.rel (%p513) target = $region92
    $region91: #{cspstage_rtm_forward.1} parent=5 // pred_region
      %s517 = ssub.s32 %s24, 1
      %p518 = scmp.lt.s32.totalorder %s29, 1
      %s519 = scalar_select %p518, %s29, 1
      %s520 = smul.addr %s519, 4
      %s521 = smul.addr %s520, 8
      %s522 = scalar_lea.vmem %s0, %s521
      %p523 = pneg %p50
      %p524 = pneg %p47
      %p525 = pneg %p71
      %p526 = pneg %p68
      %p527 = pneg %p92
      %p528 = pneg %p89
      %p529 = pneg %p113
      %p530 = pneg %p110
      %p531 = pneg %p134
      %p532 = pneg %p131
      %p533 = pneg %p155
      %p534 = pneg %p152
      %p535 = pneg %p176
      %p536 = pneg %p173
      %p537 = pneg %p197
      %p538 = pneg %p194
      %p539 = pneg %p218
      %p540 = pneg %p215
      %p541 = pneg %p239
      %p542 = pneg %p236
      %p543 = pneg %p260
      %p544 = pneg %p257
      %p545 = pneg %p281
      %p546 = pneg %p278
      %p547 = pneg %p302
      %p548 = pneg %p299
      %p549 = pneg %p323
      %p550 = pneg %p320
      %p551 = pneg %p344
      %p552 = pneg %p341
      %p553 = pneg %p365
      %p554 = pneg %p362
      %p555 = pneg %p386
      %p556 = pneg %p383
      %p557 = pneg %p407
      %p558 = pneg %p404
      %p559 = pneg %p433
      %p560 = pneg %p430
      %p561 = scmp.lt.s32.totalorder %s29, 1
      %s562 = scalar_select %p561, %s29, 1
      %s563 = smul.addr %s562, 8
      %s564 = smul.addr %s563, 8
      %s565 = scalar_lea.vmem %s18, %s564
      %p566 = scmp.lt.s32.totalorder %s29, 1
      %s567 = scalar_select %p566, %s29, 1
      %s568 = smul.addr %s567, 4
      %s569 = smul.addr %s568, 8
      %s570 = scalar_lea.vmem %s0, %s569
      %p571 = scmp.lt.s32.totalorder %s29, 1
      %s572 = scalar_select %p571, %s29, 1
      %s573 = smul.addr %s572, 8
      %s574 = smul.addr %s573, 8
      %s575 = scalar_lea.vmem %s18, %s574
      %576 = vst [vmem:[#allocation2] sm:$0xff] 0.0
      %577 = vst [vmem:[#allocation2 + $0x20] sm:$0xff] 0.0
      %578 = vst [vmem:[#allocation2 + $0x40] sm:$0xff] 0.0
      %579 = vst [vmem:[#allocation2 + $0x60] sm:$0xff] 0.0
      %580 = vst [vmem:[#allocation2 + $0x80] sm:$0xff] 0.0
      %581 = vst [vmem:[#allocation2 + $0xa0] sm:$0xff] 0.0
      %582 = vst [vmem:[#allocation2 + $0xc0] sm:$0xff] 0.0
      %583 = vst [vmem:[#allocation2 + $0xe0] sm:$0xff] 0.0
      %584 = vst [vmem:[#allocation2 + $0x100] sm:$0xff] 0.0
      %585 = vst [vmem:[#allocation2 + $0x120] sm:$0xff] 0.0
      %586 = vst [vmem:[#allocation2 + $0x18] sm:$0xff] 0.0
      %587 = vst [vmem:[#allocation2 + $0x38] sm:$0xff] 0.0
      %588 = vst [vmem:[#allocation2 + $0x58] sm:$0xff] 0.0
      %589 = vst [vmem:[#allocation2 + $0x78] sm:$0xff] 0.0
      %590 = vst [vmem:[#allocation2 + $0x98] sm:$0xff] 0.0
      %591 = vst [vmem:[#allocation2 + $0xb8] sm:$0xff] 0.0
      %592 = vst [vmem:[#allocation2 + $0xd8] sm:$0xff] 0.0
      %593 = vst [vmem:[#allocation2 + $0xf8] sm:$0xff] 0.0
      %594 = vst [vmem:[#allocation2 + $0x118] sm:$0xff] 0.0
      %595 = vst [vmem:[#allocation2 + $0x138] sm:$0xff] 0.0
      %v596 = vld [vmem:[%s570] sm:$0xff]
      %v597 = vld [vmem:[%s570 + $0x8] sm:$0xff]
      %v598 = vld [vmem:[%s570 + $0x10] sm:$0xff]
      %v599 = vld [vmem:[%s570 + $0x18] sm:$0xff]
      %v600 = vld [vmem:[%s2] sm:$0xff]
      %v601 = vld [vmem:[%s2 + $0x8] sm:$0xff]
      %v602 = vld [vmem:[%s2 + $0x10] sm:$0xff]
      %v603 = vld [vmem:[%s2 + $0x18] sm:$0xff]
      %v604 = vld [vmem:[%s3] sm:$0xff]
      %v605 = vld [vmem:[%s3 + $0x8] sm:$0xff]
      %v606 = vld [vmem:[%s3 + $0x10] sm:$0xff]
      %v607 = vld [vmem:[%s3 + $0x18] sm:$0xff]
      %609 = vset.pattern.permute.xlu0 0
      %610 = vperm.xlu0 %609, %v604
      %v611 = vpop.permute.xlu0 %610
      %614 = vset.pattern.permute.xlu0 0
      %615 = vperm.xlu0 %614, %v605
      %v616 = vpop.permute.xlu0 %615
      %619 = vset.pattern.permute.xlu0 0
      %620 = vperm.xlu0 %619, %v606
      %v621 = vpop.permute.xlu0 %620
      %624 = vset.pattern.permute.xlu0 0
      %625 = vperm.xlu0 %624, %v607
      %v626 = vpop.permute.xlu0 %625
      %vm628 = vcmask 130048
      %v630 = vsel %vm628, %v600, 0
      %v633 = vsel %vm628, %v601, 0
      %v636 = vsel %vm628, %v602, 0
      %v639 = vsel %vm628, %v603, 0
      %641 = vmatprep.subr.mxu0 0.0
      %642 = vmatpush1.msra.mxu0 0.0
      %643 = vmatprep.subr.mxu0 0.0
      %644 = vmatpush1.msra.mxu0 0.0
      %645 = vmatprep.subr.mxu0 0.0
      %646 = vmatpush1.msra.mxu0 0.0
      %647 = vmatprep.subr.mxu0 0.0
      %648 = vmatpush1.msra.mxu0 0.0
      %649 = vmatprep.subr.mxu0 0.0
      %650 = vmatpush1.msra.mxu0 0.0
      %651 = vmatprep.subr.mxu0 0.0
      %652 = vmatpush1.msra.mxu0 0.0
      %653 = vmatprep.subr.mxu0 0.0
      %654 = vmatpush1.msra.mxu0 0.0
      %655 = vmatprep.subr.mxu0 0.0
      %656 = vmatpush1.msra.mxu0 0.0
      %657 = vmatprep.subr.mxu0 0.0
      %658 = vmatpush1.msra.mxu0 0.0
      %659 = vmatprep.subr.mxu0 0.0
      %660 = vmatpush1.msra.mxu0 0.0
      %661 = vmatprep.subr.mxu0 0.0
      %662 = vmatpush1.msra.mxu0 0.0
      %663 = vmatprep.subr.mxu0 0.0
      %664 = vmatpush1.msra.mxu0 0.0
      %665 = vmatprep.subr.mxu0 0.0
      %666 = vmatpush1.msra.mxu0 0.0
      %667 = vmatprep.subr.mxu0 0.0
      %668 = vmatpush1.msra.mxu0 0.0
      %669 = vmatprep.subr.mxu0 %v599
      %670 = vmatpush1.msra.mxu0 %v598
      %671 = vmatprep.subr.mxu0 %v597
      %672 = vmatpush1.msra.mxu0 %v596
      %673 = vmatprep.subr.mxu0 0.0
      %674 = vmatpush2.msra.mxu0 0.0
      %675 = vmatprep.subr.mxu0 0.0
      %676 = vmatpush2.msra.mxu0 0.0
      %677 = vmatprep.subr.mxu0 0.0
      %678 = vmatpush2.msra.mxu0 0.0
      %679 = vmatprep.subr.mxu0 0.0
      %680 = vmatpush2.msra.mxu0 0.0
      %681 = vmatprep.subr.mxu0 0.0
      %682 = vmatpush2.msra.mxu0 0.0
      %683 = vmatprep.subr.mxu0 0.0
      %684 = vmatpush2.msra.mxu0 0.0
      %685 = vmatprep.subr.mxu0 0.0
      %686 = vmatpush2.msra.mxu0 0.0
      %687 = vmatprep.subr.mxu0 0.0
      %688 = vmatpush2.msra.mxu0 0.0
      %689 = vmatprep.subr.mxu0 0.0
      %690 = vmatpush2.msra.mxu0 0.0
      %691 = vmatprep.subr.mxu0 0.0
      %692 = vmatpush2.msra.mxu0 0.0
      %693 = vmatprep.subr.mxu0 0.0
      %694 = vmatpush2.msra.mxu0 0.0
      %695 = vmatprep.subr.mxu0 0.0
      %696 = vmatpush2.msra.mxu0 0.0
      %697 = vmatprep.subr.mxu0 0.0
      %698 = vmatpush2.msra.mxu0 0.0
      %699 = vmatprep.subr.mxu0 0.0
      %700 = vmatpush2.msra.mxu0 0.0
      %701 = vmatprep.subr.mxu0 0.0
      %702 = vmatpush2.msra.mxu0 0.0
      %703 = vmatprep.subr.mxu0 0.0
      %704 = vmatpush2.msra.mxu0 0.0
      %705 = vmatprep.mubr.f32.mxu0 0.0
      %706 = vmatmul.mubr.f32.gmra.mxu0 %v630
      %v707 = vpop.f32.mrf.mxu0
      %v708 = vadd.f32 %v611, %v707
      %v709 = vpop.f32.mrf.mxu0
      %v710 = vadd.f32 %v611, %v709
      %711 = vmatprep.mubr.f32.mxu0 0.0
      %712 = vmatmul.mubr.f32.gmra.mxu0 %v633
      %v713 = vpop.f32.mrf.mxu0
      %v714 = vadd.f32 %v616, %v713
      %v715 = vpop.f32.mrf.mxu0
      %v716 = vadd.f32 %v616, %v715
      %717 = vmatprep.mubr.f32.mxu0 0.0
      %718 = vmatmul.mubr.f32.gmra.mxu0 %v636
      %v719 = vpop.f32.mrf.mxu0
      %v720 = vadd.f32 %v621, %v719
      %v721 = vpop.f32.mrf.mxu0
      %v722 = vadd.f32 %v621, %v721
      %723 = vmatprep.mubr.f32.mxu0 0.0
      %724 = vmatmul.mubr.f32.gmra.mxu0 %v639
      %v725 = vpop.f32.mrf.mxu0
      %v726 = vadd.f32 %v626, %v725
      %v727 = vpop.f32.mrf.mxu0
      %v728 = vadd.f32 %v626, %v727
      %729 = vdwg.mxu0
      %v730 = vxor.u32 %v708, 2147483648
      %v731 = vxor.u32 %v710, 2147483648
      %v732 = vxor.u32 %v714, 2147483648
      %v733 = vxor.u32 %v716, 2147483648
      %v734 = vxor.u32 %v720, 2147483648
      %v735 = vxor.u32 %v722, 2147483648
      %v736 = vxor.u32 %v726, 2147483648
      %v737 = vxor.u32 %v728, 2147483648
      %v738 = vmul.f32 %v730, 1.442695
      %v739 = vpow.pop %v738
      %v740 = vmul.f32 %v731, 1.442695
      %v741 = vpow.pop %v740
      %v742 = vmul.f32 %v732, 1.442695
      %v743 = vpow.pop %v742
      %v744 = vmul.f32 %v733, 1.442695
      %v745 = vpow.pop %v744
      %v746 = vmul.f32 %v734, 1.442695
      %v747 = vpow.pop %v746
      %v748 = vmul.f32 %v735, 1.442695
      %v749 = vpow.pop %v748
      %v750 = vmul.f32 %v736, 1.442695
      %v751 = vpow.pop %v750
      %v752 = vmul.f32 %v737, 1.442695
      %v753 = vpow.pop %v752
      %v754 = vadd.f32 %v739, 1.0
      %v755 = vadd.f32 %v741, 1.0
      %v756 = vadd.f32 %v743, 1.0
      %v757 = vadd.f32 %v745, 1.0
      %v758 = vadd.f32 %v747, 1.0
      %v759 = vadd.f32 %v749, 1.0
      %v760 = vadd.f32 %v751, 1.0
      %v761 = vadd.f32 %v753, 1.0
      %v762 = vrcp.pop %v754
      %v763 = vmul.f32 1.0, %v762
      %v764 = vrcp.pop %v755
      %v765 = vmul.f32 1.0, %v764
      %v766 = vrcp.pop %v756
      %v767 = vmul.f32 1.0, %v766
      %v768 = vrcp.pop %v757
      %v769 = vmul.f32 1.0, %v768
      %v770 = vrcp.pop %v758
      %v771 = vmul.f32 1.0, %v770
      %v772 = vrcp.pop %v759
      %v773 = vmul.f32 1.0, %v772
      %v774 = vrcp.pop %v760
      %v775 = vmul.f32 1.0, %v774
      %v776 = vrcp.pop %v761
      %v777 = vmul.f32 1.0, %v776
      %v778 = vmul.f32 %v708, %v763
      %v779 = vmul.f32 %v710, %v765
      %v780 = vmul.f32 %v714, %v767
      %v781 = vmul.f32 %v716, %v769
      %v782 = vmul.f32 %v720, %v771
      %v783 = vmul.f32 %v722, %v773
      %v784 = vmul.f32 %v726, %v775
      %v785 = vmul.f32 %v728, %v777
      %s786 = scalar_lea.vmem %s1, 6
      %v787 = vld [vmem:[%s786] sm:$0x3]
      %v789 = vlaneseq
      %v790 = vshrl.u32 %v789, 7
      %v791 = vsub.s32 0, %v790
      %v792 = vrot.slane %v787, %v791
      %v793 = vlaneseq
      %v794 = vshrl.u32 %v793, 7
      %v795 = vsub.s32 1, %v794
      %v796 = vrot.slane %v787, %v795
      %v799 = vmul.f32 %v782, %v792
      %v800 = vmul.f32 %v783, %v796
      %v801 = vmul.f32 %v784, %v792
      %v802 = vmul.f32 %v785, %v796
      %803 = vst [vmem:[#allocation2 + $0x48] sm:$0xff] %v799
      %804 = vst [vmem:[#allocation2 + $0x50] sm:$0xff] %v800
      %805 = vst [vmem:[#allocation2 + $0x68] sm:$0xff] %v801
      %806 = vst [vmem:[#allocation2 + $0x70] sm:$0xff] %v802
      %807 = vst [vmem:[#allocation2 + $0x88] sm:$0xff] %v782
      %808 = vst [vmem:[#allocation2 + $0x90] sm:$0xff] %v783
      %809 = vst [vmem:[#allocation2 + $0xa8] sm:$0xff] %v784
      %810 = vst [vmem:[#allocation2 + $0xb0] sm:$0xff] %v785
      %s811 = scalar_lea.vmem %s1, 2
      %v812 = vld [vmem:[%s811] sm:$0x3]
      %v814 = vlaneseq
      %v815 = vshrl.u32 %v814, 7
      %v816 = vsub.s32 0, %v815
      %v817 = vrot.slane %v812, %v816
      %v818 = vlaneseq
      %v819 = vshrl.u32 %v818, 7
      %v820 = vsub.s32 1, %v819
      %v821 = vrot.slane %v812, %v820
      %v824 = vmul.f32 %v782, %v817
      %v825 = vmul.f32 %v783, %v821
      %v826 = vmul.f32 %v784, %v817
      %v827 = vmul.f32 %v785, %v821
      %828 = vst [vmem:[#allocation2 + $0xc8] sm:$0xff] %v824
      %829 = vst [vmem:[#allocation2 + $0xd0] sm:$0xff] %v825
      %830 = vst [vmem:[#allocation2 + $0xe8] sm:$0xff] %v826
      %831 = vst [vmem:[#allocation2 + $0xf0] sm:$0xff] %v827
      %v832 = vld [vmem:[#allocation2 + $0x40] sm:$0xff]
      %v833 = vld [vmem:[#allocation2 + $0x48] sm:$0xff]
      %v834 = vld [vmem:[#allocation2 + $0x50] sm:$0xff]
      %v835 = vld [vmem:[#allocation2 + $0x60] sm:$0xff]
      %v836 = vld [vmem:[#allocation2 + $0x68] sm:$0xff]
      %v837 = vld [vmem:[#allocation2 + $0x70] sm:$0xff]
      %v838 = vld [vmem:[#allocation2 + $0x58] sm:$0xff]
      %v839 = vld [vmem:[#allocation2 + $0x78] sm:$0xff]
      %846 = vrot.lane.b32.xlu0 %v832, 112
      %v847 = vpop.permute.xlu0 %846
      %848 = vrot.lane.b32.xlu0 %v833, 112
      %v849 = vpop.permute.xlu0 %848
      %850 = vrot.lane.b32.xlu0 %v834, 112
      %v851 = vpop.permute.xlu0 %850
      %852 = vrot.lane.b32.xlu0 %v835, 112
      %v853 = vpop.permute.xlu0 %852
      %854 = vrot.lane.b32.xlu0 %v836, 112
      %v855 = vpop.permute.xlu0 %854
      %856 = vrot.lane.b32.xlu0 %v837, 112
      %v857 = vpop.permute.xlu0 %856
      %vm858 = vcmask 916480
      %v859 = vsel %vm858, %v847, %v849
      %v860 = vsel %vm858, %v849, %v851
      %v861 = vsel %vm858, %v853, %v855
      %v862 = vsel %vm858, %v855, %v857
      %865 = vrot.lane.b32.xlu0 %v833, 96
      %v866 = vpop.permute.xlu0 %865
      %867 = vrot.lane.b32.xlu0 %v834, 96
      %v868 = vpop.permute.xlu0 %867
      %869 = vrot.lane.b32.xlu0 %v838, 96
      %v870 = vpop.permute.xlu0 %869
      %871 = vrot.lane.b32.xlu0 %v836, 96
      %v872 = vpop.permute.xlu0 %871
      %873 = vrot.lane.b32.xlu0 %v837, 96
      %v874 = vpop.permute.xlu0 %873
      %875 = vrot.lane.b32.xlu0 %v839, 96
      %v876 = vpop.permute.xlu0 %875
      %vm877 = vcmask 785408
      %v878 = vsel %vm877, %v866, %v868
      %v879 = vsel %vm877, %v868, %v870
      %v880 = vsel %vm877, %v872, %v874
      %v881 = vsel %vm877, %v874, %v876
      %v882 = vld [vmem:[%s4] sm:$0xff]
      %v883 = vld [vmem:[%s4 + $0x8] sm:$0xff]
      %v884 = vld [vmem:[#allocation2 + $0x80] sm:$0xff]
      %v885 = vld [vmem:[#allocation2 + $0x88] sm:$0xff]
      %v886 = vld [vmem:[#allocation2 + $0x90] sm:$0xff]
      %v887 = vld [vmem:[#allocation2 + $0xa0] sm:$0xff]
      %v888 = vld [vmem:[#allocation2 + $0xa8] sm:$0xff]
      %v889 = vld [vmem:[#allocation2 + $0xb0] sm:$0xff]
      %v890 = vld [vmem:[#allocation2 + $0x98] sm:$0xff]
      %v891 = vld [vmem:[#allocation2 + $0xb8] sm:$0xff]
      %896 = vrot.lane.b32.xlu0 %v885, 112
      %v897 = vpop.permute.xlu0 %896
      %898 = vrot.lane.b32.xlu0 %v886, 112
      %v899 = vpop.permute.xlu0 %898
      %900 = vrot.lane.b32.xlu0 %v888, 112
      %v901 = vpop.permute.xlu0 %900
      %902 = vrot.lane.b32.xlu0 %v889, 112
      %v903 = vpop.permute.xlu0 %902
      %v904 = vsel %vm858, %v897, %v899
      %v905 = vsel %vm858, %v901, %v903
      %908 = vrot.lane.b32.xlu0 %v885, 96
      %v909 = vpop.permute.xlu0 %908
      %910 = vrot.lane.b32.xlu0 %v886, 96
      %v911 = vpop.permute.xlu0 %910
      %912 = vrot.lane.b32.xlu0 %v890, 96
      %v913 = vpop.permute.xlu0 %912
      %914 = vrot.lane.b32.xlu0 %v888, 96
      %v915 = vpop.permute.xlu0 %914
      %916 = vrot.lane.b32.xlu0 %v889, 96
      %v917 = vpop.permute.xlu0 %916
      %918 = vrot.lane.b32.xlu0 %v891, 96
      %v919 = vpop.permute.xlu0 %918
      %v920 = vsel %vm877, %v909, %v911
      %v921 = vsel %vm877, %v911, %v913
      %v922 = vsel %vm877, %v915, %v917
      %v923 = vsel %vm877, %v917, %v919
      %s924 = scalar_lea.vmem %s4, 16
      %v925 = vld [vmem:[%s924] sm:$0xff]
      %v926 = vld [vmem:[%s924 + $0x8] sm:$0xff]
      %929 = vrot.lane.b32.xlu0 %v884, 16
      %v930 = vpop.permute.xlu0 %929
      %931 = vrot.lane.b32.xlu0 %v885, 16
      %v932 = vpop.permute.xlu0 %931
      %933 = vrot.lane.b32.xlu0 %v886, 16
      %v934 = vpop.permute.xlu0 %933
      %935 = vrot.lane.b32.xlu0 %v887, 16
      %v936 = vpop.permute.xlu0 %935
      %937 = vrot.lane.b32.xlu0 %v888, 16
      %v938 = vpop.permute.xlu0 %937
      %939 = vrot.lane.b32.xlu0 %v889, 16
      %v940 = vpop.permute.xlu0 %939
      %941 = vrot.lane.b32.xlu0 %v897, 16
      %v942 = vpop.permute.xlu0 %941
      %943 = vrot.lane.b32.xlu0 %v904, 16
      %v944 = vpop.permute.xlu0 %943
      %945 = vrot.lane.b32.xlu0 %v899, 16
      %v946 = vpop.permute.xlu0 %945
      %947 = vrot.lane.b32.xlu0 %v901, 16
      %v948 = vpop.permute.xlu0 %947
      %949 = vrot.lane.b32.xlu0 %v905, 16
      %v950 = vpop.permute.xlu0 %949
      %951 = vrot.lane.b32.xlu0 %v903, 16
      %v952 = vpop.permute.xlu0 %951
      %953 = vrot.lane.b32.xlu0 %v909, 16
      %v954 = vpop.permute.xlu0 %953
      %955 = vrot.lane.b32.xlu0 %v920, 16
      %v956 = vpop.permute.xlu0 %955
      %957 = vrot.lane.b32.xlu0 %v921, 16
      %v958 = vpop.permute.xlu0 %957
      %959 = vrot.lane.b32.xlu0 %v915, 16
      %v960 = vpop.permute.xlu0 %959
      %961 = vrot.lane.b32.xlu0 %v922, 16
      %v962 = vpop.permute.xlu0 %961
      %963 = vrot.lane.b32.xlu0 %v923, 16
      %v964 = vpop.permute.xlu0 %963
      %v965 = vsel %vm628, %v930, %v932
      %v966 = vsel %vm628, %v932, %v934
      %v967 = vsel %vm628, %v936, %v938
      %v968 = vsel %vm628, %v938, %v940
      %v969 = vsel %vm628, %v942, %v944
      %v970 = vsel %vm628, %v944, %v946
      %v971 = vsel %vm628, %v948, %v950
      %v972 = vsel %vm628, %v950, %v952
      %v973 = vsel %vm628, %v954, %v956
      %v974 = vsel %vm628, %v956, %v958
      %v975 = vsel %vm628, %v960, %v962
      %v976 = vsel %vm628, %v962, %v964
      %vm989 = vcmask 392192
      %v991 = vsel %vm989, %v925, 0
      %v994 = vsel %vm989, %v926, 0
      %996 = vmatprep.subr.mxu0 0.0
      %997 = vmatpush1.msra.mxu0 0.0
      %998 = vmatprep.subr.mxu0 0.0
      %999 = vmatpush1.msra.mxu0 0.0
      %1000 = vmatprep.subr.mxu0 0.0
      %1001 = vmatpush1.msra.mxu0 0.0
      %1002 = vmatprep.subr.mxu0 0.0
      %1003 = vmatpush1.msra.mxu0 0.0
      %1004 = vmatprep.subr.mxu0 0.0
      %1005 = vmatpush1.msra.mxu0 0.0
      %1006 = vmatprep.subr.mxu0 0.0
      %1007 = vmatpush1.msra.mxu0 0.0
      %1008 = vmatprep.subr.mxu0 0.0
      %1009 = vmatpush1.msra.mxu0 0.0
      %1010 = vmatprep.subr.mxu0 0.0
      %1011 = vmatpush1.msra.mxu0 0.0
      %1012 = vmatprep.subr.mxu0 0.0
      %1013 = vmatpush1.msra.mxu0 0.0
      %1014 = vmatprep.subr.mxu0 0.0
      %1015 = vmatpush1.msra.mxu0 0.0
      %1016 = vmatprep.subr.mxu0 %v976
      %1017 = vmatpush1.msra.mxu0 %v975
      %1018 = vmatprep.subr.mxu0 %v974
      %1019 = vmatpush1.msra.mxu0 %v973
      %1020 = vmatprep.subr.mxu0 %v972
      %1021 = vmatpush1.msra.mxu0 %v971
      %1022 = vmatprep.subr.mxu0 %v970
      %1023 = vmatpush1.msra.mxu0 %v969
      %1024 = vmatprep.subr.mxu0 %v968
      %1025 = vmatpush1.msra.mxu0 %v967
      %1026 = vmatprep.subr.mxu0 %v966
      %1027 = vmatpush1.msra.mxu0 %v965
      %1028 = vmatprep.subr.mxu0 0.0
      %1029 = vmatpush2.msra.mxu0 0.0
      %1030 = vmatprep.subr.mxu0 0.0
      %1031 = vmatpush2.msra.mxu0 0.0
      %1032 = vmatprep.subr.mxu0 0.0
      %1033 = vmatpush2.msra.mxu0 0.0
      %1034 = vmatprep.subr.mxu0 0.0
      %1035 = vmatpush2.msra.mxu0 0.0
      %1036 = vmatprep.subr.mxu0 0.0
      %1037 = vmatpush2.msra.mxu0 0.0
      %1038 = vmatprep.subr.mxu0 0.0
      %1039 = vmatpush2.msra.mxu0 0.0
      %1040 = vmatprep.subr.mxu0 0.0
      %1041 = vmatpush2.msra.mxu0 0.0
      %1042 = vmatprep.subr.mxu0 0.0
      %1043 = vmatpush2.msra.mxu0 0.0
      %1044 = vmatprep.subr.mxu0 0.0
      %1045 = vmatpush2.msra.mxu0 0.0
      %1046 = vmatprep.subr.mxu0 0.0
      %1047 = vmatpush2.msra.mxu0 0.0
      %1048 = vmatprep.subr.mxu0 0.0
      %1049 = vmatpush2.msra.mxu0 0.0
      %1050 = vmatprep.subr.mxu0 0.0
      %1051 = vmatpush2.msra.mxu0 0.0
      %1052 = vmatprep.subr.mxu0 0.0
      %1053 = vmatpush2.msra.mxu0 0.0
      %1054 = vmatprep.subr.mxu0 0.0
      %1055 = vmatpush2.msra.mxu0 0.0
      %1056 = vmatprep.subr.mxu0 0.0
      %1057 = vmatpush2.msra.mxu0 0.0
      %1058 = vmatprep.subr.mxu0 0.0
      %1059 = vmatpush2.msra.mxu0 0.0
      %1060 = vmatprep.mubr.f32.mxu0 0.0
      %1061 = vmatmul.mubr.f32.gmra.mxu0 %v991
      %v1062 = vpop.f32.mrf.mxu0
      %v1063 = vadd.f32 0.0, %v1062
      %v1064 = vpop.f32.mrf.mxu0
      %v1065 = vadd.f32 0.0, %v1064
      %1066 = vmatprep.mubr.f32.mxu0 0.0
      %1067 = vmatmul.mubr.f32.gmra.mxu0 %v994
      %v1068 = vpop.f32.mrf.mxu0
      %v1069 = vadd.f32 0.0, %v1068
      %v1070 = vpop.f32.mrf.mxu0
      %v1071 = vadd.f32 0.0, %v1070
      %1072 = vdwg.mxu0
      %1073 = vrot.lane.b32.xlu0 %v832, 17
      %v1074 = vpop.permute.xlu0 %1073
      %1075 = vrot.lane.b32.xlu0 %v833, 17
      %v1076 = vpop.permute.xlu0 %1075
      %1077 = vrot.lane.b32.xlu0 %v834, 17
      %v1078 = vpop.permute.xlu0 %1077
      %1079 = vrot.lane.b32.xlu0 %v835, 17
      %v1080 = vpop.permute.xlu0 %1079
      %1081 = vrot.lane.b32.xlu0 %v836, 17
      %v1082 = vpop.permute.xlu0 %1081
      %1083 = vrot.lane.b32.xlu0 %v837, 17
      %v1084 = vpop.permute.xlu0 %1083
      %1085 = vrot.lane.b32.xlu0 %v859, 17
      %v1086 = vpop.permute.xlu0 %1085
      %1087 = vrot.lane.b32.xlu0 %v860, 17
      %v1088 = vpop.permute.xlu0 %1087
      %1089 = vrot.lane.b32.xlu0 %v851, 17
      %v1090 = vpop.permute.xlu0 %1089
      %1091 = vrot.lane.b32.xlu0 %v861, 17
      %v1092 = vpop.permute.xlu0 %1091
      %1093 = vrot.lane.b32.xlu0 %v862, 17
      %v1094 = vpop.permute.xlu0 %1093
      %1095 = vrot.lane.b32.xlu0 %v857, 17
      %v1096 = vpop.permute.xlu0 %1095
      %1097 = vrot.lane.b32.xlu0 %v866, 17
      %v1098 = vpop.permute.xlu0 %1097
      %1099 = vrot.lane.b32.xlu0 %v878, 17
      %v1100 = vpop.permute.xlu0 %1099
      %1101 = vrot.lane.b32.xlu0 %v879, 17
      %v1102 = vpop.permute.xlu0 %1101
      %1103 = vrot.lane.b32.xlu0 %v872, 17
      %v1104 = vpop.permute.xlu0 %1103
      %1105 = vrot.lane.b32.xlu0 %v880, 17
      %v1106 = vpop.permute.xlu0 %1105
      %1107 = vrot.lane.b32.xlu0 %v881, 17
      %v1108 = vpop.permute.xlu0 %1107
      %vm1109 = vcmask 138240
      %v1110 = vsel %vm1109, %v1074, %v1076
      %v1111 = vsel %vm1109, %v1076, %v1078
      %v1112 = vsel %vm1109, %v1080, %v1082
      %v1113 = vsel %vm1109, %v1082, %v1084
      %v1114 = vsel %vm1109, %v1086, %v1088
      %v1115 = vsel %vm1109, %v1088, %v1090
      %v1116 = vsel %vm1109, %v1092, %v1094
      %v1117 = vsel %vm1109, %v1094, %v1096
      %v1118 = vsel %vm1109, %v1098, %v1100
      %v1119 = vsel %vm1109, %v1100, %v1102
      %v1120 = vsel %vm1109, %v1104, %v1106
      %v1121 = vsel %vm1109, %v1106, %v1108
      %v1135 = vsel %vm989, %v882, 0
      %v1138 = vsel %vm989, %v883, 0
      %1140 = vmatprep.subr.mxu0 0.0
      %1141 = vmatpush1.msra.mxu0 0.0
      %1142 = vmatprep.subr.mxu0 0.0
      %1143 = vmatpush1.msra.mxu0 0.0
      %1144 = vmatprep.subr.mxu0 0.0
      %1145 = vmatpush1.msra.mxu0 0.0
      %1146 = vmatprep.subr.mxu0 0.0
      %1147 = vmatpush1.msra.mxu0 0.0
      %1148 = vmatprep.subr.mxu0 0.0
      %1149 = vmatpush1.msra.mxu0 0.0
      %1150 = vmatprep.subr.mxu0 0.0
      %1151 = vmatpush1.msra.mxu0 0.0
      %1152 = vmatprep.subr.mxu0 0.0
      %1153 = vmatpush1.msra.mxu0 0.0
      %1154 = vmatprep.subr.mxu0 0.0
      %1155 = vmatpush1.msra.mxu0 0.0
      %1156 = vmatprep.subr.mxu0 0.0
      %1157 = vmatpush1.msra.mxu0 0.0
      %1158 = vmatprep.subr.mxu0 0.0
      %1159 = vmatpush1.msra.mxu0 0.0
      %1160 = vmatprep.subr.mxu0 %v1121
      %1161 = vmatpush1.msra.mxu0 %v1120
      %1162 = vmatprep.subr.mxu0 %v1119
      %1163 = vmatpush1.msra.mxu0 %v1118
      %1164 = vmatprep.subr.mxu0 %v1117
      %1165 = vmatpush1.msra.mxu0 %v1116
      %1166 = vmatprep.subr.mxu0 %v1115
      %1167 = vmatpush1.msra.mxu0 %v1114
      %1168 = vmatprep.subr.mxu0 %v1113
      %1169 = vmatpush1.msra.mxu0 %v1112
      %1170 = vmatprep.subr.mxu0 %v1111
      %1171 = vmatpush1.msra.mxu0 %v1110
      %1172 = vmatprep.subr.mxu0 0.0
      %1173 = vmatpush2.msra.mxu0 0.0
      %1174 = vmatprep.subr.mxu0 0.0
      %1175 = vmatpush2.msra.mxu0 0.0
      %1176 = vmatprep.subr.mxu0 0.0
      %1177 = vmatpush2.msra.mxu0 0.0
      %1178 = vmatprep.subr.mxu0 0.0
      %1179 = vmatpush2.msra.mxu0 0.0
      %1180 = vmatprep.subr.mxu0 0.0
      %1181 = vmatpush2.msra.mxu0 0.0
      %1182 = vmatprep.subr.mxu0 0.0
      %1183 = vmatpush2.msra.mxu0 0.0
      %1184 = vmatprep.subr.mxu0 0.0
      %1185 = vmatpush2.msra.mxu0 0.0
      %1186 = vmatprep.subr.mxu0 0.0
      %1187 = vmatpush2.msra.mxu0 0.0
      %1188 = vmatprep.subr.mxu0 0.0
      %1189 = vmatpush2.msra.mxu0 0.0
      %1190 = vmatprep.subr.mxu0 0.0
      %1191 = vmatpush2.msra.mxu0 0.0
      %1192 = vmatprep.subr.mxu0 0.0
      %1193 = vmatpush2.msra.mxu0 0.0
      %1194 = vmatprep.subr.mxu0 0.0
      %1195 = vmatpush2.msra.mxu0 0.0
      %1196 = vmatprep.subr.mxu0 0.0
      %1197 = vmatpush2.msra.mxu0 0.0
      %1198 = vmatprep.subr.mxu0 0.0
      %1199 = vmatpush2.msra.mxu0 0.0
      %1200 = vmatprep.subr.mxu0 0.0
      %1201 = vmatpush2.msra.mxu0 0.0
      %1202 = vmatprep.subr.mxu0 0.0
      %1203 = vmatpush2.msra.mxu0 0.0
      %1204 = vmatprep.mubr.f32.mxu0 0.0
      %1205 = vmatmul.mubr.f32.gmra.mxu0 %v1135
      %v1206 = vpop.f32.mrf.mxu0
      %v1207 = vadd.f32 %v1063, %v1206
      %v1208 = vpop.f32.mrf.mxu0
      %v1209 = vadd.f32 %v1065, %v1208
      %1210 = vmatprep.mubr.f32.mxu0 0.0
      %1211 = vmatmul.mubr.f32.gmra.mxu0 %v1138
      %v1212 = vpop.f32.mrf.mxu0
      %v1213 = vadd.f32 %v1069, %v1212
      %v1214 = vpop.f32.mrf.mxu0
      %v1215 = vadd.f32 %v1071, %v1214
      %1216 = vdwg.mxu0
      %v1217 = vld [vmem:[#allocation2 + $0xc0] sm:$0xff]
      %v1218 = vld [vmem:[#allocation2 + $0xc8] sm:$0xff]
      %v1219 = vld [vmem:[#allocation2 + $0xd0] sm:$0xff]
      %v1220 = vld [vmem:[#allocation2 + $0xe0] sm:$0xff]
      %v1221 = vld [vmem:[#allocation2 + $0xe8] sm:$0xff]
      %v1222 = vld [vmem:[#allocation2 + $0xf0] sm:$0xff]
      %v1223 = vld [vmem:[#allocation2 + $0xd8] sm:$0xff]
      %v1224 = vld [vmem:[#allocation2 + $0xf8] sm:$0xff]
      %1231 = vrot.lane.b32.xlu0 %v1218, 112
      %v1232 = vpop.permute.xlu0 %1231
      %1233 = vrot.lane.b32.xlu0 %v1219, 112
      %v1234 = vpop.permute.xlu0 %1233
      %1235 = vrot.lane.b32.xlu0 %v1223, 112
      %v1236 = vpop.permute.xlu0 %1235
      %1237 = vrot.lane.b32.xlu0 %v1221, 112
      %v1238 = vpop.permute.xlu0 %1237
      %1239 = vrot.lane.b32.xlu0 %v1222, 112
      %v1240 = vpop.permute.xlu0 %1239
      %1241 = vrot.lane.b32.xlu0 %v1224, 112
      %v1242 = vpop.permute.xlu0 %1241
      %v1243 = vsel %vm858, %v1232, %v1234
      %v1244 = vsel %vm858, %v1234, %v1236
      %v1245 = vsel %vm858, %v1238, %v1240
      %v1246 = vsel %vm858, %v1240, %v1242
      %1247 = vrot.lane.b32.xlu0 %v1218, 96
      %v1248 = vpop.permute.xlu0 %1247
      %1249 = vrot.lane.b32.xlu0 %v1219, 96
      %v1250 = vpop.permute.xlu0 %1249
      %1251 = vrot.lane.b32.xlu0 %v1223, 96
      %v1252 = vpop.permute.xlu0 %1251
      %1253 = vrot.lane.b32.xlu0 %v1221, 96
      %v1254 = vpop.permute.xlu0 %1253
      %1255 = vrot.lane.b32.xlu0 %v1222, 96
      %v1256 = vpop.permute.xlu0 %1255
      %1257 = vrot.lane.b32.xlu0 %v1224, 96
      %v1258 = vpop.permute.xlu0 %1257
      %v1259 = vsel %vm877, %v1248, %v1250
      %v1260 = vsel %vm877, %v1250, %v1252
      %v1261 = vsel %vm877, %v1254, %v1256
      %v1262 = vsel %vm877, %v1256, %v1258
      %s1263 = scalar_lea.vmem %s4, 32
      %v1264 = vld [vmem:[%s1263] sm:$0xff]
      %v1265 = vld [vmem:[%s1263 + $0x8] sm:$0xff]
      %1268 = vrot.lane.b32.xlu0 %v1217, 15
      %v1269 = vpop.permute.xlu0 %1268
      %1270 = vrot.lane.b32.xlu0 %v1218, 15
      %v1271 = vpop.permute.xlu0 %1270
      %1272 = vrot.lane.b32.xlu0 %v1219, 15
      %v1273 = vpop.permute.xlu0 %1272
      %1274 = vrot.lane.b32.xlu0 %v1220, 15
      %v1275 = vpop.permute.xlu0 %1274
      %1276 = vrot.lane.b32.xlu0 %v1221, 15
      %v1277 = vpop.permute.xlu0 %1276
      %1278 = vrot.lane.b32.xlu0 %v1222, 15
      %v1279 = vpop.permute.xlu0 %1278
      %1280 = vrot.lane.b32.xlu0 %v1232, 15
      %v1281 = vpop.permute.xlu0 %1280
      %1282 = vrot.lane.b32.xlu0 %v1243, 15
      %v1283 = vpop.permute.xlu0 %1282
      %1284 = vrot.lane.b32.xlu0 %v1244, 15
      %v1285 = vpop.permute.xlu0 %1284
      %1286 = vrot.lane.b32.xlu0 %v1238, 15
      %v1287 = vpop.permute.xlu0 %1286
      %1288 = vrot.lane.b32.xlu0 %v1245, 15
      %v1289 = vpop.permute.xlu0 %1288
      %1290 = vrot.lane.b32.xlu0 %v1246, 15
      %v1291 = vpop.permute.xlu0 %1290
      %1292 = vrot.lane.b32.xlu0 %v1248, 15
      %v1293 = vpop.permute.xlu0 %1292
      %1294 = vrot.lane.b32.xlu0 %v1259, 15
      %v1295 = vpop.permute.xlu0 %1294
      %1296 = vrot.lane.b32.xlu0 %v1260, 15
      %v1297 = vpop.permute.xlu0 %1296
      %1298 = vrot.lane.b32.xlu0 %v1254, 15
      %v1299 = vpop.permute.xlu0 %1298
      %1300 = vrot.lane.b32.xlu0 %v1261, 15
      %v1301 = vpop.permute.xlu0 %1300
      %1302 = vrot.lane.b32.xlu0 %v1262, 15
      %v1303 = vpop.permute.xlu0 %1302
      %vm1304 = vcmask 121856
      %v1305 = vsel %vm1304, %v1269, %v1271
      %v1306 = vsel %vm1304, %v1271, %v1273
      %v1307 = vsel %vm1304, %v1275, %v1277
      %v1308 = vsel %vm1304, %v1277, %v1279
      %v1309 = vsel %vm1304, %v1281, %v1283
      %v1310 = vsel %vm1304, %v1283, %v1285
      %v1311 = vsel %vm1304, %v1287, %v1289
      %v1312 = vsel %vm1304, %v1289, %v1291
      %v1313 = vsel %vm1304, %v1293, %v1295
      %v1314 = vsel %vm1304, %v1295, %v1297
      %v1315 = vsel %vm1304, %v1299, %v1301
      %v1316 = vsel %vm1304, %v1301, %v1303
      %v1330 = vsel %vm989, %v1264, 0
      %v1333 = vsel %vm989, %v1265, 0
      %1335 = vmatprep.subr.mxu0 0.0
      %1336 = vmatpush1.msra.mxu0 0.0
      %1337 = vmatprep.subr.mxu0 0.0
      %1338 = vmatpush1.msra.mxu0 0.0
      %1339 = vmatprep.subr.mxu0 0.0
      %1340 = vmatpush1.msra.mxu0 0.0
      %1341 = vmatprep.subr.mxu0 0.0
      %1342 = vmatpush1.msra.mxu0 0.0
      %1343 = vmatprep.subr.mxu0 0.0
      %1344 = vmatpush1.msra.mxu0 0.0
      %1345 = vmatprep.subr.mxu0 0.0
      %1346 = vmatpush1.msra.mxu0 0.0
      %1347 = vmatprep.subr.mxu0 0.0
      %1348 = vmatpush1.msra.mxu0 0.0
      %1349 = vmatprep.subr.mxu0 0.0
      %1350 = vmatpush1.msra.mxu0 0.0
      %1351 = vmatprep.subr.mxu0 0.0
      %1352 = vmatpush1.msra.mxu0 0.0
      %1353 = vmatprep.subr.mxu0 0.0
      %1354 = vmatpush1.msra.mxu0 0.0
      %1355 = vmatprep.subr.mxu0 %v1316
      %1356 = vmatpush1.msra.mxu0 %v1315
      %1357 = vmatprep.subr.mxu0 %v1314
      %1358 = vmatpush1.msra.mxu0 %v1313
      %1359 = vmatprep.subr.mxu0 %v1312
      %1360 = vmatpush1.msra.mxu0 %v1311
      %1361 = vmatprep.subr.mxu0 %v1310
      %1362 = vmatpush1.msra.mxu0 %v1309
      %1363 = vmatprep.subr.mxu0 %v1308
      %1364 = vmatpush1.msra.mxu0 %v1307
      %1365 = vmatprep.subr.mxu0 %v1306
      %1366 = vmatpush1.msra.mxu0 %v1305
      %1367 = vmatprep.subr.mxu0 0.0
      %1368 = vmatpush2.msra.mxu0 0.0
      %1369 = vmatprep.subr.mxu0 0.0
      %1370 = vmatpush2.msra.mxu0 0.0
      %1371 = vmatprep.subr.mxu0 0.0
      %1372 = vmatpush2.msra.mxu0 0.0
      %1373 = vmatprep.subr.mxu0 0.0
      %1374 = vmatpush2.msra.mxu0 0.0
      %1375 = vmatprep.subr.mxu0 0.0
      %1376 = vmatpush2.msra.mxu0 0.0
      %1377 = vmatprep.subr.mxu0 0.0
      %1378 = vmatpush2.msra.mxu0 0.0
      %1379 = vmatprep.subr.mxu0 0.0
      %1380 = vmatpush2.msra.mxu0 0.0
      %1381 = vmatprep.subr.mxu0 0.0
      %1382 = vmatpush2.msra.mxu0 0.0
      %1383 = vmatprep.subr.mxu0 0.0
      %1384 = vmatpush2.msra.mxu0 0.0
      %1385 = vmatprep.subr.mxu0 0.0
      %1386 = vmatpush2.msra.mxu0 0.0
      %1387 = vmatprep.subr.mxu0 0.0
      %1388 = vmatpush2.msra.mxu0 0.0
      %1389 = vmatprep.subr.mxu0 0.0
      %1390 = vmatpush2.msra.mxu0 0.0
      %1391 = vmatprep.subr.mxu0 0.0
      %1392 = vmatpush2.msra.mxu0 0.0
      %1393 = vmatprep.subr.mxu0 0.0
      %1394 = vmatpush2.msra.mxu0 0.0
      %1395 = vmatprep.subr.mxu0 0.0
      %1396 = vmatpush2.msra.mxu0 0.0
      %1397 = vmatprep.subr.mxu0 0.0
      %1398 = vmatpush2.msra.mxu0 0.0
      %1399 = vmatprep.mubr.f32.mxu0 0.0
      %1400 = vmatmul.mubr.f32.gmra.mxu0 %v1330
      %v1401 = vpop.f32.mrf.mxu0
      %v1402 = vadd.f32 0.0, %v1401
      %v1403 = vpop.f32.mrf.mxu0
      %v1404 = vadd.f32 0.0, %v1403
      %1405 = vmatprep.mubr.f32.mxu0 0.0
      %1406 = vmatmul.mubr.f32.gmra.mxu0 %v1333
      %v1407 = vpop.f32.mrf.mxu0
      %v1408 = vadd.f32 0.0, %v1407
      %v1409 = vpop.f32.mrf.mxu0
      %v1410 = vadd.f32 0.0, %v1409
      %1411 = vdwg.mxu0
      %v1412 = vadd.f32 %v1207, %v1402
      %v1413 = vadd.f32 %v1209, %v1404
      %v1414 = vadd.f32 %v1213, %v1408
      %v1415 = vadd.f32 %v1215, %v1410
      %v1416 = vld [vmem:[%s5] sm:$0xff]
      %v1417 = vld [vmem:[%s5 + $0x8] sm:$0xff]
      %1419 = vset.pattern.permute.xlu0 0
      %1420 = vperm.xlu0 %1419, %v1416
      %v1421 = vpop.permute.xlu0 %1420
      %1424 = vset.pattern.permute.xlu0 0
      %1425 = vperm.xlu0 %1424, %v1417
      %v1426 = vpop.permute.xlu0 %1425
      %v1428 = vadd.f32 %v1412, %v1421
      %v1429 = vadd.f32 %v1413, %v1421
      %v1430 = vadd.f32 %v1414, %v1426
      %v1431 = vadd.f32 %v1415, %v1426
      %v1432 = vxor.u32 %v1428, 2147483648
      %v1433 = vxor.u32 %v1429, 2147483648
      %v1434 = vxor.u32 %v1430, 2147483648
      %v1435 = vxor.u32 %v1431, 2147483648
      %v1436 = vmul.f32 %v1432, 1.442695
      %v1437 = vpow.pop %v1436
      %v1438 = vmul.f32 %v1433, 1.442695
      %v1439 = vpow.pop %v1438
      %v1440 = vmul.f32 %v1434, 1.442695
      %v1441 = vpow.pop %v1440
      %v1442 = vmul.f32 %v1435, 1.442695
      %v1443 = vpow.pop %v1442
      %v1444 = vadd.f32 %v1437, 1.0
      %v1445 = vadd.f32 %v1439, 1.0
      %v1446 = vadd.f32 %v1441, 1.0
      %v1447 = vadd.f32 %v1443, 1.0
      %v1448 = vrcp.pop %v1444
      %v1449 = vmul.f32 1.0, %v1448
      %v1450 = vrcp.pop %v1445
      %v1451 = vmul.f32 1.0, %v1450
      %v1452 = vrcp.pop %v1446
      %v1453 = vmul.f32 1.0, %v1452
      %v1454 = vrcp.pop %v1447
      %v1455 = vmul.f32 1.0, %v1454
      %v1456 = vmul.f32 %v1428, %v1449
      %v1457 = vmul.f32 %v1429, %v1451
      %v1458 = vmul.f32 %v1430, %v1453
      %v1459 = vmul.f32 %v1431, %v1455
      %s1460 = scalar_lea.vmem %s1, 8
      %v1461 = vld [vmem:[%s1460] sm:$0x3]
      %v1463 = vlaneseq
      %v1464 = vshrl.u32 %v1463, 7
      %v1465 = vsub.s32 0, %v1464
      %v1466 = vrot.slane %v1461, %v1465
      %v1467 = vlaneseq
      %v1468 = vshrl.u32 %v1467, 7
      %v1469 = vsub.s32 1, %v1468
      %v1470 = vrot.slane %v1461, %v1469
      %v1473 = vmul.f32 %v1456, %v1466
      %v1474 = vmul.f32 %v1457, %v1470
      %v1475 = vmul.f32 %v1458, %v1466
      %v1476 = vmul.f32 %v1459, %v1470
      %1477 = vst [vmem:[#allocation2 + $0x8] sm:$0xff] %v1473
      %1478 = vst [vmem:[#allocation2 + $0x10] sm:$0xff] %v1474
      %1479 = vst [vmem:[#allocation2 + $0x28] sm:$0xff] %v1475
      %1480 = vst [vmem:[#allocation2 + $0x30] sm:$0xff] %v1476
      %v1481 = vld [vmem:[%s786] sm:$0x3]
      %v1483 = vlaneseq
      %v1484 = vshrl.u32 %v1483, 7
      %v1485 = vsub.s32 0, %v1484
      %v1486 = vrot.slane %v1481, %v1485
      %v1487 = vlaneseq
      %v1488 = vshrl.u32 %v1487, 7
      %v1489 = vsub.s32 1, %v1488
      %v1490 = vrot.slane %v1481, %v1489
      %v1493 = vmul.f32 %v1456, %v1486
      %v1494 = vmul.f32 %v1457, %v1490
      %v1495 = vmul.f32 %v1458, %v1486
      %v1496 = vmul.f32 %v1459, %v1490
      %1497 = vst [vmem:[#allocation2 + $0x48] sm:$0xff] %v1493
      %1498 = vst [vmem:[#allocation2 + $0x50] sm:$0xff] %v1494
      %1499 = vst [vmem:[#allocation2 + $0x68] sm:$0xff] %v1495
      %1500 = vst [vmem:[#allocation2 + $0x70] sm:$0xff] %v1496
      %1501 = vst [vmem:[#allocation2 + $0x88] sm:$0xff] %v1456
      %1502 = vst [vmem:[#allocation2 + $0x90] sm:$0xff] %v1457
      %1503 = vst [vmem:[#allocation2 + $0xa8] sm:$0xff] %v1458
      %1504 = vst [vmem:[#allocation2 + $0xb0] sm:$0xff] %v1459
      %v1505 = vld [vmem:[%s811] sm:$0x3]
      %v1507 = vlaneseq
      %v1508 = vshrl.u32 %v1507, 7
      %v1509 = vsub.s32 0, %v1508
      %v1510 = vrot.slane %v1505, %v1509
      %v1511 = vlaneseq
      %v1512 = vshrl.u32 %v1511, 7
      %v1513 = vsub.s32 1, %v1512
      %v1514 = vrot.slane %v1505, %v1513
      %v1517 = vmul.f32 %v1456, %v1510
      %v1518 = vmul.f32 %v1457, %v1514
      %v1519 = vmul.f32 %v1458, %v1510
      %v1520 = vmul.f32 %v1459, %v1514
      %1521 = vst [vmem:[#allocation2 + $0xc8] sm:$0xff] %v1517
      %1522 = vst [vmem:[#allocation2 + $0xd0] sm:$0xff] %v1518
      %1523 = vst [vmem:[#allocation2 + $0xe8] sm:$0xff] %v1519
      %1524 = vst [vmem:[#allocation2 + $0xf0] sm:$0xff] %v1520
      %v1525 = vld [vmem:[%s1] sm:$0x3]
      %v1527 = vlaneseq
      %v1528 = vshrl.u32 %v1527, 7
      %v1529 = vsub.s32 0, %v1528
      %v1530 = vrot.slane %v1525, %v1529
      %v1531 = vlaneseq
      %v1532 = vshrl.u32 %v1531, 7
      %v1533 = vsub.s32 1, %v1532
      %v1534 = vrot.slane %v1525, %v1533
      %v1537 = vmul.f32 %v1456, %v1530
      %v1538 = vmul.f32 %v1457, %v1534
      %v1539 = vmul.f32 %v1458, %v1530
      %v1540 = vmul.f32 %v1459, %v1534
      %1541 = vst [vmem:[#allocation2 + $0x108] sm:$0xff] %v1537
      %1542 = vst [vmem:[#allocation2 + $0x110] sm:$0xff] %v1538
      %1543 = vst [vmem:[#allocation2 + $0x128] sm:$0xff] %v1539
      %1544 = vst [vmem:[#allocation2 + $0x130] sm:$0xff] %v1540
      %v1545 = vld [vmem:[#allocation2] sm:$0xff]
      %v1546 = vld [vmem:[#allocation2 + $0x8] sm:$0xff]
      %v1547 = vld [vmem:[#allocation2 + $0x10] sm:$0xff]
      %v1548 = vld [vmem:[#allocation2 + $0x20] sm:$0xff]
      %v1549 = vld [vmem:[#allocation2 + $0x28] sm:$0xff]
      %v1550 = vld [vmem:[#allocation2 + $0x30] sm:$0xff]
      %v1551 = vld [vmem:[%s6] sm:$0xff]
      %v1552 = vld [vmem:[%s6 + $0x8] sm:$0xff]
      %1554 = vset.pattern.permute.xlu0 0
      %1555 = vperm.xlu0 %1554, %v1551
      %v1556 = vpop.permute.xlu0 %1555
      %1559 = vset.pattern.permute.xlu0 0
      %1560 = vperm.xlu0 %1559, %v1552
      %v1561 = vpop.permute.xlu0 %1560
      %v1563 = vmul.f32 %v1545, %v1556
      %v1564 = vmul.f32 %v1546, %v1556
      %v1565 = vmul.f32 %v1547, %v1556
      %v1566 = vmul.f32 %v1548, %v1561
      %v1567 = vmul.f32 %v1549, %v1561
      %v1568 = vmul.f32 %v1550, %v1561
      %v1569 = vld [vmem:[#allocation2 + $0x40] sm:$0xff]
      %v1570 = vld [vmem:[#allocation2 + $0x48] sm:$0xff]
      %v1571 = vld [vmem:[#allocation2 + $0x50] sm:$0xff]
      %v1572 = vld [vmem:[#allocation2 + $0x60] sm:$0xff]
      %v1573 = vld [vmem:[#allocation2 + $0x68] sm:$0xff]
      %v1574 = vld [vmem:[#allocation2 + $0x70] sm:$0xff]
      %s1575 = scalar_lea.vmem %s6, 16
      %v1576 = vld [vmem:[%s1575] sm:$0xff]
      %v1577 = vld [vmem:[%s1575 + $0x8] sm:$0xff]
      %1579 = vset.pattern.permute.xlu0 0
      %1580 = vperm.xlu0 %1579, %v1576
      %v1581 = vpop.permute.xlu0 %1580
      %1584 = vset.pattern.permute.xlu0 0
      %1585 = vperm.xlu0 %1584, %v1577
      %v1586 = vpop.permute.xlu0 %1585
      %v1588 = vmul.f32 %v1569, %v1581
      %v1589 = vmul.f32 %v1570, %v1581
      %v1590 = vmul.f32 %v1571, %v1581
      %v1591 = vmul.f32 %v1572, %v1586
      %v1592 = vmul.f32 %v1573, %v1586
      %v1593 = vmul.f32 %v1574, %v1586
      %1600 = vrot.lane.b32.xlu0 %v1588, 127
      %v1601 = vpop.permute.xlu0 %1600
      %1602 = vrot.lane.b32.xlu0 %v1589, 127
      %v1603 = vpop.permute.xlu0 %1602
      %1604 = vrot.lane.b32.xlu0 %v1590, 127
      %v1605 = vpop.permute.xlu0 %1604
      %1606 = vrot.lane.b32.xlu0 %v1591, 127
      %v1607 = vpop.permute.xlu0 %1606
      %1608 = vrot.lane.b32.xlu0 %v1592, 127
      %v1609 = vpop.permute.xlu0 %1608
      %1610 = vrot.lane.b32.xlu0 %v1593, 127
      %v1611 = vpop.permute.xlu0 %1610
      %vm1612 = vcmask 1039360
      %v1613 = vsel %vm1612, %v1601, %v1603
      %v1614 = vsel %vm1612, %v1603, %v1605
      %v1615 = vsel %vm1612, %v1607, %v1609
      %v1616 = vsel %vm1612, %v1609, %v1611
      %v1623 = vadd.f32 %v1563, %v1613
      %v1624 = vadd.f32 %v1564, %v1614
      %v1625 = vadd.f32 %v1565, %v1605
      %v1626 = vadd.f32 %v1566, %v1615
      %v1627 = vadd.f32 %v1567, %v1616
      %v1628 = vadd.f32 %v1568, %v1611
      %v1629 = vld [vmem:[#allocation2 + $0x80] sm:$0xff]
      %v1630 = vld [vmem:[#allocation2 + $0x88] sm:$0xff]
      %v1631 = vld [vmem:[#allocation2 + $0x90] sm:$0xff]
      %v1632 = vld [vmem:[#allocation2 + $0xa0] sm:$0xff]
      %v1633 = vld [vmem:[#allocation2 + $0xa8] sm:$0xff]
      %v1634 = vld [vmem:[#allocation2 + $0xb0] sm:$0xff]
      %s1635 = scalar_lea.vmem %s6, 32
      %v1636 = vld [vmem:[%s1635] sm:$0xff]
      %v1637 = vld [vmem:[%s1635 + $0x8] sm:$0xff]
      %1639 = vset.pattern.permute.xlu0 0
      %1640 = vperm.xlu0 %1639, %v1636
      %v1641 = vpop.permute.xlu0 %1640
      %1644 = vset.pattern.permute.xlu0 0
      %1645 = vperm.xlu0 %1644, %v1637
      %v1646 = vpop.permute.xlu0 %1645
      %v1648 = vmul.f32 %v1629, %v1641
      %v1649 = vmul.f32 %v1630, %v1641
      %v1650 = vmul.f32 %v1631, %v1641
      %v1651 = vmul.f32 %v1632, %v1646
      %v1652 = vmul.f32 %v1633, %v1646
      %v1653 = vmul.f32 %v1634, %v1646
      %1660 = vrot.lane.b32.xlu0 %v1648, 126
      %v1661 = vpop.permute.xlu0 %1660
      %1662 = vrot.lane.b32.xlu0 %v1649, 126
      %v1663 = vpop.permute.xlu0 %1662
      %1664 = vrot.lane.b32.xlu0 %v1650, 126
      %v1665 = vpop.permute.xlu0 %1664
      %1666 = vrot.lane.b32.xlu0 %v1651, 126
      %v1667 = vpop.permute.xlu0 %1666
      %1668 = vrot.lane.b32.xlu0 %v1652, 126
      %v1669 = vpop.permute.xlu0 %1668
      %1670 = vrot.lane.b32.xlu0 %v1653, 126
      %v1671 = vpop.permute.xlu0 %1670
      %vm1672 = vcmask 1031168
      %v1673 = vsel %vm1672, %v1661, %v1663
      %v1674 = vsel %vm1672, %v1663, %v1665
      %v1675 = vsel %vm1672, %v1667, %v1669
      %v1676 = vsel %vm1672, %v1669, %v1671
      %v1683 = vadd.f32 %v1623, %v1673
      %v1684 = vadd.f32 %v1624, %v1674
      %v1685 = vadd.f32 %v1625, %v1665
      %v1686 = vadd.f32 %v1626, %v1675
      %v1687 = vadd.f32 %v1627, %v1676
      %v1688 = vadd.f32 %v1628, %v1671
      %v1689 = vld [vmem:[#allocation2 + $0xc0] sm:$0xff]
      %v1690 = vld [vmem:[#allocation2 + $0xc8] sm:$0xff]
      %v1691 = vld [vmem:[#allocation2 + $0xd0] sm:$0xff]
      %v1692 = vld [vmem:[#allocation2 + $0xe0] sm:$0xff]
      %v1693 = vld [vmem:[#allocation2 + $0xe8] sm:$0xff]
      %v1694 = vld [vmem:[#allocation2 + $0xf0] sm:$0xff]
      %s1695 = scalar_lea.vmem %s6, 48
      %v1696 = vld [vmem:[%s1695] sm:$0xff]
      %v1697 = vld [vmem:[%s1695 + $0x8] sm:$0xff]
      %1699 = vset.pattern.permute.xlu0 0
      %1700 = vperm.xlu0 %1699, %v1696
      %v1701 = vpop.permute.xlu0 %1700
      %1704 = vset.pattern.permute.xlu0 0
      %1705 = vperm.xlu0 %1704, %v1697
      %v1706 = vpop.permute.xlu0 %1705
      %v1708 = vmul.f32 %v1689, %v1701
      %v1709 = vmul.f32 %v1690, %v1701
      %v1710 = vmul.f32 %v1691, %v1701
      %v1711 = vmul.f32 %v1692, %v1706
      %v1712 = vmul.f32 %v1693, %v1706
      %v1713 = vmul.f32 %v1694, %v1706
      %1720 = vrot.lane.b32.xlu0 %v1708, 125
      %v1721 = vpop.permute.xlu0 %1720
      %1722 = vrot.lane.b32.xlu0 %v1709, 125
      %v1723 = vpop.permute.xlu0 %1722
      %1724 = vrot.lane.b32.xlu0 %v1710, 125
      %v1725 = vpop.permute.xlu0 %1724
      %1726 = vrot.lane.b32.xlu0 %v1711, 125
      %v1727 = vpop.permute.xlu0 %1726
      %1728 = vrot.lane.b32.xlu0 %v1712, 125
      %v1729 = vpop.permute.xlu0 %1728
      %1730 = vrot.lane.b32.xlu0 %v1713, 125
      %v1731 = vpop.permute.xlu0 %1730
      %vm1732 = vcmask 1022976
      %v1733 = vsel %vm1732, %v1721, %v1723
      %v1734 = vsel %vm1732, %v1723, %v1725
      %v1735 = vsel %vm1732, %v1727, %v1729
      %v1736 = vsel %vm1732, %v1729, %v1731
      %v1743 = vadd.f32 %v1683, %v1733
      %v1744 = vadd.f32 %v1684, %v1734
      %v1745 = vadd.f32 %v1685, %v1725
      %v1746 = vadd.f32 %v1686, %v1735
      %v1747 = vadd.f32 %v1687, %v1736
      %v1748 = vadd.f32 %v1688, %v1731
      %v1749 = vld [vmem:[#allocation2 + $0x100] sm:$0xff]
      %v1750 = vld [vmem:[#allocation2 + $0x108] sm:$0xff]
      %v1751 = vld [vmem:[#allocation2 + $0x110] sm:$0xff]
      %v1752 = vld [vmem:[#allocation2 + $0x120] sm:$0xff]
      %v1753 = vld [vmem:[#allocation2 + $0x128] sm:$0xff]
      %v1754 = vld [vmem:[#allocation2 + $0x130] sm:$0xff]
      %s1755 = scalar_lea.vmem %s6, 64
      %v1756 = vld [vmem:[%s1755] sm:$0xff]
      %v1757 = vld [vmem:[%s1755 + $0x8] sm:$0xff]
      %1759 = vset.pattern.permute.xlu0 0
      %1760 = vperm.xlu0 %1759, %v1756
      %v1761 = vpop.permute.xlu0 %1760
      %1764 = vset.pattern.permute.xlu0 0
      %1765 = vperm.xlu0 %1764, %v1757
      %v1766 = vpop.permute.xlu0 %1765
      %v1768 = vmul.f32 %v1749, %v1761
      %v1769 = vmul.f32 %v1750, %v1761
      %v1770 = vmul.f32 %v1751, %v1761
      %v1771 = vmul.f32 %v1752, %v1766
      %v1772 = vmul.f32 %v1753, %v1766
      %v1773 = vmul.f32 %v1754, %v1766
      %1780 = vrot.lane.b32.xlu0 %v1768, 124
      %v1781 = vpop.permute.xlu0 %1780
      %1782 = vrot.lane.b32.xlu0 %v1769, 124
      %v1783 = vpop.permute.xlu0 %1782
      %1784 = vrot.lane.b32.xlu0 %v1770, 124
      %v1785 = vpop.permute.xlu0 %1784
      %1786 = vrot.lane.b32.xlu0 %v1771, 124
      %v1787 = vpop.permute.xlu0 %1786
      %1788 = vrot.lane.b32.xlu0 %v1772, 124
      %v1789 = vpop.permute.xlu0 %1788
      %1790 = vrot.lane.b32.xlu0 %v1773, 124
      %v1791 = vpop.permute.xlu0 %1790
      %vm1792 = vcmask 1014784
      %v1793 = vsel %vm1792, %v1781, %v1783
      %v1794 = vsel %vm1792, %v1783, %v1785
      %v1795 = vsel %vm1792, %v1787, %v1789
      %v1796 = vsel %vm1792, %v1789, %v1791
      %v1803 = vadd.f32 %v1743, %v1793
      %v1804 = vadd.f32 %v1744, %v1794
      %v1805 = vadd.f32 %v1745, %v1785
      %v1806 = vadd.f32 %v1746, %v1795
      %v1807 = vadd.f32 %v1747, %v1796
      %v1808 = vadd.f32 %v1748, %v1791
      %s1809 = scalar_lea.vmem %s6, 80
      %v1810 = vld [vmem:[%s1809] sm:$0xff]
      %v1811 = vld [vmem:[%s1809 + $0x8] sm:$0xff]
      %1813 = vset.pattern.permute.xlu0 0
      %1814 = vperm.xlu0 %1813, %v1810
      %v1815 = vpop.permute.xlu0 %1814
      %1818 = vset.pattern.permute.xlu0 0
      %1819 = vperm.xlu0 %1818, %v1811
      %v1820 = vpop.permute.xlu0 %1819
      %v1822 = vmul.f32 %v1545, %v1815
      %v1823 = vmul.f32 %v1546, %v1815
      %v1824 = vmul.f32 %v1547, %v1815
      %v1825 = vmul.f32 %v1548, %v1820
      %v1826 = vmul.f32 %v1549, %v1820
      %v1827 = vmul.f32 %v1550, %v1820
      %1834 = vrot.lane.b32.xlu0 %v1822, 112
      %v1835 = vpop.permute.xlu0 %1834
      %1836 = vrot.lane.b32.xlu0 %v1823, 112
      %v1837 = vpop.permute.xlu0 %1836
      %1838 = vrot.lane.b32.xlu0 %v1824, 112
      %v1839 = vpop.permute.xlu0 %1838
      %1840 = vrot.lane.b32.xlu0 %v1825, 112
      %v1841 = vpop.permute.xlu0 %1840
      %1842 = vrot.lane.b32.xlu0 %v1826, 112
      %v1843 = vpop.permute.xlu0 %1842
      %1844 = vrot.lane.b32.xlu0 %v1827, 112
      %v1845 = vpop.permute.xlu0 %1844
      %v1846 = vsel %vm858, %v1835, %v1837
      %v1847 = vsel %vm858, %v1837, %v1839
      %v1848 = vsel %vm858, %v1841, %v1843
      %v1849 = vsel %vm858, %v1843, %v1845
      %v1856 = vadd.f32 %v1803, %v1846
      %v1857 = vadd.f32 %v1804, %v1847
      %v1858 = vadd.f32 %v1805, %v1839
      %v1859 = vadd.f32 %v1806, %v1848
      %v1860 = vadd.f32 %v1807, %v1849
      %v1861 = vadd.f32 %v1808, %v1845
      %s1862 = scalar_lea.vmem %s6, 96
      %v1863 = vld [vmem:[%s1862] sm:$0xff]
      %v1864 = vld [vmem:[%s1862 + $0x8] sm:$0xff]
      %1866 = vset.pattern.permute.xlu0 0
      %1867 = vperm.xlu0 %1866, %v1863
      %v1868 = vpop.permute.xlu0 %1867
      %1871 = vset.pattern.permute.xlu0 0
      %1872 = vperm.xlu0 %1871, %v1864
      %v1873 = vpop.permute.xlu0 %1872
      %v1875 = vmul.f32 %v1569, %v1868
      %v1876 = vmul.f32 %v1570, %v1868
      %v1877 = vmul.f32 %v1571, %v1868
      %v1878 = vmul.f32 %v1572, %v1873
      %v1879 = vmul.f32 %v1573, %v1873
      %v1880 = vmul.f32 %v1574, %v1873
      %1887 = vrot.lane.b32.xlu0 %v1875, 111
      %v1888 = vpop.permute.xlu0 %1887
      %1889 = vrot.lane.b32.xlu0 %v1876, 111
      %v1890 = vpop.permute.xlu0 %1889
      %1891 = vrot.lane.b32.xlu0 %v1877, 111
      %v1892 = vpop.permute.xlu0 %1891
      %1893 = vrot.lane.b32.xlu0 %v1878, 111
      %v1894 = vpop.permute.xlu0 %1893
      %1895 = vrot.lane.b32.xlu0 %v1879, 111
      %v1896 = vpop.permute.xlu0 %1895
      %1897 = vrot.lane.b32.xlu0 %v1880, 111
      %v1898 = vpop.permute.xlu0 %1897
      %vm1899 = vcmask 908288
      %v1900 = vsel %vm1899, %v1888, %v1890
      %v1901 = vsel %vm1899, %v1890, %v1892
      %v1902 = vsel %vm1899, %v1894, %v1896
      %v1903 = vsel %vm1899, %v1896, %v1898
      %v1910 = vadd.f32 %v1856, %v1900
      %v1911 = vadd.f32 %v1857, %v1901
      %v1912 = vadd.f32 %v1858, %v1892
      %v1913 = vadd.f32 %v1859, %v1902
      %v1914 = vadd.f32 %v1860, %v1903
      %v1915 = vadd.f32 %v1861, %v1898
      %s1916 = scalar_lea.vmem %s6, 112
      %v1917 = vld [vmem:[%s1916] sm:$0xff]
      %v1918 = vld [vmem:[%s1916 + $0x8] sm:$0xff]
      %1920 = vset.pattern.permute.xlu0 0
      %1921 = vperm.xlu0 %1920, %v1917
      %v1922 = vpop.permute.xlu0 %1921
      %1925 = vset.pattern.permute.xlu0 0
      %1926 = vperm.xlu0 %1925, %v1918
      %v1927 = vpop.permute.xlu0 %1926
      %v1929 = vmul.f32 %v1629, %v1922
      %v1930 = vmul.f32 %v1630, %v1922
      %v1931 = vmul.f32 %v1631, %v1922
      %v1932 = vmul.f32 %v1632, %v1927
      %v1933 = vmul.f32 %v1633, %v1927
      %v1934 = vmul.f32 %v1634, %v1927
      %1941 = vrot.lane.b32.xlu0 %v1929, 110
      %v1942 = vpop.permute.xlu0 %1941
      %1943 = vrot.lane.b32.xlu0 %v1930, 110
      %v1944 = vpop.permute.xlu0 %1943
      %1945 = vrot.lane.b32.xlu0 %v1931, 110
      %v1946 = vpop.permute.xlu0 %1945
      %1947 = vrot.lane.b32.xlu0 %v1932, 110
      %v1948 = vpop.permute.xlu0 %1947
      %1949 = vrot.lane.b32.xlu0 %v1933, 110
      %v1950 = vpop.permute.xlu0 %1949
      %1951 = vrot.lane.b32.xlu0 %v1934, 110
      %v1952 = vpop.permute.xlu0 %1951
      %vm1953 = vcmask 900096
      %v1954 = vsel %vm1953, %v1942, %v1944
      %v1955 = vsel %vm1953, %v1944, %v1946
      %v1956 = vsel %vm1953, %v1948, %v1950
      %v1957 = vsel %vm1953, %v1950, %v1952
      %v1964 = vadd.f32 %v1910, %v1954
      %v1965 = vadd.f32 %v1911, %v1955
      %v1966 = vadd.f32 %v1912, %v1946
      %v1967 = vadd.f32 %v1913, %v1956
      %v1968 = vadd.f32 %v1914, %v1957
      %v1969 = vadd.f32 %v1915, %v1952
      %s1970 = scalar_lea.vmem %s6, 128
      %v1971 = vld [vmem:[%s1970] sm:$0xff]
      %v1972 = vld [vmem:[%s1970 + $0x8] sm:$0xff]
      %1974 = vset.pattern.permute.xlu0 0
      %1975 = vperm.xlu0 %1974, %v1971
      %v1976 = vpop.permute.xlu0 %1975
      %1979 = vset.pattern.permute.xlu0 0
      %1980 = vperm.xlu0 %1979, %v1972
      %v1981 = vpop.permute.xlu0 %1980
      %v1983 = vmul.f32 %v1689, %v1976
      %v1984 = vmul.f32 %v1690, %v1976
      %v1985 = vmul.f32 %v1691, %v1976
      %v1986 = vmul.f32 %v1692, %v1981
      %v1987 = vmul.f32 %v1693, %v1981
      %v1988 = vmul.f32 %v1694, %v1981
      %1995 = vrot.lane.b32.xlu0 %v1983, 109
      %v1996 = vpop.permute.xlu0 %1995
      %1997 = vrot.lane.b32.xlu0 %v1984, 109
      %v1998 = vpop.permute.xlu0 %1997
      %1999 = vrot.lane.b32.xlu0 %v1985, 109
      %v2000 = vpop.permute.xlu0 %1999
      %2001 = vrot.lane.b32.xlu0 %v1986, 109
      %v2002 = vpop.permute.xlu0 %2001
      %2003 = vrot.lane.b32.xlu0 %v1987, 109
      %v2004 = vpop.permute.xlu0 %2003
      %2005 = vrot.lane.b32.xlu0 %v1988, 109
      %v2006 = vpop.permute.xlu0 %2005
      %vm2007 = vcmask 891904
      %v2008 = vsel %vm2007, %v1996, %v1998
      %v2009 = vsel %vm2007, %v1998, %v2000
      %v2010 = vsel %vm2007, %v2002, %v2004
      %v2011 = vsel %vm2007, %v2004, %v2006
      %v2018 = vadd.f32 %v1964, %v2008
      %v2019 = vadd.f32 %v1965, %v2009
      %v2020 = vadd.f32 %v1966, %v2000
      %v2021 = vadd.f32 %v1967, %v2010
      %v2022 = vadd.f32 %v1968, %v2011
      %v2023 = vadd.f32 %v1969, %v2006
      %s2024 = scalar_lea.vmem %s6, 144
      %v2025 = vld [vmem:[%s2024] sm:$0xff]
      %v2026 = vld [vmem:[%s2024 + $0x8] sm:$0xff]
      %2028 = vset.pattern.permute.xlu0 0
      %2029 = vperm.xlu0 %2028, %v2025
      %v2030 = vpop.permute.xlu0 %2029
      %2033 = vset.pattern.permute.xlu0 0
      %2034 = vperm.xlu0 %2033, %v2026
      %v2035 = vpop.permute.xlu0 %2034
      %v2037 = vmul.f32 %v1749, %v2030
      %v2038 = vmul.f32 %v1750, %v2030
      %v2039 = vmul.f32 %v1751, %v2030
      %v2040 = vmul.f32 %v1752, %v2035
      %v2041 = vmul.f32 %v1753, %v2035
      %v2042 = vmul.f32 %v1754, %v2035
      %2049 = vrot.lane.b32.xlu0 %v2037, 108
      %v2050 = vpop.permute.xlu0 %2049
      %2051 = vrot.lane.b32.xlu0 %v2038, 108
      %v2052 = vpop.permute.xlu0 %2051
      %2053 = vrot.lane.b32.xlu0 %v2039, 108
      %v2054 = vpop.permute.xlu0 %2053
      %2055 = vrot.lane.b32.xlu0 %v2040, 108
      %v2056 = vpop.permute.xlu0 %2055
      %2057 = vrot.lane.b32.xlu0 %v2041, 108
      %v2058 = vpop.permute.xlu0 %2057
      %2059 = vrot.lane.b32.xlu0 %v2042, 108
      %v2060 = vpop.permute.xlu0 %2059
      %vm2061 = vcmask 883712
      %v2062 = vsel %vm2061, %v2050, %v2052
      %v2063 = vsel %vm2061, %v2052, %v2054
      %v2064 = vsel %vm2061, %v2056, %v2058
      %v2065 = vsel %vm2061, %v2058, %v2060
      %v2072 = vadd.f32 %v2018, %v2062
      %v2073 = vadd.f32 %v2019, %v2063
      %v2074 = vadd.f32 %v2020, %v2054
      %v2075 = vadd.f32 %v2021, %v2064
      %v2076 = vadd.f32 %v2022, %v2065
      %v2077 = vadd.f32 %v2023, %v2060
      %s2078 = scalar_lea.vmem %s6, 160
      %v2079 = vld [vmem:[%s2078] sm:$0xff]
      %v2080 = vld [vmem:[%s2078 + $0x8] sm:$0xff]
      %2082 = vset.pattern.permute.xlu0 0
      %2083 = vperm.xlu0 %2082, %v2079
      %v2084 = vpop.permute.xlu0 %2083
      %2087 = vset.pattern.permute.xlu0 0
      %2088 = vperm.xlu0 %2087, %v2080
      %v2089 = vpop.permute.xlu0 %2088
      %v2091 = vmul.f32 %v1545, %v2084
      %v2092 = vmul.f32 %v1546, %v2084
      %v2093 = vmul.f32 %v1547, %v2084
      %v2094 = vmul.f32 %v1548, %v2089
      %v2095 = vmul.f32 %v1549, %v2089
      %v2096 = vmul.f32 %v1550, %v2089
      %2103 = vrot.lane.b32.xlu0 %v2091, 96
      %v2104 = vpop.permute.xlu0 %2103
      %2105 = vrot.lane.b32.xlu0 %v2092, 96
      %v2106 = vpop.permute.xlu0 %2105
      %2107 = vrot.lane.b32.xlu0 %v2093, 96
      %v2108 = vpop.permute.xlu0 %2107
      %2109 = vrot.lane.b32.xlu0 %v2094, 96
      %v2110 = vpop.permute.xlu0 %2109
      %2111 = vrot.lane.b32.xlu0 %v2095, 96
      %v2112 = vpop.permute.xlu0 %2111
      %2113 = vrot.lane.b32.xlu0 %v2096, 96
      %v2114 = vpop.permute.xlu0 %2113
      %v2115 = vsel %vm877, %v2104, %v2106
      %v2116 = vsel %vm877, %v2106, %v2108
      %v2117 = vsel %vm877, %v2110, %v2112
      %v2118 = vsel %vm877, %v2112, %v2114
      %v2125 = vadd.f32 %v2072, %v2115
      %v2126 = vadd.f32 %v2073, %v2116
      %v2127 = vadd.f32 %v2074, %v2108
      %v2128 = vadd.f32 %v2075, %v2117
      %v2129 = vadd.f32 %v2076, %v2118
      %v2130 = vadd.f32 %v2077, %v2114
      %s2131 = scalar_lea.vmem %s6, 176
      %v2132 = vld [vmem:[%s2131] sm:$0xff]
      %v2133 = vld [vmem:[%s2131 + $0x8] sm:$0xff]
      %2135 = vset.pattern.permute.xlu0 0
      %2136 = vperm.xlu0 %2135, %v2132
      %v2137 = vpop.permute.xlu0 %2136
      %2140 = vset.pattern.permute.xlu0 0
      %2141 = vperm.xlu0 %2140, %v2133
      %v2142 = vpop.permute.xlu0 %2141
      %v2144 = vmul.f32 %v1569, %v2137
      %v2145 = vmul.f32 %v1570, %v2137
      %v2146 = vmul.f32 %v1571, %v2137
      %v2147 = vmul.f32 %v1572, %v2142
      %v2148 = vmul.f32 %v1573, %v2142
      %v2149 = vmul.f32 %v1574, %v2142
      %2156 = vrot.lane.b32.xlu0 %v2144, 95
      %v2157 = vpop.permute.xlu0 %2156
      %2158 = vrot.lane.b32.xlu0 %v2145, 95
      %v2159 = vpop.permute.xlu0 %2158
      %2160 = vrot.lane.b32.xlu0 %v2146, 95
      %v2161 = vpop.permute.xlu0 %2160
      %2162 = vrot.lane.b32.xlu0 %v2147, 95
      %v2163 = vpop.permute.xlu0 %2162
      %2164 = vrot.lane.b32.xlu0 %v2148, 95
      %v2165 = vpop.permute.xlu0 %2164
      %2166 = vrot.lane.b32.xlu0 %v2149, 95
      %v2167 = vpop.permute.xlu0 %2166
      %vm2168 = vcmask 777216
      %v2169 = vsel %vm2168, %v2157, %v2159
      %v2170 = vsel %vm2168, %v2159, %v2161
      %v2171 = vsel %vm2168, %v2163, %v2165
      %v2172 = vsel %vm2168, %v2165, %v2167
      %v2179 = vadd.f32 %v2125, %v2169
      %v2180 = vadd.f32 %v2126, %v2170
      %v2181 = vadd.f32 %v2127, %v2161
      %v2182 = vadd.f32 %v2128, %v2171
      %v2183 = vadd.f32 %v2129, %v2172
      %v2184 = vadd.f32 %v2130, %v2167
      %s2185 = scalar_lea.vmem %s6, 192
      %v2186 = vld [vmem:[%s2185] sm:$0xff]
      %v2187 = vld [vmem:[%s2185 + $0x8] sm:$0xff]
      %2189 = vset.pattern.permute.xlu0 0
      %2190 = vperm.xlu0 %2189, %v2186
      %v2191 = vpop.permute.xlu0 %2190
      %2194 = vset.pattern.permute.xlu0 0
      %2195 = vperm.xlu0 %2194, %v2187
      %v2196 = vpop.permute.xlu0 %2195
      %v2198 = vmul.f32 %v1630, %v2191
      %v2199 = vmul.f32 %v1631, %v2191
      %v2200 = vmul.f32 %v1633, %v2196
      %v2201 = vmul.f32 %v1634, %v2196
      %2206 = vrot.lane.b32.xlu0 %v2198, 94
      %v2207 = vpop.permute.xlu0 %2206
      %2208 = vrot.lane.b32.xlu0 %v2199, 94
      %v2209 = vpop.permute.xlu0 %2208
      %2210 = vrot.lane.b32.xlu0 %v2200, 94
      %v2211 = vpop.permute.xlu0 %2210
      %2212 = vrot.lane.b32.xlu0 %v2201, 94
      %v2213 = vpop.permute.xlu0 %2212
      %vm2214 = vcmask 769024
      %v2215 = vsel %vm2214, %v2207, %v2209
      %v2216 = vsel %vm2214, %v2211, %v2213
      %v2223 = vadd.f32 %v2179, %v2207
      %v2224 = vadd.f32 %v2180, %v2215
      %v2225 = vadd.f32 %v2181, %v2209
      %v2226 = vadd.f32 %v2182, %v2211
      %v2227 = vadd.f32 %v2183, %v2216
      %v2228 = vadd.f32 %v2184, %v2213
      %v2229 = vld [vmem:[#allocation2 + $0xc8] sm:$0xff]
      %v2230 = vld [vmem:[#allocation2 + $0xd0] sm:$0xff]
      %v2231 = vld [vmem:[#allocation2 + $0xd8] sm:$0xff]
      %v2232 = vld [vmem:[#allocation2 + $0xe8] sm:$0xff]
      %v2233 = vld [vmem:[#allocation2 + $0xf0] sm:$0xff]
      %v2234 = vld [vmem:[#allocation2 + $0xf8] sm:$0xff]
      %s2235 = scalar_lea.vmem %s6, 208
      %v2236 = vld [vmem:[%s2235] sm:$0xff]
      %v2237 = vld [vmem:[%s2235 + $0x8] sm:$0xff]
      %2239 = vset.pattern.permute.xlu0 0
      %2240 = vperm.xlu0 %2239, %v2236
      %v2241 = vpop.permute.xlu0 %2240
      %2244 = vset.pattern.permute.xlu0 0
      %2245 = vperm.xlu0 %2244, %v2237
      %v2246 = vpop.permute.xlu0 %2245
      %v2248 = vmul.f32 %v2229, %v2241
      %v2249 = vmul.f32 %v2230, %v2241
      %v2250 = vmul.f32 %v2231, %v2241
      %v2251 = vmul.f32 %v2232, %v2246
      %v2252 = vmul.f32 %v2233, %v2246
      %v2253 = vmul.f32 %v2234, %v2246
      %2260 = vrot.lane.b32.xlu0 %v2248, 93
      %v2261 = vpop.permute.xlu0 %2260
      %2262 = vrot.lane.b32.xlu0 %v2249, 93
      %v2263 = vpop.permute.xlu0 %2262
      %2264 = vrot.lane.b32.xlu0 %v2250, 93
      %v2265 = vpop.permute.xlu0 %2264
      %2266 = vrot.lane.b32.xlu0 %v2251, 93
      %v2267 = vpop.permute.xlu0 %2266
      %2268 = vrot.lane.b32.xlu0 %v2252, 93
      %v2269 = vpop.permute.xlu0 %2268
      %2270 = vrot.lane.b32.xlu0 %v2253, 93
      %v2271 = vpop.permute.xlu0 %2270
      %vm2272 = vcmask 760832
      %v2273 = vsel %vm2272, %v2261, %v2263
      %v2274 = vsel %vm2272, %v2263, %v2265
      %v2275 = vsel %vm2272, %v2267, %v2269
      %v2276 = vsel %vm2272, %v2269, %v2271
      %v2283 = vadd.f32 %v2223, %v2261
      %v2284 = vadd.f32 %v2224, %v2273
      %v2285 = vadd.f32 %v2225, %v2274
      %v2286 = vadd.f32 %v2226, %v2267
      %v2287 = vadd.f32 %v2227, %v2275
      %v2288 = vadd.f32 %v2228, %v2276
      %v2289 = vld [vmem:[#allocation2 + $0x108] sm:$0xff]
      %v2290 = vld [vmem:[#allocation2 + $0x110] sm:$0xff]
      %v2291 = vld [vmem:[#allocation2 + $0x118] sm:$0xff]
      %v2292 = vld [vmem:[#allocation2 + $0x128] sm:$0xff]
      %v2293 = vld [vmem:[#allocation2 + $0x130] sm:$0xff]
      %v2294 = vld [vmem:[#allocation2 + $0x138] sm:$0xff]
      %s2295 = scalar_lea.vmem %s6, 224
      %v2296 = vld [vmem:[%s2295] sm:$0xff]
      %v2297 = vld [vmem:[%s2295 + $0x8] sm:$0xff]
      %2299 = vset.pattern.permute.xlu0 0
      %2300 = vperm.xlu0 %2299, %v2296
      %v2301 = vpop.permute.xlu0 %2300
      %2304 = vset.pattern.permute.xlu0 0
      %2305 = vperm.xlu0 %2304, %v2297
      %v2306 = vpop.permute.xlu0 %2305
      %v2308 = vmul.f32 %v2289, %v2301
      %v2309 = vmul.f32 %v2290, %v2301
      %v2310 = vmul.f32 %v2291, %v2301
      %v2311 = vmul.f32 %v2292, %v2306
      %v2312 = vmul.f32 %v2293, %v2306
      %v2313 = vmul.f32 %v2294, %v2306
      %2320 = vrot.lane.b32.xlu0 %v2308, 92
      %v2321 = vpop.permute.xlu0 %2320
      %2322 = vrot.lane.b32.xlu0 %v2309, 92
      %v2323 = vpop.permute.xlu0 %2322
      %2324 = vrot.lane.b32.xlu0 %v2310, 92
      %v2325 = vpop.permute.xlu0 %2324
      %2326 = vrot.lane.b32.xlu0 %v2311, 92
      %v2327 = vpop.permute.xlu0 %2326
      %2328 = vrot.lane.b32.xlu0 %v2312, 92
      %v2329 = vpop.permute.xlu0 %2328
      %2330 = vrot.lane.b32.xlu0 %v2313, 92
      %v2331 = vpop.permute.xlu0 %2330
      %vm2332 = vcmask 752640
      %v2333 = vsel %vm2332, %v2321, %v2323
      %v2334 = vsel %vm2332, %v2323, %v2325
      %v2335 = vsel %vm2332, %v2327, %v2329
      %v2336 = vsel %vm2332, %v2329, %v2331
      %v2343 = vadd.f32 %v2283, %v2321
      %v2344 = vadd.f32 %v2284, %v2333
      %v2345 = vadd.f32 %v2285, %v2334
      %v2346 = vadd.f32 %v2286, %v2327
      %v2347 = vadd.f32 %v2287, %v2335
      %v2348 = vadd.f32 %v2288, %v2336
      %v2349 = vld [vmem:[#allocation2 + $0x8] sm:$0xff]
      %v2350 = vld [vmem:[#allocation2 + $0x10] sm:$0xff]
      %v2351 = vld [vmem:[#allocation2 + $0x18] sm:$0xff]
      %v2352 = vld [vmem:[#allocation2 + $0x28] sm:$0xff]
      %v2353 = vld [vmem:[#allocation2 + $0x30] sm:$0xff]
      %v2354 = vld [vmem:[#allocation2 + $0x38] sm:$0xff]
      %s2355 = scalar_lea.vmem %s6, 240
      %v2356 = vld [vmem:[%s2355] sm:$0xff]
      %v2357 = vld [vmem:[%s2355 + $0x8] sm:$0xff]
      %2359 = vset.pattern.permute.xlu0 0
      %2360 = vperm.xlu0 %2359, %v2356
      %v2361 = vpop.permute.xlu0 %2360
      %2364 = vset.pattern.permute.xlu0 0
      %2365 = vperm.xlu0 %2364, %v2357
      %v2366 = vpop.permute.xlu0 %2365
      %v2368 = vmul.f32 %v2349, %v2361
      %v2369 = vmul.f32 %v2350, %v2361
      %v2370 = vmul.f32 %v2351, %v2361
      %v2371 = vmul.f32 %v2352, %v2366
      %v2372 = vmul.f32 %v2353, %v2366
      %v2373 = vmul.f32 %v2354, %v2366
      %2380 = vrot.lane.b32.xlu0 %v2368, 80
      %v2381 = vpop.permute.xlu0 %2380
      %2382 = vrot.lane.b32.xlu0 %v2369, 80
      %v2383 = vpop.permute.xlu0 %2382
      %2384 = vrot.lane.b32.xlu0 %v2370, 80
      %v2385 = vpop.permute.xlu0 %2384
      %2386 = vrot.lane.b32.xlu0 %v2371, 80
      %v2387 = vpop.permute.xlu0 %2386
      %2388 = vrot.lane.b32.xlu0 %v2372, 80
      %v2389 = vpop.permute.xlu0 %2388
      %2390 = vrot.lane.b32.xlu0 %v2373, 80
      %v2391 = vpop.permute.xlu0 %2390
      %vm2392 = vcmask 654336
      %v2393 = vsel %vm2392, %v2381, %v2383
      %v2394 = vsel %vm2392, %v2383, %v2385
      %v2395 = vsel %vm2392, %v2387, %v2389
      %v2396 = vsel %vm2392, %v2389, %v2391
      %v2403 = vadd.f32 %v2343, %v2381
      %v2404 = vadd.f32 %v2344, %v2393
      %v2405 = vadd.f32 %v2345, %v2394
      %v2406 = vadd.f32 %v2346, %v2387
      %v2407 = vadd.f32 %v2347, %v2395
      %v2408 = vadd.f32 %v2348, %v2396
      %v2409 = vld [vmem:[#allocation2 + $0x48] sm:$0xff]
      %v2410 = vld [vmem:[#allocation2 + $0x50] sm:$0xff]
      %v2411 = vld [vmem:[#allocation2 + $0x58] sm:$0xff]
      %v2412 = vld [vmem:[#allocation2 + $0x68] sm:$0xff]
      %v2413 = vld [vmem:[#allocation2 + $0x70] sm:$0xff]
      %v2414 = vld [vmem:[#allocation2 + $0x78] sm:$0xff]
      %s2415 = scalar_lea.vmem %s6, 256
      %v2416 = vld [vmem:[%s2415] sm:$0xff]
      %v2417 = vld [vmem:[%s2415 + $0x8] sm:$0xff]
      %2419 = vset.pattern.permute.xlu0 0
      %2420 = vperm.xlu0 %2419, %v2416
      %v2421 = vpop.permute.xlu0 %2420
      %2424 = vset.pattern.permute.xlu0 0
      %2425 = vperm.xlu0 %2424, %v2417
      %v2426 = vpop.permute.xlu0 %2425
      %v2428 = vmul.f32 %v2409, %v2421
      %v2429 = vmul.f32 %v2410, %v2421
      %v2430 = vmul.f32 %v2411, %v2421
      %v2431 = vmul.f32 %v2412, %v2426
      %v2432 = vmul.f32 %v2413, %v2426
      %v2433 = vmul.f32 %v2414, %v2426
      %2440 = vrot.lane.b32.xlu0 %v2428, 79
      %v2441 = vpop.permute.xlu0 %2440
      %2442 = vrot.lane.b32.xlu0 %v2429, 79
      %v2443 = vpop.permute.xlu0 %2442
      %2444 = vrot.lane.b32.xlu0 %v2430, 79
      %v2445 = vpop.permute.xlu0 %2444
      %2446 = vrot.lane.b32.xlu0 %v2431, 79
      %v2447 = vpop.permute.xlu0 %2446
      %2448 = vrot.lane.b32.xlu0 %v2432, 79
      %v2449 = vpop.permute.xlu0 %2448
      %2450 = vrot.lane.b32.xlu0 %v2433, 79
      %v2451 = vpop.permute.xlu0 %2450
      %vm2452 = vcmask 646144
      %v2453 = vsel %vm2452, %v2441, %v2443
      %v2454 = vsel %vm2452, %v2443, %v2445
      %v2455 = vsel %vm2452, %v2447, %v2449
      %v2456 = vsel %vm2452, %v2449, %v2451
      %v2463 = vadd.f32 %v2403, %v2441
      %v2464 = vadd.f32 %v2404, %v2453
      %v2465 = vadd.f32 %v2405, %v2454
      %v2466 = vadd.f32 %v2406, %v2447
      %v2467 = vadd.f32 %v2407, %v2455
      %v2468 = vadd.f32 %v2408, %v2456
      %v2469 = vld [vmem:[#allocation2 + $0x88] sm:$0xff]
      %v2470 = vld [vmem:[#allocation2 + $0x90] sm:$0xff]
      %v2471 = vld [vmem:[#allocation2 + $0x98] sm:$0xff]
      %v2472 = vld [vmem:[#allocation2 + $0xa8] sm:$0xff]
      %v2473 = vld [vmem:[#allocation2 + $0xb0] sm:$0xff]
      %v2474 = vld [vmem:[#allocation2 + $0xb8] sm:$0xff]
      %s2475 = scalar_lea.vmem %s6, 272
      %v2476 = vld [vmem:[%s2475] sm:$0xff]
      %v2477 = vld [vmem:[%s2475 + $0x8] sm:$0xff]
      %2479 = vset.pattern.permute.xlu0 0
      %2480 = vperm.xlu0 %2479, %v2476
      %v2481 = vpop.permute.xlu0 %2480
      %2484 = vset.pattern.permute.xlu0 0
      %2485 = vperm.xlu0 %2484, %v2477
      %v2486 = vpop.permute.xlu0 %2485
      %v2488 = vmul.f32 %v2469, %v2481
      %v2489 = vmul.f32 %v2470, %v2481
      %v2490 = vmul.f32 %v2471, %v2481
      %v2491 = vmul.f32 %v2472, %v2486
      %v2492 = vmul.f32 %v2473, %v2486
      %v2493 = vmul.f32 %v2474, %v2486
      %2500 = vrot.lane.b32.xlu0 %v2488, 78
      %v2501 = vpop.permute.xlu0 %2500
      %2502 = vrot.lane.b32.xlu0 %v2489, 78
      %v2503 = vpop.permute.xlu0 %2502
      %2504 = vrot.lane.b32.xlu0 %v2490, 78
      %v2505 = vpop.permute.xlu0 %2504
      %2506 = vrot.lane.b32.xlu0 %v2491, 78
      %v2507 = vpop.permute.xlu0 %2506
      %2508 = vrot.lane.b32.xlu0 %v2492, 78
      %v2509 = vpop.permute.xlu0 %2508
      %2510 = vrot.lane.b32.xlu0 %v2493, 78
      %v2511 = vpop.permute.xlu0 %2510
      %vm2512 = vcmask 637952
      %v2513 = vsel %vm2512, %v2501, %v2503
      %v2514 = vsel %vm2512, %v2503, %v2505
      %v2515 = vsel %vm2512, %v2507, %v2509
      %v2516 = vsel %vm2512, %v2509, %v2511
      %v2523 = vadd.f32 %v2463, %v2501
      %v2524 = vadd.f32 %v2464, %v2513
      %v2525 = vadd.f32 %v2465, %v2514
      %v2526 = vadd.f32 %v2466, %v2507
      %v2527 = vadd.f32 %v2467, %v2515
      %v2528 = vadd.f32 %v2468, %v2516
      %s2529 = scalar_lea.vmem %s6, 288
      %v2530 = vld [vmem:[%s2529] sm:$0xff]
      %v2531 = vld [vmem:[%s2529 + $0x8] sm:$0xff]
      %2533 = vset.pattern.permute.xlu0 0
      %2534 = vperm.xlu0 %2533, %v2530
      %v2535 = vpop.permute.xlu0 %2534
      %2538 = vset.pattern.permute.xlu0 0
      %2539 = vperm.xlu0 %2538, %v2531
      %v2540 = vpop.permute.xlu0 %2539
      %v2542 = vmul.f32 %v2229, %v2535
      %v2543 = vmul.f32 %v2230, %v2535
      %v2544 = vmul.f32 %v2231, %v2535
      %v2545 = vmul.f32 %v2232, %v2540
      %v2546 = vmul.f32 %v2233, %v2540
      %v2547 = vmul.f32 %v2234, %v2540
      %2554 = vrot.lane.b32.xlu0 %v2542, 77
      %v2555 = vpop.permute.xlu0 %2554
      %2556 = vrot.lane.b32.xlu0 %v2543, 77
      %v2557 = vpop.permute.xlu0 %2556
      %2558 = vrot.lane.b32.xlu0 %v2544, 77
      %v2559 = vpop.permute.xlu0 %2558
      %2560 = vrot.lane.b32.xlu0 %v2545, 77
      %v2561 = vpop.permute.xlu0 %2560
      %2562 = vrot.lane.b32.xlu0 %v2546, 77
      %v2563 = vpop.permute.xlu0 %2562
      %2564 = vrot.lane.b32.xlu0 %v2547, 77
      %v2565 = vpop.permute.xlu0 %2564
      %vm2566 = vcmask 629760
      %v2567 = vsel %vm2566, %v2555, %v2557
      %v2568 = vsel %vm2566, %v2557, %v2559
      %v2569 = vsel %vm2566, %v2561, %v2563
      %v2570 = vsel %vm2566, %v2563, %v2565
      %v2577 = vadd.f32 %v2523, %v2555
      %v2578 = vadd.f32 %v2524, %v2567
      %v2579 = vadd.f32 %v2525, %v2568
      %v2580 = vadd.f32 %v2526, %v2561
      %v2581 = vadd.f32 %v2527, %v2569
      %v2582 = vadd.f32 %v2528, %v2570
      %s2583 = scalar_lea.vmem %s6, 304
      %v2584 = vld [vmem:[%s2583] sm:$0xff]
      %v2585 = vld [vmem:[%s2583 + $0x8] sm:$0xff]
      %2587 = vset.pattern.permute.xlu0 0
      %2588 = vperm.xlu0 %2587, %v2584
      %v2589 = vpop.permute.xlu0 %2588
      %2592 = vset.pattern.permute.xlu0 0
      %2593 = vperm.xlu0 %2592, %v2585
      %v2594 = vpop.permute.xlu0 %2593
      %v2596 = vmul.f32 %v2289, %v2589
      %v2597 = vmul.f32 %v2290, %v2589
      %v2598 = vmul.f32 %v2291, %v2589
      %v2599 = vmul.f32 %v2292, %v2594
      %v2600 = vmul.f32 %v2293, %v2594
      %v2601 = vmul.f32 %v2294, %v2594
      %2608 = vrot.lane.b32.xlu0 %v2596, 76
      %v2609 = vpop.permute.xlu0 %2608
      %2610 = vrot.lane.b32.xlu0 %v2597, 76
      %v2611 = vpop.permute.xlu0 %2610
      %2612 = vrot.lane.b32.xlu0 %v2598, 76
      %v2613 = vpop.permute.xlu0 %2612
      %2614 = vrot.lane.b32.xlu0 %v2599, 76
      %v2615 = vpop.permute.xlu0 %2614
      %2616 = vrot.lane.b32.xlu0 %v2600, 76
      %v2617 = vpop.permute.xlu0 %2616
      %2618 = vrot.lane.b32.xlu0 %v2601, 76
      %v2619 = vpop.permute.xlu0 %2618
      %vm2620 = vcmask 621568
      %v2621 = vsel %vm2620, %v2609, %v2611
      %v2622 = vsel %vm2620, %v2611, %v2613
      %v2623 = vsel %vm2620, %v2615, %v2617
      %v2624 = vsel %vm2620, %v2617, %v2619
      %v2631 = vadd.f32 %v2577, %v2609
      %v2632 = vadd.f32 %v2578, %v2621
      %v2633 = vadd.f32 %v2579, %v2622
      %v2634 = vadd.f32 %v2580, %v2615
      %v2635 = vadd.f32 %v2581, %v2623
      %v2636 = vadd.f32 %v2582, %v2624
      %s2637 = scalar_lea.vmem %s6, 320
      %v2638 = vld [vmem:[%s2637] sm:$0xff]
      %v2639 = vld [vmem:[%s2637 + $0x8] sm:$0xff]
      %2641 = vset.pattern.permute.xlu0 0
      %2642 = vperm.xlu0 %2641, %v2638
      %v2643 = vpop.permute.xlu0 %2642
      %2646 = vset.pattern.permute.xlu0 0
      %2647 = vperm.xlu0 %2646, %v2639
      %v2648 = vpop.permute.xlu0 %2647
      %v2650 = vmul.f32 %v2349, %v2643
      %v2651 = vmul.f32 %v2350, %v2643
      %v2652 = vmul.f32 %v2351, %v2643
      %v2653 = vmul.f32 %v2352, %v2648
      %v2654 = vmul.f32 %v2353, %v2648
      %v2655 = vmul.f32 %v2354, %v2648
      %2662 = vrot.lane.b32.xlu0 %v2650, 64
      %v2663 = vpop.permute.xlu0 %2662
      %2664 = vrot.lane.b32.xlu0 %v2651, 64
      %v2665 = vpop.permute.xlu0 %2664
      %2666 = vrot.lane.b32.xlu0 %v2652, 64
      %v2667 = vpop.permute.xlu0 %2666
      %2668 = vrot.lane.b32.xlu0 %v2653, 64
      %v2669 = vpop.permute.xlu0 %2668
      %2670 = vrot.lane.b32.xlu0 %v2654, 64
      %v2671 = vpop.permute.xlu0 %2670
      %2672 = vrot.lane.b32.xlu0 %v2655, 64
      %v2673 = vpop.permute.xlu0 %2672
      %vm2674 = vcmask 523264
      %v2675 = vsel %vm2674, %v2663, %v2665
      %v2676 = vsel %vm2674, %v2665, %v2667
      %v2677 = vsel %vm2674, %v2669, %v2671
      %v2678 = vsel %vm2674, %v2671, %v2673
      %v2685 = vadd.f32 %v2631, %v2663
      %v2686 = vadd.f32 %v2632, %v2675
      %v2687 = vadd.f32 %v2633, %v2676
      %v2688 = vadd.f32 %v2634, %v2669
      %v2689 = vadd.f32 %v2635, %v2677
      %v2690 = vadd.f32 %v2636, %v2678
      %s2691 = scalar_lea.vmem %s6, 336
      %v2692 = vld [vmem:[%s2691] sm:$0xff]
      %v2693 = vld [vmem:[%s2691 + $0x8] sm:$0xff]
      %2695 = vset.pattern.permute.xlu0 0
      %2696 = vperm.xlu0 %2695, %v2692
      %v2697 = vpop.permute.xlu0 %2696
      %2700 = vset.pattern.permute.xlu0 0
      %2701 = vperm.xlu0 %2700, %v2693
      %v2702 = vpop.permute.xlu0 %2701
      %v2704 = vmul.f32 %v2409, %v2697
      %v2705 = vmul.f32 %v2410, %v2697
      %v2706 = vmul.f32 %v2411, %v2697
      %v2707 = vmul.f32 %v2412, %v2702
      %v2708 = vmul.f32 %v2413, %v2702
      %v2709 = vmul.f32 %v2414, %v2702
      %2716 = vrot.lane.b32.xlu0 %v2704, 63
      %v2717 = vpop.permute.xlu0 %2716
      %2718 = vrot.lane.b32.xlu0 %v2705, 63
      %v2719 = vpop.permute.xlu0 %2718
      %2720 = vrot.lane.b32.xlu0 %v2706, 63
      %v2721 = vpop.permute.xlu0 %2720
      %2722 = vrot.lane.b32.xlu0 %v2707, 63
      %v2723 = vpop.permute.xlu0 %2722
      %2724 = vrot.lane.b32.xlu0 %v2708, 63
      %v2725 = vpop.permute.xlu0 %2724
      %2726 = vrot.lane.b32.xlu0 %v2709, 63
      %v2727 = vpop.permute.xlu0 %2726
      %vm2728 = vcmask 515072
      %v2729 = vsel %vm2728, %v2717, %v2719
      %v2730 = vsel %vm2728, %v2719, %v2721
      %v2731 = vsel %vm2728, %v2723, %v2725
      %v2732 = vsel %vm2728, %v2725, %v2727
      %v2739 = vadd.f32 %v2685, %v2717
      %v2740 = vadd.f32 %v2686, %v2729
      %v2741 = vadd.f32 %v2687, %v2730
      %v2742 = vadd.f32 %v2688, %v2723
      %v2743 = vadd.f32 %v2689, %v2731
      %v2744 = vadd.f32 %v2690, %v2732
      %s2745 = scalar_lea.vmem %s6, 352
      %v2746 = vld [vmem:[%s2745] sm:$0xff]
      %v2747 = vld [vmem:[%s2745 + $0x8] sm:$0xff]
      %2749 = vset.pattern.permute.xlu0 0
      %2750 = vperm.xlu0 %2749, %v2746
      %v2751 = vpop.permute.xlu0 %2750
      %2754 = vset.pattern.permute.xlu0 0
      %2755 = vperm.xlu0 %2754, %v2747
      %v2756 = vpop.permute.xlu0 %2755
      %v2758 = vmul.f32 %v2469, %v2751
      %v2759 = vmul.f32 %v2470, %v2751
      %v2760 = vmul.f32 %v2471, %v2751
      %v2761 = vmul.f32 %v2472, %v2756
      %v2762 = vmul.f32 %v2473, %v2756
      %v2763 = vmul.f32 %v2474, %v2756
      %2770 = vrot.lane.b32.xlu0 %v2758, 62
      %v2771 = vpop.permute.xlu0 %2770
      %2772 = vrot.lane.b32.xlu0 %v2759, 62
      %v2773 = vpop.permute.xlu0 %2772
      %2774 = vrot.lane.b32.xlu0 %v2760, 62
      %v2775 = vpop.permute.xlu0 %2774
      %2776 = vrot.lane.b32.xlu0 %v2761, 62
      %v2777 = vpop.permute.xlu0 %2776
      %2778 = vrot.lane.b32.xlu0 %v2762, 62
      %v2779 = vpop.permute.xlu0 %2778
      %2780 = vrot.lane.b32.xlu0 %v2763, 62
      %v2781 = vpop.permute.xlu0 %2780
      %vm2782 = vcmask 506880
      %v2783 = vsel %vm2782, %v2771, %v2773
      %v2784 = vsel %vm2782, %v2773, %v2775
      %v2785 = vsel %vm2782, %v2777, %v2779
      %v2786 = vsel %vm2782, %v2779, %v2781
      %v2793 = vadd.f32 %v2739, %v2771
      %v2794 = vadd.f32 %v2740, %v2783
      %v2795 = vadd.f32 %v2741, %v2784
      %v2796 = vadd.f32 %v2742, %v2777
      %v2797 = vadd.f32 %v2743, %v2785
      %v2798 = vadd.f32 %v2744, %v2786
      %s2799 = scalar_lea.vmem %s6, 368
      %v2800 = vld [vmem:[%s2799] sm:$0xff]
      %v2801 = vld [vmem:[%s2799 + $0x8] sm:$0xff]
      %2803 = vset.pattern.permute.xlu0 0
      %2804 = vperm.xlu0 %2803, %v2800
      %v2805 = vpop.permute.xlu0 %2804
      %2808 = vset.pattern.permute.xlu0 0
      %2809 = vperm.xlu0 %2808, %v2801
      %v2810 = vpop.permute.xlu0 %2809
      %v2812 = vmul.f32 %v2229, %v2805
      %v2813 = vmul.f32 %v2230, %v2805
      %v2814 = vmul.f32 %v2231, %v2805
      %v2815 = vmul.f32 %v2232, %v2810
      %v2816 = vmul.f32 %v2233, %v2810
      %v2817 = vmul.f32 %v2234, %v2810
      %2824 = vrot.lane.b32.xlu0 %v2812, 61
      %v2825 = vpop.permute.xlu0 %2824
      %2826 = vrot.lane.b32.xlu0 %v2813, 61
      %v2827 = vpop.permute.xlu0 %2826
      %2828 = vrot.lane.b32.xlu0 %v2814, 61
      %v2829 = vpop.permute.xlu0 %2828
      %2830 = vrot.lane.b32.xlu0 %v2815, 61
      %v2831 = vpop.permute.xlu0 %2830
      %2832 = vrot.lane.b32.xlu0 %v2816, 61
      %v2833 = vpop.permute.xlu0 %2832
      %2834 = vrot.lane.b32.xlu0 %v2817, 61
      %v2835 = vpop.permute.xlu0 %2834
      %vm2836 = vcmask 498688
      %v2837 = vsel %vm2836, %v2825, %v2827
      %v2838 = vsel %vm2836, %v2827, %v2829
      %v2839 = vsel %vm2836, %v2831, %v2833
      %v2840 = vsel %vm2836, %v2833, %v2835
      %v2847 = vadd.f32 %v2793, %v2825
      %v2848 = vadd.f32 %v2794, %v2837
      %v2849 = vadd.f32 %v2795, %v2838
      %v2850 = vadd.f32 %v2796, %v2831
      %v2851 = vadd.f32 %v2797, %v2839
      %v2852 = vadd.f32 %v2798, %v2840
      %s2853 = scalar_lea.vmem %s6, 384
      %v2854 = vld [vmem:[%s2853] sm:$0xff]
      %v2855 = vld [vmem:[%s2853 + $0x8] sm:$0xff]
      %2857 = vset.pattern.permute.xlu0 0
      %2858 = vperm.xlu0 %2857, %v2854
      %v2859 = vpop.permute.xlu0 %2858
      %2862 = vset.pattern.permute.xlu0 0
      %2863 = vperm.xlu0 %2862, %v2855
      %v2864 = vpop.permute.xlu0 %2863
      %v2866 = vmul.f32 %v2289, %v2859
      %v2867 = vmul.f32 %v2290, %v2859
      %v2868 = vmul.f32 %v2291, %v2859
      %v2869 = vmul.f32 %v2292, %v2864
      %v2870 = vmul.f32 %v2293, %v2864
      %v2871 = vmul.f32 %v2294, %v2864
      %2878 = vrot.lane.b32.xlu0 %v2866, 60
      %v2879 = vpop.permute.xlu0 %2878
      %2880 = vrot.lane.b32.xlu0 %v2867, 60
      %v2881 = vpop.permute.xlu0 %2880
      %2882 = vrot.lane.b32.xlu0 %v2868, 60
      %v2883 = vpop.permute.xlu0 %2882
      %2884 = vrot.lane.b32.xlu0 %v2869, 60
      %v2885 = vpop.permute.xlu0 %2884
      %2886 = vrot.lane.b32.xlu0 %v2870, 60
      %v2887 = vpop.permute.xlu0 %2886
      %2888 = vrot.lane.b32.xlu0 %v2871, 60
      %v2889 = vpop.permute.xlu0 %2888
      %vm2890 = vcmask 490496
      %v2891 = vsel %vm2890, %v2879, %v2881
      %v2892 = vsel %vm2890, %v2881, %v2883
      %v2893 = vsel %vm2890, %v2885, %v2887
      %v2894 = vsel %vm2890, %v2887, %v2889
      %v2901 = vadd.f32 %v2847, %v2879
      %v2902 = vadd.f32 %v2848, %v2891
      %v2903 = vadd.f32 %v2849, %v2892
      %v2904 = vadd.f32 %v2850, %v2885
      %v2905 = vadd.f32 %v2851, %v2893
      %v2906 = vadd.f32 %v2852, %v2894
      %v2907 = vld [vmem:[%s7] sm:$0xff]
      %v2908 = vld [vmem:[%s7 + $0x8] sm:$0xff]
      %2910 = vset.pattern.permute.xlu0 0
      %2911 = vperm.xlu0 %2910, %v2907
      %v2912 = vpop.permute.xlu0 %2911
      %2915 = vset.pattern.permute.xlu0 0
      %2916 = vperm.xlu0 %2915, %v2908
      %v2917 = vpop.permute.xlu0 %2916
      %v2919 = vadd.f32 %v2901, %v2912
      %v2920 = vadd.f32 %v2902, %v2912
      %v2921 = vadd.f32 %v2903, %v2912
      %v2922 = vadd.f32 %v2904, %v2917
      %v2923 = vadd.f32 %v2905, %v2917
      %v2924 = vadd.f32 %v2906, %v2917
      %v2925 = vmax.f32 %v2919, 0.0
      %v2926 = vmax.f32 %v2920, 0.0
      %v2927 = vmax.f32 %v2921, 0.0
      %v2928 = vmax.f32 %v2922, 0.0
      %v2929 = vmax.f32 %v2923, 0.0
      %v2930 = vmax.f32 %v2924, 0.0
      %v2931 = vld [vmem:[%s8] sm:$0xff]
      %v2932 = vld [vmem:[%s8 + $0x8] sm:$0xff]
      %v2933 = vld [vmem:[%s9] sm:$0xff]
      %v2934 = vld [vmem:[%s9 + $0x8] sm:$0xff]
      %2936 = vset.pattern.permute.xlu0 0
      %2937 = vperm.xlu0 %2936, %v2933
      %v2938 = vpop.permute.xlu0 %2937
      %2941 = vset.pattern.permute.xlu0 0
      %2942 = vperm.xlu0 %2941, %v2934
      %v2943 = vpop.permute.xlu0 %2942
      %2951 = vrot.lane.b32.xlu0 %v2925, 34
      %v2952 = vpop.permute.xlu0 %2951
      %2953 = vrot.lane.b32.xlu0 %v2926, 34
      %v2954 = vpop.permute.xlu0 %2953
      %2955 = vrot.lane.b32.xlu0 %v2927, 34
      %v2956 = vpop.permute.xlu0 %2955
      %2957 = vrot.lane.b32.xlu0 %v2928, 34
      %v2958 = vpop.permute.xlu0 %2957
      %2959 = vrot.lane.b32.xlu0 %v2929, 34
      %v2960 = vpop.permute.xlu0 %2959
      %2961 = vrot.lane.b32.xlu0 %v2930, 34
      %v2962 = vpop.permute.xlu0 %2961
      %vm2963 = vcmask 277504
      %v2964 = vsel %vm2963, %v2952, %v2954
      %v2965 = vsel %vm2963, %v2954, %v2956
      %v2966 = vsel %vm2963, %v2958, %v2960
      %v2967 = vsel %vm2963, %v2960, %v2962
      %v2973 = vsel %vm628, %v2931, 0
      %v2976 = vsel %vm628, %v2932, 0
      %2978 = vmatprep.subr.mxu0 0.0
      %2979 = vmatpush1.msra.mxu0 0.0
      %2980 = vmatprep.subr.mxu0 0.0
      %2981 = vmatpush1.msra.mxu0 0.0
      %2982 = vmatprep.subr.mxu0 0.0
      %2983 = vmatpush1.msra.mxu0 0.0
      %2984 = vmatprep.subr.mxu0 0.0
      %2985 = vmatpush1.msra.mxu0 0.0
      %2986 = vmatprep.subr.mxu0 0.0
      %2987 = vmatpush1.msra.mxu0 0.0
      %2988 = vmatprep.subr.mxu0 0.0
      %2989 = vmatpush1.msra.mxu0 0.0
      %2990 = vmatprep.subr.mxu0 0.0
      %2991 = vmatpush1.msra.mxu0 0.0
      %2992 = vmatprep.subr.mxu0 0.0
      %2993 = vmatpush1.msra.mxu0 0.0
      %2994 = vmatprep.subr.mxu0 0.0
      %2995 = vmatpush1.msra.mxu0 0.0
      %2996 = vmatprep.subr.mxu0 0.0
      %2997 = vmatpush1.msra.mxu0 0.0
      %2998 = vmatprep.subr.mxu0 0.0
      %2999 = vmatpush1.msra.mxu0 0.0
      %3000 = vmatprep.subr.mxu0 0.0
      %3001 = vmatpush1.msra.mxu0 0.0
      %3002 = vmatprep.subr.mxu0 0.0
      %3003 = vmatpush1.msra.mxu0 0.0
      %3004 = vmatprep.subr.mxu0 0.0
      %3005 = vmatpush1.msra.mxu0 0.0
      %3006 = vmatprep.subr.mxu0 %v2967
      %3007 = vmatpush1.msra.mxu0 %v2966
      %3008 = vmatprep.subr.mxu0 %v2965
      %3009 = vmatpush1.msra.mxu0 %v2964
      %3010 = vmatprep.subr.mxu0 0.0
      %3011 = vmatpush2.msra.mxu0 0.0
      %3012 = vmatprep.subr.mxu0 0.0
      %3013 = vmatpush2.msra.mxu0 0.0
      %3014 = vmatprep.subr.mxu0 0.0
      %3015 = vmatpush2.msra.mxu0 0.0
      %3016 = vmatprep.subr.mxu0 0.0
      %3017 = vmatpush2.msra.mxu0 0.0
      %3018 = vmatprep.subr.mxu0 0.0
      %3019 = vmatpush2.msra.mxu0 0.0
      %3020 = vmatprep.subr.mxu0 0.0
      %3021 = vmatpush2.msra.mxu0 0.0
      %3022 = vmatprep.subr.mxu0 0.0
      %3023 = vmatpush2.msra.mxu0 0.0
      %3024 = vmatprep.subr.mxu0 0.0
      %3025 = vmatpush2.msra.mxu0 0.0
      %3026 = vmatprep.subr.mxu0 0.0
      %3027 = vmatpush2.msra.mxu0 0.0
      %3028 = vmatprep.subr.mxu0 0.0
      %3029 = vmatpush2.msra.mxu0 0.0
      %3030 = vmatprep.subr.mxu0 0.0
      %3031 = vmatpush2.msra.mxu0 0.0
      %3032 = vmatprep.subr.mxu0 0.0
      %3033 = vmatpush2.msra.mxu0 0.0
      %3034 = vmatprep.subr.mxu0 0.0
      %3035 = vmatpush2.msra.mxu0 0.0
      %3036 = vmatprep.subr.mxu0 0.0
      %3037 = vmatpush2.msra.mxu0 0.0
      %3038 = vmatprep.subr.mxu0 0.0
      %3039 = vmatpush2.msra.mxu0 0.0
      %3040 = vmatprep.subr.mxu0 0.0
      %3041 = vmatpush2.msra.mxu0 0.0
      %3042 = vmatprep.mubr.f32.mxu0 0.0
      %3043 = vmatmul.mubr.f32.gmra.mxu0 %v2973
      %v3044 = vpop.f32.mrf.mxu0
      %v3045 = vadd.f32 %v2938, %v3044
      %v3046 = vpop.f32.mrf.mxu0
      %v3047 = vadd.f32 %v2938, %v3046
      %3048 = vmatprep.mubr.f32.mxu0 0.0
      %3049 = vmatmul.mubr.f32.gmra.mxu0 %v2976
      %v3050 = vpop.f32.mrf.mxu0
      %v3051 = vadd.f32 %v2943, %v3050
      %v3052 = vpop.f32.mrf.mxu0
      %v3053 = vadd.f32 %v2943, %v3052
      %3054 = vdwg.mxu0
      %v3055 = vmax.f32 %v3045, 0.0
      %v3056 = vmax.f32 %v3047, 0.0
      %v3057 = vmax.f32 %v3051, 0.0
      %v3058 = vmax.f32 %v3053, 0.0
      %v3059 = vadd.f32 %v782, %v3055
      %v3060 = vadd.f32 %v783, %v3056
      %v3061 = vadd.f32 %v784, %v3057
      %v3062 = vadd.f32 %v785, %v3058
      %v3063 = vld [vmem:[%s786] sm:$0x3]
      %v3065 = vlaneseq
      %v3066 = vshrl.u32 %v3065, 7
      %v3067 = vsub.s32 0, %v3066
      %v3068 = vrot.slane %v3063, %v3067
      %v3069 = vlaneseq
      %v3070 = vshrl.u32 %v3069, 7
      %v3071 = vsub.s32 1, %v3070
      %v3072 = vrot.slane %v3063, %v3071
      %v3075 = vmul.f32 %v3059, %v3068
      %v3076 = vmul.f32 %v3060, %v3072
      %v3077 = vmul.f32 %v3061, %v3068
      %v3078 = vmul.f32 %v3062, %v3072
      %3079 = vst [vmem:[#allocation2 + $0x48] sm:$0xff] %v3075
      %3080 = vst [vmem:[#allocation2 + $0x50] sm:$0xff] %v3076
      %3081 = vst [vmem:[#allocation2 + $0x68] sm:$0xff] %v3077
      %3082 = vst [vmem:[#allocation2 + $0x70] sm:$0xff] %v3078
      %3083 = vst [vmem:[#allocation2 + $0x88] sm:$0xff] %v3059
      %3084 = vst [vmem:[#allocation2 + $0x90] sm:$0xff] %v3060
      %3085 = vst [vmem:[#allocation2 + $0xa8] sm:$0xff] %v3061
      %3086 = vst [vmem:[#allocation2 + $0xb0] sm:$0xff] %v3062
      %v3087 = vld [vmem:[%s811] sm:$0x3]
      %v3089 = vlaneseq
      %v3090 = vshrl.u32 %v3089, 7
      %v3091 = vsub.s32 0, %v3090
      %v3092 = vrot.slane %v3087, %v3091
      %v3093 = vlaneseq
      %v3094 = vshrl.u32 %v3093, 7
      %v3095 = vsub.s32 1, %v3094
      %v3096 = vrot.slane %v3087, %v3095
      %v3099 = vmul.f32 %v3059, %v3092
      %v3100 = vmul.f32 %v3060, %v3096
      %v3101 = vmul.f32 %v3061, %v3092
      %v3102 = vmul.f32 %v3062, %v3096
      %3103 = vst [vmem:[#allocation2 + $0xc8] sm:$0xff] %v3099
      %3104 = vst [vmem:[#allocation2 + $0xd0] sm:$0xff] %v3100
      %3105 = vst [vmem:[#allocation2 + $0xe8] sm:$0xff] %v3101
      %3106 = vst [vmem:[#allocation2 + $0xf0] sm:$0xff] %v3102
      %v3107 = vld [vmem:[#allocation2 + $0x40] sm:$0xff]
      %v3108 = vld [vmem:[#allocation2 + $0x48] sm:$0xff]
      %v3109 = vld [vmem:[#allocation2 + $0x50] sm:$0xff]
      %v3110 = vld [vmem:[#allocation2 + $0x60] sm:$0xff]
      %v3111 = vld [vmem:[#allocation2 + $0x68] sm:$0xff]
      %v3112 = vld [vmem:[#allocation2 + $0x70] sm:$0xff]
      %v3113 = vld [vmem:[#allocation2 + $0x58] sm:$0xff]
      %v3114 = vld [vmem:[#allocation2 + $0x78] sm:$0xff]
      %3121 = vrot.lane.b32.xlu0 %v3107, 112
      %v3122 = vpop.permute.xlu0 %3121
      %3123 = vrot.lane.b32.xlu0 %v3108, 112
      %v3124 = vpop.permute.xlu0 %3123
      %3125 = vrot.lane.b32.xlu0 %v3109, 112
      %v3126 = vpop.permute.xlu0 %3125
      %3127 = vrot.lane.b32.xlu0 %v3110, 112
      %v3128 = vpop.permute.xlu0 %3127
      %3129 = vrot.lane.b32.xlu0 %v3111, 112
      %v3130 = vpop.permute.xlu0 %3129
      %3131 = vrot.lane.b32.xlu0 %v3112, 112
      %v3132 = vpop.permute.xlu0 %3131
      %v3133 = vsel %vm858, %v3122, %v3124
      %v3134 = vsel %vm858, %v3124, %v3126
      %v3135 = vsel %vm858, %v3128, %v3130
      %v3136 = vsel %vm858, %v3130, %v3132
      %3139 = vrot.lane.b32.xlu0 %v3108, 96
      %v3140 = vpop.permute.xlu0 %3139
      %3141 = vrot.lane.b32.xlu0 %v3109, 96
      %v3142 = vpop.permute.xlu0 %3141
      %3143 = vrot.lane.b32.xlu0 %v3113, 96
      %v3144 = vpop.permute.xlu0 %3143
      %3145 = vrot.lane.b32.xlu0 %v3111, 96
      %v3146 = vpop.permute.xlu0 %3145
      %3147 = vrot.lane.b32.xlu0 %v3112, 96
      %v3148 = vpop.permute.xlu0 %3147
      %3149 = vrot.lane.b32.xlu0 %v3114, 96
      %v3150 = vpop.permute.xlu0 %3149
      %v3151 = vsel %vm877, %v3140, %v3142
      %v3152 = vsel %vm877, %v3142, %v3144
      %v3153 = vsel %vm877, %v3146, %v3148
      %v3154 = vsel %vm877, %v3148, %v3150
      %v3155 = vld [vmem:[%s10] sm:$0xff]
      %v3156 = vld [vmem:[%s10 + $0x8] sm:$0xff]
      %v3157 = vld [vmem:[#allocation2 + $0x80] sm:$0xff]
      %v3158 = vld [vmem:[#allocation2 + $0x88] sm:$0xff]
      %v3159 = vld [vmem:[#allocation2 + $0x90] sm:$0xff]
      %v3160 = vld [vmem:[#allocation2 + $0xa0] sm:$0xff]
      %v3161 = vld [vmem:[#allocation2 + $0xa8] sm:$0xff]
      %v3162 = vld [vmem:[#allocation2 + $0xb0] sm:$0xff]
      %v3163 = vld [vmem:[#allocation2 + $0x98] sm:$0xff]
      %v3164 = vld [vmem:[#allocation2 + $0xb8] sm:$0xff]
      %3169 = vrot.lane.b32.xlu0 %v3158, 112
      %v3170 = vpop.permute.xlu0 %3169
      %3171 = vrot.lane.b32.xlu0 %v3159, 112
      %v3172 = vpop.permute.xlu0 %3171
      %3173 = vrot.lane.b32.xlu0 %v3161, 112
      %v3174 = vpop.permute.xlu0 %3173
      %3175 = vrot.lane.b32.xlu0 %v3162, 112
      %v3176 = vpop.permute.xlu0 %3175
      %v3177 = vsel %vm858, %v3170, %v3172
      %v3178 = vsel %vm858, %v3174, %v3176
      %3181 = vrot.lane.b32.xlu0 %v3158, 96
      %v3182 = vpop.permute.xlu0 %3181
      %3183 = vrot.lane.b32.xlu0 %v3159, 96
      %v3184 = vpop.permute.xlu0 %3183
      %3185 = vrot.lane.b32.xlu0 %v3163, 96
      %v3186 = vpop.permute.xlu0 %3185
      %3187 = vrot.lane.b32.xlu0 %v3161, 96
      %v3188 = vpop.permute.xlu0 %3187
      %3189 = vrot.lane.b32.xlu0 %v3162, 96
      %v3190 = vpop.permute.xlu0 %3189
      %3191 = vrot.lane.b32.xlu0 %v3164, 96
      %v3192 = vpop.permute.xlu0 %3191
      %v3193 = vsel %vm877, %v3182, %v3184
      %v3194 = vsel %vm877, %v3184, %v3186
      %v3195 = vsel %vm877, %v3188, %v3190
      %v3196 = vsel %vm877, %v3190, %v3192
      %s3197 = scalar_lea.vmem %s10, 16
      %v3198 = vld [vmem:[%s3197] sm:$0xff]
      %v3199 = vld [vmem:[%s3197 + $0x8] sm:$0xff]
      %3202 = vrot.lane.b32.xlu0 %v3157, 16
      %v3203 = vpop.permute.xlu0 %3202
      %3204 = vrot.lane.b32.xlu0 %v3158, 16
      %v3205 = vpop.permute.xlu0 %3204
      %3206 = vrot.lane.b32.xlu0 %v3159, 16
      %v3207 = vpop.permute.xlu0 %3206
      %3208 = vrot.lane.b32.xlu0 %v3160, 16
      %v3209 = vpop.permute.xlu0 %3208
      %3210 = vrot.lane.b32.xlu0 %v3161, 16
      %v3211 = vpop.permute.xlu0 %3210
      %3212 = vrot.lane.b32.xlu0 %v3162, 16
      %v3213 = vpop.permute.xlu0 %3212
      %3214 = vrot.lane.b32.xlu0 %v3170, 16
      %v3215 = vpop.permute.xlu0 %3214
      %3216 = vrot.lane.b32.xlu0 %v3177, 16
      %v3217 = vpop.permute.xlu0 %3216
      %3218 = vrot.lane.b32.xlu0 %v3172, 16
      %v3219 = vpop.permute.xlu0 %3218
      %3220 = vrot.lane.b32.xlu0 %v3174, 16
      %v3221 = vpop.permute.xlu0 %3220
      %3222 = vrot.lane.b32.xlu0 %v3178, 16
      %v3223 = vpop.permute.xlu0 %3222
      %3224 = vrot.lane.b32.xlu0 %v3176, 16
      %v3225 = vpop.permute.xlu0 %3224
      %3226 = vrot.lane.b32.xlu0 %v3182, 16
      %v3227 = vpop.permute.xlu0 %3226
      %3228 = vrot.lane.b32.xlu0 %v3193, 16
      %v3229 = vpop.permute.xlu0 %3228
      %3230 = vrot.lane.b32.xlu0 %v3194, 16
      %v3231 = vpop.permute.xlu0 %3230
      %3232 = vrot.lane.b32.xlu0 %v3188, 16
      %v3233 = vpop.permute.xlu0 %3232
      %3234 = vrot.lane.b32.xlu0 %v3195, 16
      %v3235 = vpop.permute.xlu0 %3234
      %3236 = vrot.lane.b32.xlu0 %v3196, 16
      %v3237 = vpop.permute.xlu0 %3236
      %v3238 = vsel %vm628, %v3203, %v3205
      %v3239 = vsel %vm628, %v3205, %v3207
      %v3240 = vsel %vm628, %v3209, %v3211
      %v3241 = vsel %vm628, %v3211, %v3213
      %v3242 = vsel %vm628, %v3215, %v3217
      %v3243 = vsel %vm628, %v3217, %v3219
      %v3244 = vsel %vm628, %v3221, %v3223
      %v3245 = vsel %vm628, %v3223, %v3225
      %v3246 = vsel %vm628, %v3227, %v3229
      %v3247 = vsel %vm628, %v3229, %v3231
      %v3248 = vsel %vm628, %v3233, %v3235
      %v3249 = vsel %vm628, %v3235, %v3237
      %v3263 = vsel %vm989, %v3198, 0
      %v3266 = vsel %vm989, %v3199, 0
      %3268 = vmatprep.subr.mxu0 0.0
      %3269 = vmatpush1.msra.mxu0 0.0
      %3270 = vmatprep.subr.mxu0 0.0
      %3271 = vmatpush1.msra.mxu0 0.0
      %3272 = vmatprep.subr.mxu0 0.0
      %3273 = vmatpush1.msra.mxu0 0.0
      %3274 = vmatprep.subr.mxu0 0.0
      %3275 = vmatpush1.msra.mxu0 0.0
      %3276 = vmatprep.subr.mxu0 0.0
      %3277 = vmatpush1.msra.mxu0 0.0
      %3278 = vmatprep.subr.mxu0 0.0
      %3279 = vmatpush1.msra.mxu0 0.0
      %3280 = vmatprep.subr.mxu0 0.0
      %3281 = vmatpush1.msra.mxu0 0.0
      %3282 = vmatprep.subr.mxu0 0.0
      %3283 = vmatpush1.msra.mxu0 0.0
      %3284 = vmatprep.subr.mxu0 0.0
      %3285 = vmatpush1.msra.mxu0 0.0
      %3286 = vmatprep.subr.mxu0 0.0
      %3287 = vmatpush1.msra.mxu0 0.0
      %3288 = vmatprep.subr.mxu0 %v3249
      %3289 = vmatpush1.msra.mxu0 %v3248
      %3290 = vmatprep.subr.mxu0 %v3247
      %3291 = vmatpush1.msra.mxu0 %v3246
      %3292 = vmatprep.subr.mxu0 %v3245
      %3293 = vmatpush1.msra.mxu0 %v3244
      %3294 = vmatprep.subr.mxu0 %v3243
      %3295 = vmatpush1.msra.mxu0 %v3242
      %3296 = vmatprep.subr.mxu0 %v3241
      %3297 = vmatpush1.msra.mxu0 %v3240
      %3298 = vmatprep.subr.mxu0 %v3239
      %3299 = vmatpush1.msra.mxu0 %v3238
      %3300 = vmatprep.subr.mxu0 0.0
      %3301 = vmatpush2.msra.mxu0 0.0
      %3302 = vmatprep.subr.mxu0 0.0
      %3303 = vmatpush2.msra.mxu0 0.0
      %3304 = vmatprep.subr.mxu0 0.0
      %3305 = vmatpush2.msra.mxu0 0.0
      %3306 = vmatprep.subr.mxu0 0.0
      %3307 = vmatpush2.msra.mxu0 0.0
      %3308 = vmatprep.subr.mxu0 0.0
      %3309 = vmatpush2.msra.mxu0 0.0
      %3310 = vmatprep.subr.mxu0 0.0
      %3311 = vmatpush2.msra.mxu0 0.0
      %3312 = vmatprep.subr.mxu0 0.0
      %3313 = vmatpush2.msra.mxu0 0.0
      %3314 = vmatprep.subr.mxu0 0.0
      %3315 = vmatpush2.msra.mxu0 0.0
      %3316 = vmatprep.subr.mxu0 0.0
      %3317 = vmatpush2.msra.mxu0 0.0
      %3318 = vmatprep.subr.mxu0 0.0
      %3319 = vmatpush2.msra.mxu0 0.0
      %3320 = vmatprep.subr.mxu0 0.0
      %3321 = vmatpush2.msra.mxu0 0.0
      %3322 = vmatprep.subr.mxu0 0.0
      %3323 = vmatpush2.msra.mxu0 0.0
      %3324 = vmatprep.subr.mxu0 0.0
      %3325 = vmatpush2.msra.mxu0 0.0
      %3326 = vmatprep.subr.mxu0 0.0
      %3327 = vmatpush2.msra.mxu0 0.0
      %3328 = vmatprep.subr.mxu0 0.0
      %3329 = vmatpush2.msra.mxu0 0.0
      %3330 = vmatprep.subr.mxu0 0.0
      %3331 = vmatpush2.msra.mxu0 0.0
      %3332 = vmatprep.mubr.f32.mxu0 0.0
      %3333 = vmatmul.mubr.f32.gmra.mxu0 %v3263
      %v3334 = vpop.f32.mrf.mxu0
      %v3335 = vadd.f32 0.0, %v3334
      %v3336 = vpop.f32.mrf.mxu0
      %v3337 = vadd.f32 0.0, %v3336
      %3338 = vmatprep.mubr.f32.mxu0 0.0
      %3339 = vmatmul.mubr.f32.gmra.mxu0 %v3266
      %v3340 = vpop.f32.mrf.mxu0
      %v3341 = vadd.f32 0.0, %v3340
      %v3342 = vpop.f32.mrf.mxu0
      %v3343 = vadd.f32 0.0, %v3342
      %3344 = vdwg.mxu0
      %3345 = vrot.lane.b32.xlu0 %v3107, 17
      %v3346 = vpop.permute.xlu0 %3345
      %3347 = vrot.lane.b32.xlu0 %v3108, 17
      %v3348 = vpop.permute.xlu0 %3347
      %3349 = vrot.lane.b32.xlu0 %v3109, 17
      %v3350 = vpop.permute.xlu0 %3349
      %3351 = vrot.lane.b32.xlu0 %v3110, 17
      %v3352 = vpop.permute.xlu0 %3351
      %3353 = vrot.lane.b32.xlu0 %v3111, 17
      %v3354 = vpop.permute.xlu0 %3353
      %3355 = vrot.lane.b32.xlu0 %v3112, 17
      %v3356 = vpop.permute.xlu0 %3355
      %3357 = vrot.lane.b32.xlu0 %v3133, 17
      %v3358 = vpop.permute.xlu0 %3357
      %3359 = vrot.lane.b32.xlu0 %v3134, 17
      %v3360 = vpop.permute.xlu0 %3359
      %3361 = vrot.lane.b32.xlu0 %v3126, 17
      %v3362 = vpop.permute.xlu0 %3361
      %3363 = vrot.lane.b32.xlu0 %v3135, 17
      %v3364 = vpop.permute.xlu0 %3363
      %3365 = vrot.lane.b32.xlu0 %v3136, 17
      %v3366 = vpop.permute.xlu0 %3365
      %3367 = vrot.lane.b32.xlu0 %v3132, 17
      %v3368 = vpop.permute.xlu0 %3367
      %3369 = vrot.lane.b32.xlu0 %v3140, 17
      %v3370 = vpop.permute.xlu0 %3369
      %3371 = vrot.lane.b32.xlu0 %v3151, 17
      %v3372 = vpop.permute.xlu0 %3371
      %3373 = vrot.lane.b32.xlu0 %v3152, 17
      %v3374 = vpop.permute.xlu0 %3373
      %3375 = vrot.lane.b32.xlu0 %v3146, 17
      %v3376 = vpop.permute.xlu0 %3375
      %3377 = vrot.lane.b32.xlu0 %v3153, 17
      %v3378 = vpop.permute.xlu0 %3377
      %3379 = vrot.lane.b32.xlu0 %v3154, 17
      %v3380 = vpop.permute.xlu0 %3379
      %v3381 = vsel %vm1109, %v3346, %v3348
      %v3382 = vsel %vm1109, %v3348, %v3350
      %v3383 = vsel %vm1109, %v3352, %v3354
      %v3384 = vsel %vm1109, %v3354, %v3356
      %v3385 = vsel %vm1109, %v3358, %v3360
      %v3386 = vsel %vm1109, %v3360, %v3362
      %v3387 = vsel %vm1109, %v3364, %v3366
      %v3388 = vsel %vm1109, %v3366, %v3368
      %v3389 = vsel %vm1109, %v3370, %v3372
      %v3390 = vsel %vm1109, %v3372, %v3374
      %v3391 = vsel %vm1109, %v3376, %v3378
      %v3392 = vsel %vm1109, %v3378, %v3380
      %v3406 = vsel %vm989, %v3155, 0
      %v3409 = vsel %vm989, %v3156, 0
      %3411 = vmatprep.subr.mxu0 0.0
      %3412 = vmatpush1.msra.mxu0 0.0
      %3413 = vmatprep.subr.mxu0 0.0
      %3414 = vmatpush1.msra.mxu0 0.0
      %3415 = vmatprep.subr.mxu0 0.0
      %3416 = vmatpush1.msra.mxu0 0.0
      %3417 = vmatprep.subr.mxu0 0.0
      %3418 = vmatpush1.msra.mxu0 0.0
      %3419 = vmatprep.subr.mxu0 0.0
      %3420 = vmatpush1.msra.mxu0 0.0
      %3421 = vmatprep.subr.mxu0 0.0
      %3422 = vmatpush1.msra.mxu0 0.0
      %3423 = vmatprep.subr.mxu0 0.0
      %3424 = vmatpush1.msra.mxu0 0.0
      %3425 = vmatprep.subr.mxu0 0.0
      %3426 = vmatpush1.msra.mxu0 0.0
      %3427 = vmatprep.subr.mxu0 0.0
      %3428 = vmatpush1.msra.mxu0 0.0
      %3429 = vmatprep.subr.mxu0 0.0
      %3430 = vmatpush1.msra.mxu0 0.0
      %3431 = vmatprep.subr.mxu0 %v3392
      %3432 = vmatpush1.msra.mxu0 %v3391
      %3433 = vmatprep.subr.mxu0 %v3390
      %3434 = vmatpush1.msra.mxu0 %v3389
      %3435 = vmatprep.subr.mxu0 %v3388
      %3436 = vmatpush1.msra.mxu0 %v3387
      %3437 = vmatprep.subr.mxu0 %v3386
      %3438 = vmatpush1.msra.mxu0 %v3385
      %3439 = vmatprep.subr.mxu0 %v3384
      %3440 = vmatpush1.msra.mxu0 %v3383
      %3441 = vmatprep.subr.mxu0 %v3382
      %3442 = vmatpush1.msra.mxu0 %v3381
      %3443 = vmatprep.subr.mxu0 0.0
      %3444 = vmatpush2.msra.mxu0 0.0
      %3445 = vmatprep.subr.mxu0 0.0
      %3446 = vmatpush2.msra.mxu0 0.0
      %3447 = vmatprep.subr.mxu0 0.0
      %3448 = vmatpush2.msra.mxu0 0.0
      %3449 = vmatprep.subr.mxu0 0.0
      %3450 = vmatpush2.msra.mxu0 0.0
      %3451 = vmatprep.subr.mxu0 0.0
      %3452 = vmatpush2.msra.mxu0 0.0
      %3453 = vmatprep.subr.mxu0 0.0
      %3454 = vmatpush2.msra.mxu0 0.0
      %3455 = vmatprep.subr.mxu0 0.0
      %3456 = vmatpush2.msra.mxu0 0.0
      %3457 = vmatprep.subr.mxu0 0.0
      %3458 = vmatpush2.msra.mxu0 0.0
      %3459 = vmatprep.subr.mxu0 0.0
      %3460 = vmatpush2.msra.mxu0 0.0
      %3461 = vmatprep.subr.mxu0 0.0
      %3462 = vmatpush2.msra.mxu0 0.0
      %3463 = vmatprep.subr.mxu0 0.0
      %3464 = vmatpush2.msra.mxu0 0.0
      %3465 = vmatprep.subr.mxu0 0.0
      %3466 = vmatpush2.msra.mxu0 0.0
      %3467 = vmatprep.subr.mxu0 0.0
      %3468 = vmatpush2.msra.mxu0 0.0
      %3469 = vmatprep.subr.mxu0 0.0
      %3470 = vmatpush2.msra.mxu0 0.0
      %3471 = vmatprep.subr.mxu0 0.0
      %3472 = vmatpush2.msra.mxu0 0.0
      %3473 = vmatprep.subr.mxu0 0.0
      %3474 = vmatpush2.msra.mxu0 0.0
      %3475 = vmatprep.mubr.f32.mxu0 0.0
      %3476 = vmatmul.mubr.f32.gmra.mxu0 %v3406
      %v3477 = vpop.f32.mrf.mxu0
      %v3478 = vadd.f32 %v3335, %v3477
      %v3479 = vpop.f32.mrf.mxu0
      %v3480 = vadd.f32 %v3337, %v3479
      %3481 = vmatprep.mubr.f32.mxu0 0.0
      %3482 = vmatmul.mubr.f32.gmra.mxu0 %v3409
      %v3483 = vpop.f32.mrf.mxu0
      %v3484 = vadd.f32 %v3341, %v3483
      %v3485 = vpop.f32.mrf.mxu0
      %v3486 = vadd.f32 %v3343, %v3485
      %3487 = vdwg.mxu0
      %v3488 = vld [vmem:[#allocation2 + $0xc0] sm:$0xff]
      %v3489 = vld [vmem:[#allocation2 + $0xc8] sm:$0xff]
      %v3490 = vld [vmem:[#allocation2 + $0xd0] sm:$0xff]
      %v3491 = vld [vmem:[#allocation2 + $0xe0] sm:$0xff]
      %v3492 = vld [vmem:[#allocation2 + $0xe8] sm:$0xff]
      %v3493 = vld [vmem:[#allocation2 + $0xf0] sm:$0xff]
      %v3494 = vld [vmem:[#allocation2 + $0xd8] sm:$0xff]
      %v3495 = vld [vmem:[#allocation2 + $0xf8] sm:$0xff]
      %3502 = vrot.lane.b32.xlu0 %v3489, 112
      %v3503 = vpop.permute.xlu0 %3502
      %3504 = vrot.lane.b32.xlu0 %v3490, 112
      %v3505 = vpop.permute.xlu0 %3504
      %3506 = vrot.lane.b32.xlu0 %v3494, 112
      %v3507 = vpop.permute.xlu0 %3506
      %3508 = vrot.lane.b32.xlu0 %v3492, 112
      %v3509 = vpop.permute.xlu0 %3508
      %3510 = vrot.lane.b32.xlu0 %v3493, 112
      %v3511 = vpop.permute.xlu0 %3510
      %3512 = vrot.lane.b32.xlu0 %v3495, 112
      %v3513 = vpop.permute.xlu0 %3512
      %v3514 = vsel %vm858, %v3503, %v3505
      %v3515 = vsel %vm858, %v3505, %v3507
      %v3516 = vsel %vm858, %v3509, %v3511
      %v3517 = vsel %vm858, %v3511, %v3513
      %3518 = vrot.lane.b32.xlu0 %v3489, 96
      %v3519 = vpop.permute.xlu0 %3518
      %3520 = vrot.lane.b32.xlu0 %v3490, 96
      %v3521 = vpop.permute.xlu0 %3520
      %3522 = vrot.lane.b32.xlu0 %v3494, 96
      %v3523 = vpop.permute.xlu0 %3522
      %3524 = vrot.lane.b32.xlu0 %v3492, 96
      %v3525 = vpop.permute.xlu0 %3524
      %3526 = vrot.lane.b32.xlu0 %v3493, 96
      %v3527 = vpop.permute.xlu0 %3526
      %3528 = vrot.lane.b32.xlu0 %v3495, 96
      %v3529 = vpop.permute.xlu0 %3528
      %v3530 = vsel %vm877, %v3519, %v3521
      %v3531 = vsel %vm877, %v3521, %v3523
      %v3532 = vsel %vm877, %v3525, %v3527
      %v3533 = vsel %vm877, %v3527, %v3529
      %s3534 = scalar_lea.vmem %s10, 32
      %v3535 = vld [vmem:[%s3534] sm:$0xff]
      %v3536 = vld [vmem:[%s3534 + $0x8] sm:$0xff]
      %3539 = vrot.lane.b32.xlu0 %v3488, 15
      %v3540 = vpop.permute.xlu0 %3539
      %3541 = vrot.lane.b32.xlu0 %v3489, 15
      %v3542 = vpop.permute.xlu0 %3541
      %3543 = vrot.lane.b32.xlu0 %v3490, 15
      %v3544 = vpop.permute.xlu0 %3543
      %3545 = vrot.lane.b32.xlu0 %v3491, 15
      %v3546 = vpop.permute.xlu0 %3545
      %3547 = vrot.lane.b32.xlu0 %v3492, 15
      %v3548 = vpop.permute.xlu0 %3547
      %3549 = vrot.lane.b32.xlu0 %v3493, 15
      %v3550 = vpop.permute.xlu0 %3549
      %3551 = vrot.lane.b32.xlu0 %v3503, 15
      %v3552 = vpop.permute.xlu0 %3551
      %3553 = vrot.lane.b32.xlu0 %v3514, 15
      %v3554 = vpop.permute.xlu0 %3553
      %3555 = vrot.lane.b32.xlu0 %v3515, 15
      %v3556 = vpop.permute.xlu0 %3555
      %3557 = vrot.lane.b32.xlu0 %v3509, 15
      %v3558 = vpop.permute.xlu0 %3557
      %3559 = vrot.lane.b32.xlu0 %v3516, 15
      %v3560 = vpop.permute.xlu0 %3559
      %3561 = vrot.lane.b32.xlu0 %v3517, 15
      %v3562 = vpop.permute.xlu0 %3561
      %3563 = vrot.lane.b32.xlu0 %v3519, 15
      %v3564 = vpop.permute.xlu0 %3563
      %3565 = vrot.lane.b32.xlu0 %v3530, 15
      %v3566 = vpop.permute.xlu0 %3565
      %3567 = vrot.lane.b32.xlu0 %v3531, 15
      %v3568 = vpop.permute.xlu0 %3567
      %3569 = vrot.lane.b32.xlu0 %v3525, 15
      %v3570 = vpop.permute.xlu0 %3569
      %3571 = vrot.lane.b32.xlu0 %v3532, 15
      %v3572 = vpop.permute.xlu0 %3571
      %3573 = vrot.lane.b32.xlu0 %v3533, 15
      %v3574 = vpop.permute.xlu0 %3573
      %v3575 = vsel %vm1304, %v3540, %v3542
      %v3576 = vsel %vm1304, %v3542, %v3544
      %v3577 = vsel %vm1304, %v3546, %v3548
      %v3578 = vsel %vm1304, %v3548, %v3550
      %v3579 = vsel %vm1304, %v3552, %v3554
      %v3580 = vsel %vm1304, %v3554, %v3556
      %v3581 = vsel %vm1304, %v3558, %v3560
      %v3582 = vsel %vm1304, %v3560, %v3562
      %v3583 = vsel %vm1304, %v3564, %v3566
      %v3584 = vsel %vm1304, %v3566, %v3568
      %v3585 = vsel %vm1304, %v3570, %v3572
      %v3586 = vsel %vm1304, %v3572, %v3574
      %v3600 = vsel %vm989, %v3535, 0
      %v3603 = vsel %vm989, %v3536, 0
      %3605 = vmatprep.subr.mxu0 0.0
      %3606 = vmatpush1.msra.mxu0 0.0
      %3607 = vmatprep.subr.mxu0 0.0
      %3608 = vmatpush1.msra.mxu0 0.0
      %3609 = vmatprep.subr.mxu0 0.0
      %3610 = vmatpush1.msra.mxu0 0.0
      %3611 = vmatprep.subr.mxu0 0.0
      %3612 = vmatpush1.msra.mxu0 0.0
      %3613 = vmatprep.subr.mxu0 0.0
      %3614 = vmatpush1.msra.mxu0 0.0
      %3615 = vmatprep.subr.mxu0 0.0
      %3616 = vmatpush1.msra.mxu0 0.0
      %3617 = vmatprep.subr.mxu0 0.0
      %3618 = vmatpush1.msra.mxu0 0.0
      %3619 = vmatprep.subr.mxu0 0.0
      %3620 = vmatpush1.msra.mxu0 0.0
      %3621 = vmatprep.subr.mxu0 0.0
      %3622 = vmatpush1.msra.mxu0 0.0
      %3623 = vmatprep.subr.mxu0 0.0
      %3624 = vmatpush1.msra.mxu0 0.0
      %3625 = vmatprep.subr.mxu0 %v3586
      %3626 = vmatpush1.msra.mxu0 %v3585
      %3627 = vmatprep.subr.mxu0 %v3584
      %3628 = vmatpush1.msra.mxu0 %v3583
      %3629 = vmatprep.subr.mxu0 %v3582
      %3630 = vmatpush1.msra.mxu0 %v3581
      %3631 = vmatprep.subr.mxu0 %v3580
      %3632 = vmatpush1.msra.mxu0 %v3579
      %3633 = vmatprep.subr.mxu0 %v3578
      %3634 = vmatpush1.msra.mxu0 %v3577
      %3635 = vmatprep.subr.mxu0 %v3576
      %3636 = vmatpush1.msra.mxu0 %v3575
      %3637 = vmatprep.subr.mxu0 0.0
      %3638 = vmatpush2.msra.mxu0 0.0
      %3639 = vmatprep.subr.mxu0 0.0
      %3640 = vmatpush2.msra.mxu0 0.0
      %3641 = vmatprep.subr.mxu0 0.0
      %3642 = vmatpush2.msra.mxu0 0.0
      %3643 = vmatprep.subr.mxu0 0.0
      %3644 = vmatpush2.msra.mxu0 0.0
      %3645 = vmatprep.subr.mxu0 0.0
      %3646 = vmatpush2.msra.mxu0 0.0
      %3647 = vmatprep.subr.mxu0 0.0
      %3648 = vmatpush2.msra.mxu0 0.0
      %3649 = vmatprep.subr.mxu0 0.0
      %3650 = vmatpush2.msra.mxu0 0.0
      %3651 = vmatprep.subr.mxu0 0.0
      %3652 = vmatpush2.msra.mxu0 0.0
      %3653 = vmatprep.subr.mxu0 0.0
      %3654 = vmatpush2.msra.mxu0 0.0
      %3655 = vmatprep.subr.mxu0 0.0
      %3656 = vmatpush2.msra.mxu0 0.0
      %3657 = vmatprep.subr.mxu0 0.0
      %3658 = vmatpush2.msra.mxu0 0.0
      %3659 = vmatprep.subr.mxu0 0.0
      %3660 = vmatpush2.msra.mxu0 0.0
      %3661 = vmatprep.subr.mxu0 0.0
      %3662 = vmatpush2.msra.mxu0 0.0
      %3663 = vmatprep.subr.mxu0 0.0
      %3664 = vmatpush2.msra.mxu0 0.0
      %3665 = vmatprep.subr.mxu0 0.0
      %3666 = vmatpush2.msra.mxu0 0.0
      %3667 = vmatprep.subr.mxu0 0.0
      %3668 = vmatpush2.msra.mxu0 0.0
      %3669 = vmatprep.mubr.f32.mxu0 0.0
      %3670 = vmatmul.mubr.f32.gmra.mxu0 %v3600
      %v3671 = vpop.f32.mrf.mxu0
      %v3672 = vadd.f32 0.0, %v3671
      %v3673 = vpop.f32.mrf.mxu0
      %v3674 = vadd.f32 0.0, %v3673
      %3675 = vmatprep.mubr.f32.mxu0 0.0
      %3676 = vmatmul.mubr.f32.gmra.mxu0 %v3603
      %v3677 = vpop.f32.mrf.mxu0
      %v3678 = vadd.f32 0.0, %v3677
      %v3679 = vpop.f32.mrf.mxu0
      %v3680 = vadd.f32 0.0, %v3679
      %3681 = vdwg.mxu0
      %v3682 = vadd.f32 %v3478, %v3672
      %v3683 = vadd.f32 %v3480, %v3674
      %v3684 = vadd.f32 %v3484, %v3678
      %v3685 = vadd.f32 %v3486, %v3680
      %v3686 = vld [vmem:[%s11] sm:$0xff]
      %v3687 = vld [vmem:[%s11 + $0x8] sm:$0xff]
      %3689 = vset.pattern.permute.xlu0 0
      %3690 = vperm.xlu0 %3689, %v3686
      %v3691 = vpop.permute.xlu0 %3690
      %3694 = vset.pattern.permute.xlu0 0
      %3695 = vperm.xlu0 %3694, %v3687
      %v3696 = vpop.permute.xlu0 %3695
      %v3698 = vadd.f32 %v3682, %v3691
      %v3699 = vadd.f32 %v3683, %v3691
      %v3700 = vadd.f32 %v3684, %v3696
      %v3701 = vadd.f32 %v3685, %v3696
      %v3702 = vxor.u32 %v3698, 2147483648
      %v3703 = vxor.u32 %v3699, 2147483648
      %v3704 = vxor.u32 %v3700, 2147483648
      %v3705 = vxor.u32 %v3701, 2147483648
      %v3706 = vmul.f32 %v3702, 1.442695
      %v3707 = vpow.pop %v3706
      %v3708 = vmul.f32 %v3703, 1.442695
      %v3709 = vpow.pop %v3708
      %v3710 = vmul.f32 %v3704, 1.442695
      %v3711 = vpow.pop %v3710
      %v3712 = vmul.f32 %v3705, 1.442695
      %v3713 = vpow.pop %v3712
      %v3714 = vadd.f32 %v3707, 1.0
      %v3715 = vadd.f32 %v3709, 1.0
      %v3716 = vadd.f32 %v3711, 1.0
      %v3717 = vadd.f32 %v3713, 1.0
      %v3718 = vrcp.pop %v3714
      %v3719 = vmul.f32 1.0, %v3718
      %v3720 = vrcp.pop %v3715
      %v3721 = vmul.f32 1.0, %v3720
      %v3722 = vrcp.pop %v3716
      %v3723 = vmul.f32 1.0, %v3722
      %v3724 = vrcp.pop %v3717
      %v3725 = vmul.f32 1.0, %v3724
      %v3726 = vmul.f32 %v3698, %v3719
      %v3727 = vmul.f32 %v3699, %v3721
      %v3728 = vmul.f32 %v3700, %v3723
      %v3729 = vmul.f32 %v3701, %v3725
      %v3730 = vld [vmem:[%s1460] sm:$0x3]
      %v3732 = vlaneseq
      %v3733 = vshrl.u32 %v3732, 7
      %v3734 = vsub.s32 0, %v3733
      %v3735 = vrot.slane %v3730, %v3734
      %v3736 = vlaneseq
      %v3737 = vshrl.u32 %v3736, 7
      %v3738 = vsub.s32 1, %v3737
      %v3739 = vrot.slane %v3730, %v3738
      %v3742 = vmul.f32 %v3726, %v3735
      %v3743 = vmul.f32 %v3727, %v3739
      %v3744 = vmul.f32 %v3728, %v3735
      %v3745 = vmul.f32 %v3729, %v3739
      %3746 = vst [vmem:[#allocation2 + $0x8] sm:$0xff] %v3742
      %3747 = vst [vmem:[#allocation2 + $0x10] sm:$0xff] %v3743
      %3748 = vst [vmem:[#allocation2 + $0x28] sm:$0xff] %v3744
      %3749 = vst [vmem:[#allocation2 + $0x30] sm:$0xff] %v3745
      %v3750 = vld [vmem:[%s786] sm:$0x3]
      %v3752 = vlaneseq
      %v3753 = vshrl.u32 %v3752, 7
      %v3754 = vsub.s32 0, %v3753
      %v3755 = vrot.slane %v3750, %v3754
      %v3756 = vlaneseq
      %v3757 = vshrl.u32 %v3756, 7
      %v3758 = vsub.s32 1, %v3757
      %v3759 = vrot.slane %v3750, %v3758
      %v3762 = vmul.f32 %v3726, %v3755
      %v3763 = vmul.f32 %v3727, %v3759
      %v3764 = vmul.f32 %v3728, %v3755
      %v3765 = vmul.f32 %v3729, %v3759
      %3766 = vst [vmem:[#allocation2 + $0x48] sm:$0xff] %v3762
      %3767 = vst [vmem:[#allocation2 + $0x50] sm:$0xff] %v3763
      %3768 = vst [vmem:[#allocation2 + $0x68] sm:$0xff] %v3764
      %3769 = vst [vmem:[#allocation2 + $0x70] sm:$0xff] %v3765
      %3770 = vst [vmem:[#allocation2 + $0x88] sm:$0xff] %v3726
      %3771 = vst [vmem:[#allocation2 + $0x90] sm:$0xff] %v3727
      %3772 = vst [vmem:[#allocation2 + $0xa8] sm:$0xff] %v3728
      %3773 = vst [vmem:[#allocation2 + $0xb0] sm:$0xff] %v3729
      %v3774 = vld [vmem:[%s811] sm:$0x3]
      %v3776 = vlaneseq
      %v3777 = vshrl.u32 %v3776, 7
      %v3778 = vsub.s32 0, %v3777
      %v3779 = vrot.slane %v3774, %v3778
      %v3780 = vlaneseq
      %v3781 = vshrl.u32 %v3780, 7
      %v3782 = vsub.s32 1, %v3781
      %v3783 = vrot.slane %v3774, %v3782
      %v3786 = vmul.f32 %v3726, %v3779
      %v3787 = vmul.f32 %v3727, %v3783
      %v3788 = vmul.f32 %v3728, %v3779
      %v3789 = vmul.f32 %v3729, %v3783
      %3790 = vst [vmem:[#allocation2 + $0xc8] sm:$0xff] %v3786
      %3791 = vst [vmem:[#allocation2 + $0xd0] sm:$0xff] %v3787
      %3792 = vst [vmem:[#allocation2 + $0xe8] sm:$0xff] %v3788
      %3793 = vst [vmem:[#allocation2 + $0xf0] sm:$0xff] %v3789
      %v3794 = vld [vmem:[%s1] sm:$0x3]
      %v3796 = vlaneseq
      %v3797 = vshrl.u32 %v3796, 7
      %v3798 = vsub.s32 0, %v3797
      %v3799 = vrot.slane %v3794, %v3798
      %v3800 = vlaneseq
      %v3801 = vshrl.u32 %v3800, 7
      %v3802 = vsub.s32 1, %v3801
      %v3803 = vrot.slane %v3794, %v3802
      %v3806 = vmul.f32 %v3726, %v3799
      %v3807 = vmul.f32 %v3727, %v3803
      %v3808 = vmul.f32 %v3728, %v3799
      %v3809 = vmul.f32 %v3729, %v3803
      %3810 = vst [vmem:[#allocation2 + $0x108] sm:$0xff] %v3806
      %3811 = vst [vmem:[#allocation2 + $0x110] sm:$0xff] %v3807
      %3812 = vst [vmem:[#allocation2 + $0x128] sm:$0xff] %v3808
      %3813 = vst [vmem:[#allocation2 + $0x130] sm:$0xff] %v3809
      %v3814 = vld [vmem:[#allocation2] sm:$0xff]
      %v3815 = vld [vmem:[#allocation2 + $0x8] sm:$0xff]
      %v3816 = vld [vmem:[#allocation2 + $0x10] sm:$0xff]
      %v3817 = vld [vmem:[#allocation2 + $0x20] sm:$0xff]
      %v3818 = vld [vmem:[#allocation2 + $0x28] sm:$0xff]
      %v3819 = vld [vmem:[#allocation2 + $0x30] sm:$0xff]
      %v3820 = vld [vmem:[%s12] sm:$0xff]
      %v3821 = vld [vmem:[%s12 + $0x8] sm:$0xff]
      %3823 = vset.pattern.permute.xlu0 0
      %3824 = vperm.xlu0 %3823, %v3820
      %v3825 = vpop.permute.xlu0 %3824
      %3828 = vset.pattern.permute.xlu0 0
      %3829 = vperm.xlu0 %3828, %v3821
      %v3830 = vpop.permute.xlu0 %3829
      %v3832 = vmul.f32 %v3814, %v3825
      %v3833 = vmul.f32 %v3815, %v3825
      %v3834 = vmul.f32 %v3816, %v3825
      %v3835 = vmul.f32 %v3817, %v3830
      %v3836 = vmul.f32 %v3818, %v3830
      %v3837 = vmul.f32 %v3819, %v3830
      %v3838 = vld [vmem:[#allocation2 + $0x40] sm:$0xff]
      %v3839 = vld [vmem:[#allocation2 + $0x48] sm:$0xff]
      %v3840 = vld [vmem:[#allocation2 + $0x50] sm:$0xff]
      %v3841 = vld [vmem:[#allocation2 + $0x60] sm:$0xff]
      %v3842 = vld [vmem:[#allocation2 + $0x68] sm:$0xff]
      %v3843 = vld [vmem:[#allocation2 + $0x70] sm:$0xff]
      %s3844 = scalar_lea.vmem %s12, 16
      %v3845 = vld [vmem:[%s3844] sm:$0xff]
      %v3846 = vld [vmem:[%s3844 + $0x8] sm:$0xff]
      %3848 = vset.pattern.permute.xlu0 0
      %3849 = vperm.xlu0 %3848, %v3845
      %v3850 = vpop.permute.xlu0 %3849
      %3853 = vset.pattern.permute.xlu0 0
      %3854 = vperm.xlu0 %3853, %v3846
      %v3855 = vpop.permute.xlu0 %3854
      %v3857 = vmul.f32 %v3838, %v3850
      %v3858 = vmul.f32 %v3839, %v3850
      %v3859 = vmul.f32 %v3840, %v3850
      %v3860 = vmul.f32 %v3841, %v3855
      %v3861 = vmul.f32 %v3842, %v3855
      %v3862 = vmul.f32 %v3843, %v3855
      %3869 = vrot.lane.b32.xlu0 %v3857, 127
      %v3870 = vpop.permute.xlu0 %3869
      %3871 = vrot.lane.b32.xlu0 %v3858, 127
      %v3872 = vpop.permute.xlu0 %3871
      %3873 = vrot.lane.b32.xlu0 %v3859, 127
      %v3874 = vpop.permute.xlu0 %3873
      %3875 = vrot.lane.b32.xlu0 %v3860, 127
      %v3876 = vpop.permute.xlu0 %3875
      %3877 = vrot.lane.b32.xlu0 %v3861, 127
      %v3878 = vpop.permute.xlu0 %3877
      %3879 = vrot.lane.b32.xlu0 %v3862, 127
      %v3880 = vpop.permute.xlu0 %3879
      %v3881 = vsel %vm1612, %v3870, %v3872
      %v3882 = vsel %vm1612, %v3872, %v3874
      %v3883 = vsel %vm1612, %v3876, %v3878
      %v3884 = vsel %vm1612, %v3878, %v3880
      %v3891 = vadd.f32 %v3832, %v3881
      %v3892 = vadd.f32 %v3833, %v3882
      %v3893 = vadd.f32 %v3834, %v3874
      %v3894 = vadd.f32 %v3835, %v3883
      %v3895 = vadd.f32 %v3836, %v3884
      %v3896 = vadd.f32 %v3837, %v3880
      %v3897 = vld [vmem:[#allocation2 + $0x80] sm:$0xff]
      %v3898 = vld [vmem:[#allocation2 + $0x88] sm:$0xff]
      %v3899 = vld [vmem:[#allocation2 + $0x90] sm:$0xff]
      %v3900 = vld [vmem:[#allocation2 + $0xa0] sm:$0xff]
      %v3901 = vld [vmem:[#allocation2 + $0xa8] sm:$0xff]
      %v3902 = vld [vmem:[#allocation2 + $0xb0] sm:$0xff]
      %s3903 = scalar_lea.vmem %s12, 32
      %v3904 = vld [vmem:[%s3903] sm:$0xff]
      %v3905 = vld [vmem:[%s3903 + $0x8] sm:$0xff]
      %3907 = vset.pattern.permute.xlu0 0
      %3908 = vperm.xlu0 %3907, %v3904
      %v3909 = vpop.permute.xlu0 %3908
      %3912 = vset.pattern.permute.xlu0 0
      %3913 = vperm.xlu0 %3912, %v3905
      %v3914 = vpop.permute.xlu0 %3913
      %v3916 = vmul.f32 %v3897, %v3909
      %v3917 = vmul.f32 %v3898, %v3909
      %v3918 = vmul.f32 %v3899, %v3909
      %v3919 = vmul.f32 %v3900, %v3914
      %v3920 = vmul.f32 %v3901, %v3914
      %v3921 = vmul.f32 %v3902, %v3914
      %3928 = vrot.lane.b32.xlu0 %v3916, 126
      %v3929 = vpop.permute.xlu0 %3928
      %3930 = vrot.lane.b32.xlu0 %v3917, 126
      %v3931 = vpop.permute.xlu0 %3930
      %3932 = vrot.lane.b32.xlu0 %v3918, 126
      %v3933 = vpop.permute.xlu0 %3932
      %3934 = vrot.lane.b32.xlu0 %v3919, 126
      %v3935 = vpop.permute.xlu0 %3934
      %3936 = vrot.lane.b32.xlu0 %v3920, 126
      %v3937 = vpop.permute.xlu0 %3936
      %3938 = vrot.lane.b32.xlu0 %v3921, 126
      %v3939 = vpop.permute.xlu0 %3938
      %v3940 = vsel %vm1672, %v3929, %v3931
      %v3941 = vsel %vm1672, %v3931, %v3933
      %v3942 = vsel %vm1672, %v3935, %v3937
      %v3943 = vsel %vm1672, %v3937, %v3939
      %v3950 = vadd.f32 %v3891, %v3940
      %v3951 = vadd.f32 %v3892, %v3941
      %v3952 = vadd.f32 %v3893, %v3933
      %v3953 = vadd.f32 %v3894, %v3942
      %v3954 = vadd.f32 %v3895, %v3943
      %v3955 = vadd.f32 %v3896, %v3939
      %v3956 = vld [vmem:[#allocation2 + $0xc0] sm:$0xff]
      %v3957 = vld [vmem:[#allocation2 + $0xc8] sm:$0xff]
      %v3958 = vld [vmem:[#allocation2 + $0xd0] sm:$0xff]
      %v3959 = vld [vmem:[#allocation2 + $0xe0] sm:$0xff]
      %v3960 = vld [vmem:[#allocation2 + $0xe8] sm:$0xff]
      %v3961 = vld [vmem:[#allocation2 + $0xf0] sm:$0xff]
      %s3962 = scalar_lea.vmem %s12, 48
      %v3963 = vld [vmem:[%s3962] sm:$0xff]
      %v3964 = vld [vmem:[%s3962 + $0x8] sm:$0xff]
      %3966 = vset.pattern.permute.xlu0 0
      %3967 = vperm.xlu0 %3966, %v3963
      %v3968 = vpop.permute.xlu0 %3967
      %3971 = vset.pattern.permute.xlu0 0
      %3972 = vperm.xlu0 %3971, %v3964
      %v3973 = vpop.permute.xlu0 %3972
      %v3975 = vmul.f32 %v3956, %v3968
      %v3976 = vmul.f32 %v3957, %v3968
      %v3977 = vmul.f32 %v3958, %v3968
      %v3978 = vmul.f32 %v3959, %v3973
      %v3979 = vmul.f32 %v3960, %v3973
      %v3980 = vmul.f32 %v3961, %v3973
      %3987 = vrot.lane.b32.xlu0 %v3975, 125
      %v3988 = vpop.permute.xlu0 %3987
      %3989 = vrot.lane.b32.xlu0 %v3976, 125
      %v3990 = vpop.permute.xlu0 %3989
      %3991 = vrot.lane.b32.xlu0 %v3977, 125
      %v3992 = vpop.permute.xlu0 %3991
      %3993 = vrot.lane.b32.xlu0 %v3978, 125
      %v3994 = vpop.permute.xlu0 %3993
      %3995 = vrot.lane.b32.xlu0 %v3979, 125
      %v3996 = vpop.permute.xlu0 %3995
      %3997 = vrot.lane.b32.xlu0 %v3980, 125
      %v3998 = vpop.permute.xlu0 %3997
      %v3999 = vsel %vm1732, %v3988, %v3990
      %v4000 = vsel %vm1732, %v3990, %v3992
      %v4001 = vsel %vm1732, %v3994, %v3996
      %v4002 = vsel %vm1732, %v3996, %v3998
      %v4009 = vadd.f32 %v3950, %v3999
      %v4010 = vadd.f32 %v3951, %v4000
      %v4011 = vadd.f32 %v3952, %v3992
      %v4012 = vadd.f32 %v3953, %v4001
      %v4013 = vadd.f32 %v3954, %v4002
      %v4014 = vadd.f32 %v3955, %v3998
      %v4015 = vld [vmem:[#allocation2 + $0x100] sm:$0xff]
      %v4016 = vld [vmem:[#allocation2 + $0x108] sm:$0xff]
      %v4017 = vld [vmem:[#allocation2 + $0x110] sm:$0xff]
      %v4018 = vld [vmem:[#allocation2 + $0x120] sm:$0xff]
      %v4019 = vld [vmem:[#allocation2 + $0x128] sm:$0xff]
      %v4020 = vld [vmem:[#allocation2 + $0x130] sm:$0xff]
      %s4021 = scalar_lea.vmem %s12, 64
      %v4022 = vld [vmem:[%s4021] sm:$0xff]
      %v4023 = vld [vmem:[%s4021 + $0x8] sm:$0xff]
      %4025 = vset.pattern.permute.xlu0 0
      %4026 = vperm.xlu0 %4025, %v4022
      %v4027 = vpop.permute.xlu0 %4026
      %4030 = vset.pattern.permute.xlu0 0
      %4031 = vperm.xlu0 %4030, %v4023
      %v4032 = vpop.permute.xlu0 %4031
      %v4034 = vmul.f32 %v4015, %v4027
      %v4035 = vmul.f32 %v4016, %v4027
      %v4036 = vmul.f32 %v4017, %v4027
      %v4037 = vmul.f32 %v4018, %v4032
      %v4038 = vmul.f32 %v4019, %v4032
      %v4039 = vmul.f32 %v4020, %v4032
      %4046 = vrot.lane.b32.xlu0 %v4034, 124
      %v4047 = vpop.permute.xlu0 %4046
      %4048 = vrot.lane.b32.xlu0 %v4035, 124
      %v4049 = vpop.permute.xlu0 %4048
      %4050 = vrot.lane.b32.xlu0 %v4036, 124
      %v4051 = vpop.permute.xlu0 %4050
      %4052 = vrot.lane.b32.xlu0 %v4037, 124
      %v4053 = vpop.permute.xlu0 %4052
      %4054 = vrot.lane.b32.xlu0 %v4038, 124
      %v4055 = vpop.permute.xlu0 %4054
      %4056 = vrot.lane.b32.xlu0 %v4039, 124
      %v4057 = vpop.permute.xlu0 %4056
      %v4058 = vsel %vm1792, %v4047, %v4049
      %v4059 = vsel %vm1792, %v4049, %v4051
      %v4060 = vsel %vm1792, %v4053, %v4055
      %v4061 = vsel %vm1792, %v4055, %v4057
      %v4068 = vadd.f32 %v4009, %v4058
      %v4069 = vadd.f32 %v4010, %v4059
      %v4070 = vadd.f32 %v4011, %v4051
      %v4071 = vadd.f32 %v4012, %v4060
      %v4072 = vadd.f32 %v4013, %v4061
      %v4073 = vadd.f32 %v4014, %v4057
      %s4074 = scalar_lea.vmem %s12, 80
      %v4075 = vld [vmem:[%s4074] sm:$0xff]
      %v4076 = vld [vmem:[%s4074 + $0x8] sm:$0xff]
      %4078 = vset.pattern.permute.xlu0 0
      %4079 = vperm.xlu0 %4078, %v4075
      %v4080 = vpop.permute.xlu0 %4079
      %4083 = vset.pattern.permute.xlu0 0
      %4084 = vperm.xlu0 %4083, %v4076
      %v4085 = vpop.permute.xlu0 %4084
      %v4087 = vmul.f32 %v3814, %v4080
      %v4088 = vmul.f32 %v3815, %v4080
      %v4089 = vmul.f32 %v3816, %v4080
      %v4090 = vmul.f32 %v3817, %v4085
      %v4091 = vmul.f32 %v3818, %v4085
      %v4092 = vmul.f32 %v3819, %v4085
      %4099 = vrot.lane.b32.xlu0 %v4087, 112
      %v4100 = vpop.permute.xlu0 %4099
      %4101 = vrot.lane.b32.xlu0 %v4088, 112
      %v4102 = vpop.permute.xlu0 %4101
      %4103 = vrot.lane.b32.xlu0 %v4089, 112
      %v4104 = vpop.permute.xlu0 %4103
      %4105 = vrot.lane.b32.xlu0 %v4090, 112
      %v4106 = vpop.permute.xlu0 %4105
      %4107 = vrot.lane.b32.xlu0 %v4091, 112
      %v4108 = vpop.permute.xlu0 %4107
      %4109 = vrot.lane.b32.xlu0 %v4092, 112
      %v4110 = vpop.permute.xlu0 %4109
      %v4111 = vsel %vm858, %v4100, %v4102
      %v4112 = vsel %vm858, %v4102, %v4104
      %v4113 = vsel %vm858, %v4106, %v4108
      %v4114 = vsel %vm858, %v4108, %v4110
      %v4121 = vadd.f32 %v4068, %v4111
      %v4122 = vadd.f32 %v4069, %v4112
      %v4123 = vadd.f32 %v4070, %v4104
      %v4124 = vadd.f32 %v4071, %v4113
      %v4125 = vadd.f32 %v4072, %v4114
      %v4126 = vadd.f32 %v4073, %v4110
      %s4127 = scalar_lea.vmem %s12, 96
      %v4128 = vld [vmem:[%s4127] sm:$0xff]
      %v4129 = vld [vmem:[%s4127 + $0x8] sm:$0xff]
      %4131 = vset.pattern.permute.xlu0 0
      %4132 = vperm.xlu0 %4131, %v4128
      %v4133 = vpop.permute.xlu0 %4132
      %4136 = vset.pattern.permute.xlu0 0
      %4137 = vperm.xlu0 %4136, %v4129
      %v4138 = vpop.permute.xlu0 %4137
      %v4140 = vmul.f32 %v3838, %v4133
      %v4141 = vmul.f32 %v3839, %v4133
      %v4142 = vmul.f32 %v3840, %v4133
      %v4143 = vmul.f32 %v3841, %v4138
      %v4144 = vmul.f32 %v3842, %v4138
      %v4145 = vmul.f32 %v3843, %v4138
      %4152 = vrot.lane.b32.xlu0 %v4140, 111
      %v4153 = vpop.permute.xlu0 %4152
      %4154 = vrot.lane.b32.xlu0 %v4141, 111
      %v4155 = vpop.permute.xlu0 %4154
      %4156 = vrot.lane.b32.xlu0 %v4142, 111
      %v4157 = vpop.permute.xlu0 %4156
      %4158 = vrot.lane.b32.xlu0 %v4143, 111
      %v4159 = vpop.permute.xlu0 %4158
      %4160 = vrot.lane.b32.xlu0 %v4144, 111
      %v4161 = vpop.permute.xlu0 %4160
      %4162 = vrot.lane.b32.xlu0 %v4145, 111
      %v4163 = vpop.permute.xlu0 %4162
      %v4164 = vsel %vm1899, %v4153, %v4155
      %v4165 = vsel %vm1899, %v4155, %v4157
      %v4166 = vsel %vm1899, %v4159, %v4161
      %v4167 = vsel %vm1899, %v4161, %v4163
      %v4174 = vadd.f32 %v4121, %v4164
      %v4175 = vadd.f32 %v4122, %v4165
      %v4176 = vadd.f32 %v4123, %v4157
      %v4177 = vadd.f32 %v4124, %v4166
      %v4178 = vadd.f32 %v4125, %v4167
      %v4179 = vadd.f32 %v4126, %v4163
      %s4180 = scalar_lea.vmem %s12, 112
      %v4181 = vld [vmem:[%s4180] sm:$0xff]
      %v4182 = vld [vmem:[%s4180 + $0x8] sm:$0xff]
      %4184 = vset.pattern.permute.xlu0 0
      %4185 = vperm.xlu0 %4184, %v4181
      %v4186 = vpop.permute.xlu0 %4185
      %4189 = vset.pattern.permute.xlu0 0
      %4190 = vperm.xlu0 %4189, %v4182
      %v4191 = vpop.permute.xlu0 %4190
      %v4193 = vmul.f32 %v3897, %v4186
      %v4194 = vmul.f32 %v3898, %v4186
      %v4195 = vmul.f32 %v3899, %v4186
      %v4196 = vmul.f32 %v3900, %v4191
      %v4197 = vmul.f32 %v3901, %v4191
      %v4198 = vmul.f32 %v3902, %v4191
      %4205 = vrot.lane.b32.xlu0 %v4193, 110
      %v4206 = vpop.permute.xlu0 %4205
      %4207 = vrot.lane.b32.xlu0 %v4194, 110
      %v4208 = vpop.permute.xlu0 %4207
      %4209 = vrot.lane.b32.xlu0 %v4195, 110
      %v4210 = vpop.permute.xlu0 %4209
      %4211 = vrot.lane.b32.xlu0 %v4196, 110
      %v4212 = vpop.permute.xlu0 %4211
      %4213 = vrot.lane.b32.xlu0 %v4197, 110
      %v4214 = vpop.permute.xlu0 %4213
      %4215 = vrot.lane.b32.xlu0 %v4198, 110
      %v4216 = vpop.permute.xlu0 %4215
      %v4217 = vsel %vm1953, %v4206, %v4208
      %v4218 = vsel %vm1953, %v4208, %v4210
      %v4219 = vsel %vm1953, %v4212, %v4214
      %v4220 = vsel %vm1953, %v4214, %v4216
      %v4227 = vadd.f32 %v4174, %v4217
      %v4228 = vadd.f32 %v4175, %v4218
      %v4229 = vadd.f32 %v4176, %v4210
      %v4230 = vadd.f32 %v4177, %v4219
      %v4231 = vadd.f32 %v4178, %v4220
      %v4232 = vadd.f32 %v4179, %v4216
      %s4233 = scalar_lea.vmem %s12, 128
      %v4234 = vld [vmem:[%s4233] sm:$0xff]
      %v4235 = vld [vmem:[%s4233 + $0x8] sm:$0xff]
      %4237 = vset.pattern.permute.xlu0 0
      %4238 = vperm.xlu0 %4237, %v4234
      %v4239 = vpop.permute.xlu0 %4238
      %4242 = vset.pattern.permute.xlu0 0
      %4243 = vperm.xlu0 %4242, %v4235
      %v4244 = vpop.permute.xlu0 %4243
      %v4246 = vmul.f32 %v3956, %v4239
      %v4247 = vmul.f32 %v3957, %v4239
      %v4248 = vmul.f32 %v3958, %v4239
      %v4249 = vmul.f32 %v3959, %v4244
      %v4250 = vmul.f32 %v3960, %v4244
      %v4251 = vmul.f32 %v3961, %v4244
      %4258 = vrot.lane.b32.xlu0 %v4246, 109
      %v4259 = vpop.permute.xlu0 %4258
      %4260 = vrot.lane.b32.xlu0 %v4247, 109
      %v4261 = vpop.permute.xlu0 %4260
      %4262 = vrot.lane.b32.xlu0 %v4248, 109
      %v4263 = vpop.permute.xlu0 %4262
      %4264 = vrot.lane.b32.xlu0 %v4249, 109
      %v4265 = vpop.permute.xlu0 %4264
      %4266 = vrot.lane.b32.xlu0 %v4250, 109
      %v4267 = vpop.permute.xlu0 %4266
      %4268 = vrot.lane.b32.xlu0 %v4251, 109
      %v4269 = vpop.permute.xlu0 %4268
      %v4270 = vsel %vm2007, %v4259, %v4261
      %v4271 = vsel %vm2007, %v4261, %v4263
      %v4272 = vsel %vm2007, %v4265, %v4267
      %v4273 = vsel %vm2007, %v4267, %v4269
      %v4280 = vadd.f32 %v4227, %v4270
      %v4281 = vadd.f32 %v4228, %v4271
      %v4282 = vadd.f32 %v4229, %v4263
      %v4283 = vadd.f32 %v4230, %v4272
      %v4284 = vadd.f32 %v4231, %v4273
      %v4285 = vadd.f32 %v4232, %v4269
      %s4286 = scalar_lea.vmem %s12, 144
      %v4287 = vld [vmem:[%s4286] sm:$0xff]
      %v4288 = vld [vmem:[%s4286 + $0x8] sm:$0xff]
      %4290 = vset.pattern.permute.xlu0 0
      %4291 = vperm.xlu0 %4290, %v4287
      %v4292 = vpop.permute.xlu0 %4291
      %4295 = vset.pattern.permute.xlu0 0
      %4296 = vperm.xlu0 %4295, %v4288
      %v4297 = vpop.permute.xlu0 %4296
      %v4299 = vmul.f32 %v4015, %v4292
      %v4300 = vmul.f32 %v4016, %v4292
      %v4301 = vmul.f32 %v4017, %v4292
      %v4302 = vmul.f32 %v4018, %v4297
      %v4303 = vmul.f32 %v4019, %v4297
      %v4304 = vmul.f32 %v4020, %v4297
      %4311 = vrot.lane.b32.xlu0 %v4299, 108
      %v4312 = vpop.permute.xlu0 %4311
      %4313 = vrot.lane.b32.xlu0 %v4300, 108
      %v4314 = vpop.permute.xlu0 %4313
      %4315 = vrot.lane.b32.xlu0 %v4301, 108
      %v4316 = vpop.permute.xlu0 %4315
      %4317 = vrot.lane.b32.xlu0 %v4302, 108
      %v4318 = vpop.permute.xlu0 %4317
      %4319 = vrot.lane.b32.xlu0 %v4303, 108
      %v4320 = vpop.permute.xlu0 %4319
      %4321 = vrot.lane.b32.xlu0 %v4304, 108
      %v4322 = vpop.permute.xlu0 %4321
      %v4323 = vsel %vm2061, %v4312, %v4314
      %v4324 = vsel %vm2061, %v4314, %v4316
      %v4325 = vsel %vm2061, %v4318, %v4320
      %v4326 = vsel %vm2061, %v4320, %v4322
      %v4333 = vadd.f32 %v4280, %v4323
      %v4334 = vadd.f32 %v4281, %v4324
      %v4335 = vadd.f32 %v4282, %v4316
      %v4336 = vadd.f32 %v4283, %v4325
      %v4337 = vadd.f32 %v4284, %v4326
      %v4338 = vadd.f32 %v4285, %v4322
      %s4339 = scalar_lea.vmem %s12, 160
      %v4340 = vld [vmem:[%s4339] sm:$0xff]
      %v4341 = vld [vmem:[%s4339 + $0x8] sm:$0xff]
      %4343 = vset.pattern.permute.xlu0 0
      %4344 = vperm.xlu0 %4343, %v4340
      %v4345 = vpop.permute.xlu0 %4344
      %4348 = vset.pattern.permute.xlu0 0
      %4349 = vperm.xlu0 %4348, %v4341
      %v4350 = vpop.permute.xlu0 %4349
      %v4352 = vmul.f32 %v3814, %v4345
      %v4353 = vmul.f32 %v3815, %v4345
      %v4354 = vmul.f32 %v3816, %v4345
      %v4355 = vmul.f32 %v3817, %v4350
      %v4356 = vmul.f32 %v3818, %v4350
      %v4357 = vmul.f32 %v3819, %v4350
      %4364 = vrot.lane.b32.xlu0 %v4352, 96
      %v4365 = vpop.permute.xlu0 %4364
      %4366 = vrot.lane.b32.xlu0 %v4353, 96
      %v4367 = vpop.permute.xlu0 %4366
      %4368 = vrot.lane.b32.xlu0 %v4354, 96
      %v4369 = vpop.permute.xlu0 %4368
      %4370 = vrot.lane.b32.xlu0 %v4355, 96
      %v4371 = vpop.permute.xlu0 %4370
      %4372 = vrot.lane.b32.xlu0 %v4356, 96
      %v4373 = vpop.permute.xlu0 %4372
      %4374 = vrot.lane.b32.xlu0 %v4357, 96
      %v4375 = vpop.permute.xlu0 %4374
      %v4376 = vsel %vm877, %v4365, %v4367
      %v4377 = vsel %vm877, %v4367, %v4369
      %v4378 = vsel %vm877, %v4371, %v4373
      %v4379 = vsel %vm877, %v4373, %v4375
      %v4386 = vadd.f32 %v4333, %v4376
      %v4387 = vadd.f32 %v4334, %v4377
      %v4388 = vadd.f32 %v4335, %v4369
      %v4389 = vadd.f32 %v4336, %v4378
      %v4390 = vadd.f32 %v4337, %v4379
      %v4391 = vadd.f32 %v4338, %v4375
      %s4392 = scalar_lea.vmem %s12, 176
      %v4393 = vld [vmem:[%s4392] sm:$0xff]
      %v4394 = vld [vmem:[%s4392 + $0x8] sm:$0xff]
      %4396 = vset.pattern.permute.xlu0 0
      %4397 = vperm.xlu0 %4396, %v4393
      %v4398 = vpop.permute.xlu0 %4397
      %4401 = vset.pattern.permute.xlu0 0
      %4402 = vperm.xlu0 %4401, %v4394
      %v4403 = vpop.permute.xlu0 %4402
      %v4405 = vmul.f32 %v3838, %v4398
      %v4406 = vmul.f32 %v3839, %v4398
      %v4407 = vmul.f32 %v3840, %v4398
      %v4408 = vmul.f32 %v3841, %v4403
      %v4409 = vmul.f32 %v3842, %v4403
      %v4410 = vmul.f32 %v3843, %v4403
      %4417 = vrot.lane.b32.xlu0 %v4405, 95
      %v4418 = vpop.permute.xlu0 %4417
      %4419 = vrot.lane.b32.xlu0 %v4406, 95
      %v4420 = vpop.permute.xlu0 %4419
      %4421 = vrot.lane.b32.xlu0 %v4407, 95
      %v4422 = vpop.permute.xlu0 %4421
      %4423 = vrot.lane.b32.xlu0 %v4408, 95
      %v4424 = vpop.permute.xlu0 %4423
      %4425 = vrot.lane.b32.xlu0 %v4409, 95
      %v4426 = vpop.permute.xlu0 %4425
      %4427 = vrot.lane.b32.xlu0 %v4410, 95
      %v4428 = vpop.permute.xlu0 %4427
      %v4429 = vsel %vm2168, %v4418, %v4420
      %v4430 = vsel %vm2168, %v4420, %v4422
      %v4431 = vsel %vm2168, %v4424, %v4426
      %v4432 = vsel %vm2168, %v4426, %v4428
      %v4439 = vadd.f32 %v4386, %v4429
      %v4440 = vadd.f32 %v4387, %v4430
      %v4441 = vadd.f32 %v4388, %v4422
      %v4442 = vadd.f32 %v4389, %v4431
      %v4443 = vadd.f32 %v4390, %v4432
      %v4444 = vadd.f32 %v4391, %v4428
      %s4445 = scalar_lea.vmem %s12, 192
      %v4446 = vld [vmem:[%s4445] sm:$0xff]
      %v4447 = vld [vmem:[%s4445 + $0x8] sm:$0xff]
      %4449 = vset.pattern.permute.xlu0 0
      %4450 = vperm.xlu0 %4449, %v4446
      %v4451 = vpop.permute.xlu0 %4450
      %4454 = vset.pattern.permute.xlu0 0
      %4455 = vperm.xlu0 %4454, %v4447
      %v4456 = vpop.permute.xlu0 %4455
      %v4458 = vmul.f32 %v3898, %v4451
      %v4459 = vmul.f32 %v3899, %v4451
      %v4460 = vmul.f32 %v3901, %v4456
      %v4461 = vmul.f32 %v3902, %v4456
      %4466 = vrot.lane.b32.xlu0 %v4458, 94
      %v4467 = vpop.permute.xlu0 %4466
      %4468 = vrot.lane.b32.xlu0 %v4459, 94
      %v4469 = vpop.permute.xlu0 %4468
      %4470 = vrot.lane.b32.xlu0 %v4460, 94
      %v4471 = vpop.permute.xlu0 %4470
      %4472 = vrot.lane.b32.xlu0 %v4461, 94
      %v4473 = vpop.permute.xlu0 %4472
      %v4474 = vsel %vm2214, %v4467, %v4469
      %v4475 = vsel %vm2214, %v4471, %v4473
      %v4482 = vadd.f32 %v4439, %v4467
      %v4483 = vadd.f32 %v4440, %v4474
      %v4484 = vadd.f32 %v4441, %v4469
      %v4485 = vadd.f32 %v4442, %v4471
      %v4486 = vadd.f32 %v4443, %v4475
      %v4487 = vadd.f32 %v4444, %v4473
      %v4488 = vld [vmem:[#allocation2 + $0xc8] sm:$0xff]
      %v4489 = vld [vmem:[#allocation2 + $0xd0] sm:$0xff]
      %v4490 = vld [vmem:[#allocation2 + $0xd8] sm:$0xff]
      %v4491 = vld [vmem:[#allocation2 + $0xe8] sm:$0xff]
      %v4492 = vld [vmem:[#allocation2 + $0xf0] sm:$0xff]
      %v4493 = vld [vmem:[#allocation2 + $0xf8] sm:$0xff]
      %s4494 = scalar_lea.vmem %s12, 208
      %v4495 = vld [vmem:[%s4494] sm:$0xff]
      %v4496 = vld [vmem:[%s4494 + $0x8] sm:$0xff]
      %4498 = vset.pattern.permute.xlu0 0
      %4499 = vperm.xlu0 %4498, %v4495
      %v4500 = vpop.permute.xlu0 %4499
      %4503 = vset.pattern.permute.xlu0 0
      %4504 = vperm.xlu0 %4503, %v4496
      %v4505 = vpop.permute.xlu0 %4504
      %v4507 = vmul.f32 %v4488, %v4500
      %v4508 = vmul.f32 %v4489, %v4500
      %v4509 = vmul.f32 %v4490, %v4500
      %v4510 = vmul.f32 %v4491, %v4505
      %v4511 = vmul.f32 %v4492, %v4505
      %v4512 = vmul.f32 %v4493, %v4505
      %4519 = vrot.lane.b32.xlu0 %v4507, 93
      %v4520 = vpop.permute.xlu0 %4519
      %4521 = vrot.lane.b32.xlu0 %v4508, 93
      %v4522 = vpop.permute.xlu0 %4521
      %4523 = vrot.lane.b32.xlu0 %v4509, 93
      %v4524 = vpop.permute.xlu0 %4523
      %4525 = vrot.lane.b32.xlu0 %v4510, 93
      %v4526 = vpop.permute.xlu0 %4525
      %4527 = vrot.lane.b32.xlu0 %v4511, 93
      %v4528 = vpop.permute.xlu0 %4527
      %4529 = vrot.lane.b32.xlu0 %v4512, 93
      %v4530 = vpop.permute.xlu0 %4529
      %v4531 = vsel %vm2272, %v4520, %v4522
      %v4532 = vsel %vm2272, %v4522, %v4524
      %v4533 = vsel %vm2272, %v4526, %v4528
      %v4534 = vsel %vm2272, %v4528, %v4530
      %v4541 = vadd.f32 %v4482, %v4520
      %v4542 = vadd.f32 %v4483, %v4531
      %v4543 = vadd.f32 %v4484, %v4532
      %v4544 = vadd.f32 %v4485, %v4526
      %v4545 = vadd.f32 %v4486, %v4533
      %v4546 = vadd.f32 %v4487, %v4534
      %v4547 = vld [vmem:[#allocation2 + $0x108] sm:$0xff]
      %v4548 = vld [vmem:[#allocation2 + $0x110] sm:$0xff]
      %v4549 = vld [vmem:[#allocation2 + $0x118] sm:$0xff]
      %v4550 = vld [vmem:[#allocation2 + $0x128] sm:$0xff]
      %v4551 = vld [vmem:[#allocation2 + $0x130] sm:$0xff]
      %v4552 = vld [vmem:[#allocation2 + $0x138] sm:$0xff]
      %s4553 = scalar_lea.vmem %s12, 224
      %v4554 = vld [vmem:[%s4553] sm:$0xff]
      %v4555 = vld [vmem:[%s4553 + $0x8] sm:$0xff]
      %4557 = vset.pattern.permute.xlu0 0
      %4558 = vperm.xlu0 %4557, %v4554
      %v4559 = vpop.permute.xlu0 %4558
      %4562 = vset.pattern.permute.xlu0 0
      %4563 = vperm.xlu0 %4562, %v4555
      %v4564 = vpop.permute.xlu0 %4563
      %v4566 = vmul.f32 %v4547, %v4559
      %v4567 = vmul.f32 %v4548, %v4559
      %v4568 = vmul.f32 %v4549, %v4559
      %v4569 = vmul.f32 %v4550, %v4564
      %v4570 = vmul.f32 %v4551, %v4564
      %v4571 = vmul.f32 %v4552, %v4564
      %4578 = vrot.lane.b32.xlu0 %v4566, 92
      %v4579 = vpop.permute.xlu0 %4578
      %4580 = vrot.lane.b32.xlu0 %v4567, 92
      %v4581 = vpop.permute.xlu0 %4580
      %4582 = vrot.lane.b32.xlu0 %v4568, 92
      %v4583 = vpop.permute.xlu0 %4582
      %4584 = vrot.lane.b32.xlu0 %v4569, 92
      %v4585 = vpop.permute.xlu0 %4584
      %4586 = vrot.lane.b32.xlu0 %v4570, 92
      %v4587 = vpop.permute.xlu0 %4586
      %4588 = vrot.lane.b32.xlu0 %v4571, 92
      %v4589 = vpop.permute.xlu0 %4588
      %v4590 = vsel %vm2332, %v4579, %v4581
      %v4591 = vsel %vm2332, %v4581, %v4583
      %v4592 = vsel %vm2332, %v4585, %v4587
      %v4593 = vsel %vm2332, %v4587, %v4589
      %v4600 = vadd.f32 %v4541, %v4579
      %v4601 = vadd.f32 %v4542, %v4590
      %v4602 = vadd.f32 %v4543, %v4591
      %v4603 = vadd.f32 %v4544, %v4585
      %v4604 = vadd.f32 %v4545, %v4592
      %v4605 = vadd.f32 %v4546, %v4593
      %v4606 = vld [vmem:[#allocation2 + $0x8] sm:$0xff]
      %v4607 = vld [vmem:[#allocation2 + $0x10] sm:$0xff]
      %v4608 = vld [vmem:[#allocation2 + $0x18] sm:$0xff]
      %v4609 = vld [vmem:[#allocation2 + $0x28] sm:$0xff]
      %v4610 = vld [vmem:[#allocation2 + $0x30] sm:$0xff]
      %v4611 = vld [vmem:[#allocation2 + $0x38] sm:$0xff]
      %s4612 = scalar_lea.vmem %s12, 240
      %v4613 = vld [vmem:[%s4612] sm:$0xff]
      %v4614 = vld [vmem:[%s4612 + $0x8] sm:$0xff]
      %4616 = vset.pattern.permute.xlu0 0
      %4617 = vperm.xlu0 %4616, %v4613
      %v4618 = vpop.permute.xlu0 %4617
      %4621 = vset.pattern.permute.xlu0 0
      %4622 = vperm.xlu0 %4621, %v4614
      %v4623 = vpop.permute.xlu0 %4622
      %v4625 = vmul.f32 %v4606, %v4618
      %v4626 = vmul.f32 %v4607, %v4618
      %v4627 = vmul.f32 %v4608, %v4618
      %v4628 = vmul.f32 %v4609, %v4623
      %v4629 = vmul.f32 %v4610, %v4623
      %v4630 = vmul.f32 %v4611, %v4623
      %4637 = vrot.lane.b32.xlu0 %v4625, 80
      %v4638 = vpop.permute.xlu0 %4637
      %4639 = vrot.lane.b32.xlu0 %v4626, 80
      %v4640 = vpop.permute.xlu0 %4639
      %4641 = vrot.lane.b32.xlu0 %v4627, 80
      %v4642 = vpop.permute.xlu0 %4641
      %4643 = vrot.lane.b32.xlu0 %v4628, 80
      %v4644 = vpop.permute.xlu0 %4643
      %4645 = vrot.lane.b32.xlu0 %v4629, 80
      %v4646 = vpop.permute.xlu0 %4645
      %4647 = vrot.lane.b32.xlu0 %v4630, 80
      %v4648 = vpop.permute.xlu0 %4647
      %v4649 = vsel %vm2392, %v4638, %v4640
      %v4650 = vsel %vm2392, %v4640, %v4642
      %v4651 = vsel %vm2392, %v4644, %v4646
      %v4652 = vsel %vm2392, %v4646, %v4648
      %v4659 = vadd.f32 %v4600, %v4638
      %v4660 = vadd.f32 %v4601, %v4649
      %v4661 = vadd.f32 %v4602, %v4650
      %v4662 = vadd.f32 %v4603, %v4644
      %v4663 = vadd.f32 %v4604, %v4651
      %v4664 = vadd.f32 %v4605, %v4652
      %v4665 = vld [vmem:[#allocation2 + $0x48] sm:$0xff]
      %v4666 = vld [vmem:[#allocation2 + $0x50] sm:$0xff]
      %v4667 = vld [vmem:[#allocation2 + $0x58] sm:$0xff]
      %v4668 = vld [vmem:[#allocation2 + $0x68] sm:$0xff]
      %v4669 = vld [vmem:[#allocation2 + $0x70] sm:$0xff]
      %v4670 = vld [vmem:[#allocation2 + $0x78] sm:$0xff]
      %s4671 = scalar_lea.vmem %s12, 256
      %v4672 = vld [vmem:[%s4671] sm:$0xff]
      %v4673 = vld [vmem:[%s4671 + $0x8] sm:$0xff]
      %4675 = vset.pattern.permute.xlu0 0
      %4676 = vperm.xlu0 %4675, %v4672
      %v4677 = vpop.permute.xlu0 %4676
      %4680 = vset.pattern.permute.xlu0 0
      %4681 = vperm.xlu0 %4680, %v4673
      %v4682 = vpop.permute.xlu0 %4681
      %v4684 = vmul.f32 %v4665, %v4677
      %v4685 = vmul.f32 %v4666, %v4677
      %v4686 = vmul.f32 %v4667, %v4677
      %v4687 = vmul.f32 %v4668, %v4682
      %v4688 = vmul.f32 %v4669, %v4682
      %v4689 = vmul.f32 %v4670, %v4682
      %4696 = vrot.lane.b32.xlu0 %v4684, 79
      %v4697 = vpop.permute.xlu0 %4696
      %4698 = vrot.lane.b32.xlu0 %v4685, 79
      %v4699 = vpop.permute.xlu0 %4698
      %4700 = vrot.lane.b32.xlu0 %v4686, 79
      %v4701 = vpop.permute.xlu0 %4700
      %4702 = vrot.lane.b32.xlu0 %v4687, 79
      %v4703 = vpop.permute.xlu0 %4702
      %4704 = vrot.lane.b32.xlu0 %v4688, 79
      %v4705 = vpop.permute.xlu0 %4704
      %4706 = vrot.lane.b32.xlu0 %v4689, 79
      %v4707 = vpop.permute.xlu0 %4706
      %v4708 = vsel %vm2452, %v4697, %v4699
      %v4709 = vsel %vm2452, %v4699, %v4701
      %v4710 = vsel %vm2452, %v4703, %v4705
      %v4711 = vsel %vm2452, %v4705, %v4707
      %v4718 = vadd.f32 %v4659, %v4697
      %v4719 = vadd.f32 %v4660, %v4708
      %v4720 = vadd.f32 %v4661, %v4709
      %v4721 = vadd.f32 %v4662, %v4703
      %v4722 = vadd.f32 %v4663, %v4710
      %v4723 = vadd.f32 %v4664, %v4711
      %v4724 = vld [vmem:[#allocation2 + $0x88] sm:$0xff]
      %v4725 = vld [vmem:[#allocation2 + $0x90] sm:$0xff]
      %v4726 = vld [vmem:[#allocation2 + $0x98] sm:$0xff]
      %v4727 = vld [vmem:[#allocation2 + $0xa8] sm:$0xff]
      %v4728 = vld [vmem:[#allocation2 + $0xb0] sm:$0xff]
      %v4729 = vld [vmem:[#allocation2 + $0xb8] sm:$0xff]
      %s4730 = scalar_lea.vmem %s12, 272
      %v4731 = vld [vmem:[%s4730] sm:$0xff]
      %v4732 = vld [vmem:[%s4730 + $0x8] sm:$0xff]
      %4734 = vset.pattern.permute.xlu0 0
      %4735 = vperm.xlu0 %4734, %v4731
      %v4736 = vpop.permute.xlu0 %4735
      %4739 = vset.pattern.permute.xlu0 0
      %4740 = vperm.xlu0 %4739, %v4732
      %v4741 = vpop.permute.xlu0 %4740
      %v4743 = vmul.f32 %v4724, %v4736
      %v4744 = vmul.f32 %v4725, %v4736
      %v4745 = vmul.f32 %v4726, %v4736
      %v4746 = vmul.f32 %v4727, %v4741
      %v4747 = vmul.f32 %v4728, %v4741
      %v4748 = vmul.f32 %v4729, %v4741
      %4755 = vrot.lane.b32.xlu0 %v4743, 78
      %v4756 = vpop.permute.xlu0 %4755
      %4757 = vrot.lane.b32.xlu0 %v4744, 78
      %v4758 = vpop.permute.xlu0 %4757
      %4759 = vrot.lane.b32.xlu0 %v4745, 78
      %v4760 = vpop.permute.xlu0 %4759
      %4761 = vrot.lane.b32.xlu0 %v4746, 78
      %v4762 = vpop.permute.xlu0 %4761
      %4763 = vrot.lane.b32.xlu0 %v4747, 78
      %v4764 = vpop.permute.xlu0 %4763
      %4765 = vrot.lane.b32.xlu0 %v4748, 78
      %v4766 = vpop.permute.xlu0 %4765
      %v4767 = vsel %vm2512, %v4756, %v4758
      %v4768 = vsel %vm2512, %v4758, %v4760
      %v4769 = vsel %vm2512, %v4762, %v4764
      %v4770 = vsel %vm2512, %v4764, %v4766
      %v4777 = vadd.f32 %v4718, %v4756
      %v4778 = vadd.f32 %v4719, %v4767
      %v4779 = vadd.f32 %v4720, %v4768
      %v4780 = vadd.f32 %v4721, %v4762
      %v4781 = vadd.f32 %v4722, %v4769
      %v4782 = vadd.f32 %v4723, %v4770
      %s4783 = scalar_lea.vmem %s12, 288
      %v4784 = vld [vmem:[%s4783] sm:$0xff]
      %v4785 = vld [vmem:[%s4783 + $0x8] sm:$0xff]
      %4787 = vset.pattern.permute.xlu0 0
      %4788 = vperm.xlu0 %4787, %v4784
      %v4789 = vpop.permute.xlu0 %4788
      %4792 = vset.pattern.permute.xlu0 0
      %4793 = vperm.xlu0 %4792, %v4785
      %v4794 = vpop.permute.xlu0 %4793
      %v4796 = vmul.f32 %v4488, %v4789
      %v4797 = vmul.f32 %v4489, %v4789
      %v4798 = vmul.f32 %v4490, %v4789
      %v4799 = vmul.f32 %v4491, %v4794
      %v4800 = vmul.f32 %v4492, %v4794
      %v4801 = vmul.f32 %v4493, %v4794
      %4808 = vrot.lane.b32.xlu0 %v4796, 77
      %v4809 = vpop.permute.xlu0 %4808
      %4810 = vrot.lane.b32.xlu0 %v4797, 77
      %v4811 = vpop.permute.xlu0 %4810
      %4812 = vrot.lane.b32.xlu0 %v4798, 77
      %v4813 = vpop.permute.xlu0 %4812
      %4814 = vrot.lane.b32.xlu0 %v4799, 77
      %v4815 = vpop.permute.xlu0 %4814
      %4816 = vrot.lane.b32.xlu0 %v4800, 77
      %v4817 = vpop.permute.xlu0 %4816
      %4818 = vrot.lane.b32.xlu0 %v4801, 77
      %v4819 = vpop.permute.xlu0 %4818
      %v4820 = vsel %vm2566, %v4809, %v4811
      %v4821 = vsel %vm2566, %v4811, %v4813
      %v4822 = vsel %vm2566, %v4815, %v4817
      %v4823 = vsel %vm2566, %v4817, %v4819
      %v4830 = vadd.f32 %v4777, %v4809
      %v4831 = vadd.f32 %v4778, %v4820
      %v4832 = vadd.f32 %v4779, %v4821
      %v4833 = vadd.f32 %v4780, %v4815
      %v4834 = vadd.f32 %v4781, %v4822
      %v4835 = vadd.f32 %v4782, %v4823
      %s4836 = scalar_lea.vmem %s12, 304
      %v4837 = vld [vmem:[%s4836] sm:$0xff]
      %v4838 = vld [vmem:[%s4836 + $0x8] sm:$0xff]
      %4840 = vset.pattern.permute.xlu0 0
      %4841 = vperm.xlu0 %4840, %v4837
      %v4842 = vpop.permute.xlu0 %4841
      %4845 = vset.pattern.permute.xlu0 0
      %4846 = vperm.xlu0 %4845, %v4838
      %v4847 = vpop.permute.xlu0 %4846
      %v4849 = vmul.f32 %v4547, %v4842
      %v4850 = vmul.f32 %v4548, %v4842
      %v4851 = vmul.f32 %v4549, %v4842
      %v4852 = vmul.f32 %v4550, %v4847
      %v4853 = vmul.f32 %v4551, %v4847
      %v4854 = vmul.f32 %v4552, %v4847
      %4861 = vrot.lane.b32.xlu0 %v4849, 76
      %v4862 = vpop.permute.xlu0 %4861
      %4863 = vrot.lane.b32.xlu0 %v4850, 76
      %v4864 = vpop.permute.xlu0 %4863
      %4865 = vrot.lane.b32.xlu0 %v4851, 76
      %v4866 = vpop.permute.xlu0 %4865
      %4867 = vrot.lane.b32.xlu0 %v4852, 76
      %v4868 = vpop.permute.xlu0 %4867
      %4869 = vrot.lane.b32.xlu0 %v4853, 76
      %v4870 = vpop.permute.xlu0 %4869
      %4871 = vrot.lane.b32.xlu0 %v4854, 76
      %v4872 = vpop.permute.xlu0 %4871
      %v4873 = vsel %vm2620, %v4862, %v4864
      %v4874 = vsel %vm2620, %v4864, %v4866
      %v4875 = vsel %vm2620, %v4868, %v4870
      %v4876 = vsel %vm2620, %v4870, %v4872
      %v4883 = vadd.f32 %v4830, %v4862
      %v4884 = vadd.f32 %v4831, %v4873
      %v4885 = vadd.f32 %v4832, %v4874
      %v4886 = vadd.f32 %v4833, %v4868
      %v4887 = vadd.f32 %v4834, %v4875
      %v4888 = vadd.f32 %v4835, %v4876
      %s4889 = scalar_lea.vmem %s12, 320
      %v4890 = vld [vmem:[%s4889] sm:$0xff]
      %v4891 = vld [vmem:[%s4889 + $0x8] sm:$0xff]
      %4893 = vset.pattern.permute.xlu0 0
      %4894 = vperm.xlu0 %4893, %v4890
      %v4895 = vpop.permute.xlu0 %4894
      %4898 = vset.pattern.permute.xlu0 0
      %4899 = vperm.xlu0 %4898, %v4891
      %v4900 = vpop.permute.xlu0 %4899
      %v4902 = vmul.f32 %v4606, %v4895
      %v4903 = vmul.f32 %v4607, %v4895
      %v4904 = vmul.f32 %v4608, %v4895
      %v4905 = vmul.f32 %v4609, %v4900
      %v4906 = vmul.f32 %v4610, %v4900
      %v4907 = vmul.f32 %v4611, %v4900
      %4914 = vrot.lane.b32.xlu0 %v4902, 64
      %v4915 = vpop.permute.xlu0 %4914
      %4916 = vrot.lane.b32.xlu0 %v4903, 64
      %v4917 = vpop.permute.xlu0 %4916
      %4918 = vrot.lane.b32.xlu0 %v4904, 64
      %v4919 = vpop.permute.xlu0 %4918
      %4920 = vrot.lane.b32.xlu0 %v4905, 64
      %v4921 = vpop.permute.xlu0 %4920
      %4922 = vrot.lane.b32.xlu0 %v4906, 64
      %v4923 = vpop.permute.xlu0 %4922
      %4924 = vrot.lane.b32.xlu0 %v4907, 64
      %v4925 = vpop.permute.xlu0 %4924
      %v4926 = vsel %vm2674, %v4915, %v4917
      %v4927 = vsel %vm2674, %v4917, %v4919
      %v4928 = vsel %vm2674, %v4921, %v4923
      %v4929 = vsel %vm2674, %v4923, %v4925
      %v4936 = vadd.f32 %v4883, %v4915
      %v4937 = vadd.f32 %v4884, %v4926
      %v4938 = vadd.f32 %v4885, %v4927
      %v4939 = vadd.f32 %v4886, %v4921
      %v4940 = vadd.f32 %v4887, %v4928
      %v4941 = vadd.f32 %v4888, %v4929
      %s4942 = scalar_lea.vmem %s12, 336
      %v4943 = vld [vmem:[%s4942] sm:$0xff]
      %v4944 = vld [vmem:[%s4942 + $0x8] sm:$0xff]
      %4946 = vset.pattern.permute.xlu0 0
      %4947 = vperm.xlu0 %4946, %v4943
      %v4948 = vpop.permute.xlu0 %4947
      %4951 = vset.pattern.permute.xlu0 0
      %4952 = vperm.xlu0 %4951, %v4944
      %v4953 = vpop.permute.xlu0 %4952
      %v4955 = vmul.f32 %v4665, %v4948
      %v4956 = vmul.f32 %v4666, %v4948
      %v4957 = vmul.f32 %v4667, %v4948
      %v4958 = vmul.f32 %v4668, %v4953
      %v4959 = vmul.f32 %v4669, %v4953
      %v4960 = vmul.f32 %v4670, %v4953
      %4967 = vrot.lane.b32.xlu0 %v4955, 63
      %v4968 = vpop.permute.xlu0 %4967
      %4969 = vrot.lane.b32.xlu0 %v4956, 63
      %v4970 = vpop.permute.xlu0 %4969
      %4971 = vrot.lane.b32.xlu0 %v4957, 63
      %v4972 = vpop.permute.xlu0 %4971
      %4973 = vrot.lane.b32.xlu0 %v4958, 63
      %v4974 = vpop.permute.xlu0 %4973
      %4975 = vrot.lane.b32.xlu0 %v4959, 63
      %v4976 = vpop.permute.xlu0 %4975
      %4977 = vrot.lane.b32.xlu0 %v4960, 63
      %v4978 = vpop.permute.xlu0 %4977
      %v4979 = vsel %vm2728, %v4968, %v4970
      %v4980 = vsel %vm2728, %v4970, %v4972
      %v4981 = vsel %vm2728, %v4974, %v4976
      %v4982 = vsel %vm2728, %v4976, %v4978
      %v4989 = vadd.f32 %v4936, %v4968
      %v4990 = vadd.f32 %v4937, %v4979
      %v4991 = vadd.f32 %v4938, %v4980
      %v4992 = vadd.f32 %v4939, %v4974
      %v4993 = vadd.f32 %v4940, %v4981
      %v4994 = vadd.f32 %v4941, %v4982
      %s4995 = scalar_lea.vmem %s12, 352
      %v4996 = vld [vmem:[%s4995] sm:$0xff]
      %v4997 = vld [vmem:[%s4995 + $0x8] sm:$0xff]
      %4999 = vset.pattern.permute.xlu0 0
      %5000 = vperm.xlu0 %4999, %v4996
      %v5001 = vpop.permute.xlu0 %5000
      %5004 = vset.pattern.permute.xlu0 0
      %5005 = vperm.xlu0 %5004, %v4997
      %v5006 = vpop.permute.xlu0 %5005
      %v5008 = vmul.f32 %v4724, %v5001
      %v5009 = vmul.f32 %v4725, %v5001
      %v5010 = vmul.f32 %v4726, %v5001
      %v5011 = vmul.f32 %v4727, %v5006
      %v5012 = vmul.f32 %v4728, %v5006
      %v5013 = vmul.f32 %v4729, %v5006
      %5020 = vrot.lane.b32.xlu0 %v5008, 62
      %v5021 = vpop.permute.xlu0 %5020
      %5022 = vrot.lane.b32.xlu0 %v5009, 62
      %v5023 = vpop.permute.xlu0 %5022
      %5024 = vrot.lane.b32.xlu0 %v5010, 62
      %v5025 = vpop.permute.xlu0 %5024
      %5026 = vrot.lane.b32.xlu0 %v5011, 62
      %v5027 = vpop.permute.xlu0 %5026
      %5028 = vrot.lane.b32.xlu0 %v5012, 62
      %v5029 = vpop.permute.xlu0 %5028
      %5030 = vrot.lane.b32.xlu0 %v5013, 62
      %v5031 = vpop.permute.xlu0 %5030
      %v5032 = vsel %vm2782, %v5021, %v5023
      %v5033 = vsel %vm2782, %v5023, %v5025
      %v5034 = vsel %vm2782, %v5027, %v5029
      %v5035 = vsel %vm2782, %v5029, %v5031
      %v5042 = vadd.f32 %v4989, %v5021
      %v5043 = vadd.f32 %v4990, %v5032
      %v5044 = vadd.f32 %v4991, %v5033
      %v5045 = vadd.f32 %v4992, %v5027
      %v5046 = vadd.f32 %v4993, %v5034
      %v5047 = vadd.f32 %v4994, %v5035
      %s5048 = scalar_lea.vmem %s12, 368
      %v5049 = vld [vmem:[%s5048] sm:$0xff]
      %v5050 = vld [vmem:[%s5048 + $0x8] sm:$0xff]
      %5052 = vset.pattern.permute.xlu0 0
      %5053 = vperm.xlu0 %5052, %v5049
      %v5054 = vpop.permute.xlu0 %5053
      %5057 = vset.pattern.permute.xlu0 0
      %5058 = vperm.xlu0 %5057, %v5050
      %v5059 = vpop.permute.xlu0 %5058
      %v5061 = vmul.f32 %v4488, %v5054
      %v5062 = vmul.f32 %v4489, %v5054
      %v5063 = vmul.f32 %v4490, %v5054
      %v5064 = vmul.f32 %v4491, %v5059
      %v5065 = vmul.f32 %v4492, %v5059
      %v5066 = vmul.f32 %v4493, %v5059
      %5073 = vrot.lane.b32.xlu0 %v5061, 61
      %v5074 = vpop.permute.xlu0 %5073
      %5075 = vrot.lane.b32.xlu0 %v5062, 61
      %v5076 = vpop.permute.xlu0 %5075
      %5077 = vrot.lane.b32.xlu0 %v5063, 61
      %v5078 = vpop.permute.xlu0 %5077
      %5079 = vrot.lane.b32.xlu0 %v5064, 61
      %v5080 = vpop.permute.xlu0 %5079
      %5081 = vrot.lane.b32.xlu0 %v5065, 61
      %v5082 = vpop.permute.xlu0 %5081
      %5083 = vrot.lane.b32.xlu0 %v5066, 61
      %v5084 = vpop.permute.xlu0 %5083
      %v5085 = vsel %vm2836, %v5074, %v5076
      %v5086 = vsel %vm2836, %v5076, %v5078
      %v5087 = vsel %vm2836, %v5080, %v5082
      %v5088 = vsel %vm2836, %v5082, %v5084
      %v5095 = vadd.f32 %v5042, %v5074
      %v5096 = vadd.f32 %v5043, %v5085
      %v5097 = vadd.f32 %v5044, %v5086
      %v5098 = vadd.f32 %v5045, %v5080
      %v5099 = vadd.f32 %v5046, %v5087
      %v5100 = vadd.f32 %v5047, %v5088
      %s5101 = scalar_lea.vmem %s12, 384
      %v5102 = vld [vmem:[%s5101] sm:$0xff]
      %v5103 = vld [vmem:[%s5101 + $0x8] sm:$0xff]
      %5105 = vset.pattern.permute.xlu0 0
      %5106 = vperm.xlu0 %5105, %v5102
      %v5107 = vpop.permute.xlu0 %5106
      %5110 = vset.pattern.permute.xlu0 0
      %5111 = vperm.xlu0 %5110, %v5103
      %v5112 = vpop.permute.xlu0 %5111
      %v5114 = vmul.f32 %v4547, %v5107
      %v5115 = vmul.f32 %v4548, %v5107
      %v5116 = vmul.f32 %v4549, %v5107
      %v5117 = vmul.f32 %v4550, %v5112
      %v5118 = vmul.f32 %v4551, %v5112
      %v5119 = vmul.f32 %v4552, %v5112
      %5126 = vrot.lane.b32.xlu0 %v5114, 60
      %v5127 = vpop.permute.xlu0 %5126
      %5128 = vrot.lane.b32.xlu0 %v5115, 60
      %v5129 = vpop.permute.xlu0 %5128
      %5130 = vrot.lane.b32.xlu0 %v5116, 60
      %v5131 = vpop.permute.xlu0 %5130
      %5132 = vrot.lane.b32.xlu0 %v5117, 60
      %v5133 = vpop.permute.xlu0 %5132
      %5134 = vrot.lane.b32.xlu0 %v5118, 60
      %v5135 = vpop.permute.xlu0 %5134
      %5136 = vrot.lane.b32.xlu0 %v5119, 60
      %v5137 = vpop.permute.xlu0 %5136
      %v5138 = vsel %vm2890, %v5127, %v5129
      %v5139 = vsel %vm2890, %v5129, %v5131
      %v5140 = vsel %vm2890, %v5133, %v5135
      %v5141 = vsel %vm2890, %v5135, %v5137
      %v5148 = vadd.f32 %v5095, %v5127
      %v5149 = vadd.f32 %v5096, %v5138
      %v5150 = vadd.f32 %v5097, %v5139
      %v5151 = vadd.f32 %v5098, %v5133
      %v5152 = vadd.f32 %v5099, %v5140
      %v5153 = vadd.f32 %v5100, %v5141
      %v5154 = vld [vmem:[%s13] sm:$0xff]
      %v5155 = vld [vmem:[%s13 + $0x8] sm:$0xff]
      %5157 = vset.pattern.permute.xlu0 0
      %5158 = vperm.xlu0 %5157, %v5154
      %v5159 = vpop.permute.xlu0 %5158
      %5162 = vset.pattern.permute.xlu0 0
      %5163 = vperm.xlu0 %5162, %v5155
      %v5164 = vpop.permute.xlu0 %5163
      %v5166 = vadd.f32 %v5148, %v5159
      %v5167 = vadd.f32 %v5149, %v5159
      %v5168 = vadd.f32 %v5150, %v5159
      %v5169 = vadd.f32 %v5151, %v5164
      %v5170 = vadd.f32 %v5152, %v5164
      %v5171 = vadd.f32 %v5153, %v5164
      %v5172 = vmax.f32 %v5166, 0.0
      %v5173 = vmax.f32 %v5167, 0.0
      %v5174 = vmax.f32 %v5168, 0.0
      %v5175 = vmax.f32 %v5169, 0.0
      %v5176 = vmax.f32 %v5170, 0.0
      %v5177 = vmax.f32 %v5171, 0.0
      %v5178 = vld [vmem:[%s14] sm:$0xff]
      %v5179 = vld [vmem:[%s14 + $0x8] sm:$0xff]
      %v5180 = vld [vmem:[%s15] sm:$0xff]
      %v5181 = vld [vmem:[%s15 + $0x8] sm:$0xff]
      %5183 = vset.pattern.permute.xlu0 0
      %5184 = vperm.xlu0 %5183, %v5180
      %v5185 = vpop.permute.xlu0 %5184
      %5188 = vset.pattern.permute.xlu0 0
      %5189 = vperm.xlu0 %5188, %v5181
      %v5190 = vpop.permute.xlu0 %5189
      %5198 = vrot.lane.b32.xlu0 %v5172, 34
      %v5199 = vpop.permute.xlu0 %5198
      %5200 = vrot.lane.b32.xlu0 %v5173, 34
      %v5201 = vpop.permute.xlu0 %5200
      %5202 = vrot.lane.b32.xlu0 %v5174, 34
      %v5203 = vpop.permute.xlu0 %5202
      %5204 = vrot.lane.b32.xlu0 %v5175, 34
      %v5205 = vpop.permute.xlu0 %5204
      %5206 = vrot.lane.b32.xlu0 %v5176, 34
      %v5207 = vpop.permute.xlu0 %5206
      %5208 = vrot.lane.b32.xlu0 %v5177, 34
      %v5209 = vpop.permute.xlu0 %5208
      %v5210 = vsel %vm2963, %v5199, %v5201
      %v5211 = vsel %vm2963, %v5201, %v5203
      %v5212 = vsel %vm2963, %v5205, %v5207
      %v5213 = vsel %vm2963, %v5207, %v5209
      %v5219 = vsel %vm628, %v5178, 0
      %v5222 = vsel %vm628, %v5179, 0
      %5224 = vmatprep.subr.mxu0 0.0
      %5225 = vmatpush1.msra.mxu0 0.0
      %5226 = vmatprep.subr.mxu0 0.0
      %5227 = vmatpush1.msra.mxu0 0.0
      %5228 = vmatprep.subr.mxu0 0.0
      %5229 = vmatpush1.msra.mxu0 0.0
      %5230 = vmatprep.subr.mxu0 0.0
      %5231 = vmatpush1.msra.mxu0 0.0
      %5232 = vmatprep.subr.mxu0 0.0
      %5233 = vmatpush1.msra.mxu0 0.0
      %5234 = vmatprep.subr.mxu0 0.0
      %5235 = vmatpush1.msra.mxu0 0.0
      %5236 = vmatprep.subr.mxu0 0.0
      %5237 = vmatpush1.msra.mxu0 0.0
      %5238 = vmatprep.subr.mxu0 0.0
      %5239 = vmatpush1.msra.mxu0 0.0
      %5240 = vmatprep.subr.mxu0 0.0
      %5241 = vmatpush1.msra.mxu0 0.0
      %5242 = vmatprep.subr.mxu0 0.0
      %5243 = vmatpush1.msra.mxu0 0.0
      %5244 = vmatprep.subr.mxu0 0.0
      %5245 = vmatpush1.msra.mxu0 0.0
      %5246 = vmatprep.subr.mxu0 0.0
      %5247 = vmatpush1.msra.mxu0 0.0
      %5248 = vmatprep.subr.mxu0 0.0
      %5249 = vmatpush1.msra.mxu0 0.0
      %5250 = vmatprep.subr.mxu0 0.0
      %5251 = vmatpush1.msra.mxu0 0.0
      %5252 = vmatprep.subr.mxu0 %v5213
      %5253 = vmatpush1.msra.mxu0 %v5212
      %5254 = vmatprep.subr.mxu0 %v5211
      %5255 = vmatpush1.msra.mxu0 %v5210
      %5256 = vmatprep.subr.mxu0 0.0
      %5257 = vmatpush2.msra.mxu0 0.0
      %5258 = vmatprep.subr.mxu0 0.0
      %5259 = vmatpush2.msra.mxu0 0.0
      %5260 = vmatprep.subr.mxu0 0.0
      %5261 = vmatpush2.msra.mxu0 0.0
      %5262 = vmatprep.subr.mxu0 0.0
      %5263 = vmatpush2.msra.mxu0 0.0
      %5264 = vmatprep.subr.mxu0 0.0
      %5265 = vmatpush2.msra.mxu0 0.0
      %5266 = vmatprep.subr.mxu0 0.0
      %5267 = vmatpush2.msra.mxu0 0.0
      %5268 = vmatprep.subr.mxu0 0.0
      %5269 = vmatpush2.msra.mxu0 0.0
      %5270 = vmatprep.subr.mxu0 0.0
      %5271 = vmatpush2.msra.mxu0 0.0
      %5272 = vmatprep.subr.mxu0 0.0
      %5273 = vmatpush2.msra.mxu0 0.0
      %5274 = vmatprep.subr.mxu0 0.0
      %5275 = vmatpush2.msra.mxu0 0.0
      %5276 = vmatprep.subr.mxu0 0.0
      %5277 = vmatpush2.msra.mxu0 0.0
      %5278 = vmatprep.subr.mxu0 0.0
      %5279 = vmatpush2.msra.mxu0 0.0
      %5280 = vmatprep.subr.mxu0 0.0
      %5281 = vmatpush2.msra.mxu0 0.0
      %5282 = vmatprep.subr.mxu0 0.0
      %5283 = vmatpush2.msra.mxu0 0.0
      %5284 = vmatprep.subr.mxu0 0.0
      %5285 = vmatpush2.msra.mxu0 0.0
      %5286 = vmatprep.subr.mxu0 0.0
      %5287 = vmatpush2.msra.mxu0 0.0
      %5288 = vmatprep.mubr.f32.mxu0 0.0
      %5289 = vmatmul.mubr.f32.gmra.mxu0 %v5219
      %v5290 = vpop.f32.mrf.mxu0
      %v5291 = vadd.f32 %v5185, %v5290
      %v5292 = vpop.f32.mrf.mxu0
      %v5293 = vadd.f32 %v5185, %v5292
      %5294 = vmatprep.mubr.f32.mxu0 0.0
      %5295 = vmatmul.mubr.f32.gmra.mxu0 %v5222
      %v5296 = vpop.f32.mrf.mxu0
      %v5297 = vadd.f32 %v5190, %v5296
      %v5298 = vpop.f32.mrf.mxu0
      %v5299 = vadd.f32 %v5190, %v5298
      %5300 = vdwg.mxu0
      %v5301 = vmax.f32 %v5291, 0.0
      %v5302 = vmax.f32 %v5293, 0.0
      %v5303 = vmax.f32 %v5297, 0.0
      %v5304 = vmax.f32 %v5299, 0.0
      %v5305 = vadd.f32 %v3059, %v5301
      %v5306 = vadd.f32 %v3060, %v5302
      %v5307 = vadd.f32 %v3061, %v5303
      %v5308 = vadd.f32 %v3062, %v5304
      %v5309 = vld [vmem:[%s16] sm:$0xff]
      %v5310 = vld [vmem:[%s16 + $0x8] sm:$0xff]
      %v5311 = vld [vmem:[%s16 + $0x10] sm:$0xff]
      %v5312 = vld [vmem:[%s16 + $0x18] sm:$0xff]
      %v5313 = vld [vmem:[%s17] sm:$0xff]
      %v5314 = vld [vmem:[%s17 + $0x8] sm:$0xff]
      %v5315 = vld [vmem:[%s17 + $0x10] sm:$0xff]
      %v5316 = vld [vmem:[%s17 + $0x18] sm:$0xff]
      %5318 = vset.pattern.permute.xlu0 0
      %5319 = vperm.xlu0 %5318, %v5313
      %v5320 = vpop.permute.xlu0 %5319
      %5323 = vset.pattern.permute.xlu0 0
      %5324 = vperm.xlu0 %5323, %v5314
      %v5325 = vpop.permute.xlu0 %5324
      %5328 = vset.pattern.permute.xlu0 0
      %5329 = vperm.xlu0 %5328, %v5315
      %v5330 = vpop.permute.xlu0 %5329
      %5333 = vset.pattern.permute.xlu0 0
      %5334 = vperm.xlu0 %5333, %v5316
      %v5335 = vpop.permute.xlu0 %5334
      %v5338 = vsel %vm989, %v5309, 0
      %v5341 = vsel %vm989, %v5310, 0
      %v5344 = vsel %vm989, %v5311, 0
      %v5347 = vsel %vm989, %v5312, 0
      %5349 = vmatprep.subr.mxu0 0.0
      %5350 = vmatpush1.msra.mxu0 0.0
      %5351 = vmatprep.subr.mxu0 0.0
      %5352 = vmatpush1.msra.mxu0 0.0
      %5353 = vmatprep.subr.mxu0 0.0
      %5354 = vmatpush1.msra.mxu0 0.0
      %5355 = vmatprep.subr.mxu0 0.0
      %5356 = vmatpush1.msra.mxu0 0.0
      %5357 = vmatprep.subr.mxu0 0.0
      %5358 = vmatpush1.msra.mxu0 0.0
      %5359 = vmatprep.subr.mxu0 0.0
      %5360 = vmatpush1.msra.mxu0 0.0
      %5361 = vmatprep.subr.mxu0 0.0
      %5362 = vmatpush1.msra.mxu0 0.0
      %5363 = vmatprep.subr.mxu0 0.0
      %5364 = vmatpush1.msra.mxu0 0.0
      %5365 = vmatprep.subr.mxu0 0.0
      %5366 = vmatpush1.msra.mxu0 0.0
      %5367 = vmatprep.subr.mxu0 0.0
      %5368 = vmatpush1.msra.mxu0 0.0
      %5369 = vmatprep.subr.mxu0 %v5308
      %5370 = vmatpush1.msra.mxu0 %v5307
      %5371 = vmatprep.subr.mxu0 %v5306
      %5372 = vmatpush1.msra.mxu0 %v5305
      %5373 = vmatprep.subr.mxu0 %v3062
      %5374 = vmatpush1.msra.mxu0 %v3061
      %5375 = vmatprep.subr.mxu0 %v3060
      %5376 = vmatpush1.msra.mxu0 %v3059
      %5377 = vmatprep.subr.mxu0 %v781
      %5378 = vmatpush1.msra.mxu0 %v780
      %5379 = vmatprep.subr.mxu0 %v779
      %5380 = vmatpush1.msra.mxu0 %v778
      %5381 = vmatprep.subr.mxu0 0.0
      %5382 = vmatpush2.msra.mxu0 0.0
      %5383 = vmatprep.subr.mxu0 0.0
      %5384 = vmatpush2.msra.mxu0 0.0
      %5385 = vmatprep.subr.mxu0 0.0
      %5386 = vmatpush2.msra.mxu0 0.0
      %5387 = vmatprep.subr.mxu0 0.0
      %5388 = vmatpush2.msra.mxu0 0.0
      %5389 = vmatprep.subr.mxu0 0.0
      %5390 = vmatpush2.msra.mxu0 0.0
      %5391 = vmatprep.subr.mxu0 0.0
      %5392 = vmatpush2.msra.mxu0 0.0
      %5393 = vmatprep.subr.mxu0 0.0
      %5394 = vmatpush2.msra.mxu0 0.0
      %5395 = vmatprep.subr.mxu0 0.0
      %5396 = vmatpush2.msra.mxu0 0.0
      %5397 = vmatprep.subr.mxu0 0.0
      %5398 = vmatpush2.msra.mxu0 0.0
      %5399 = vmatprep.subr.mxu0 0.0
      %5400 = vmatpush2.msra.mxu0 0.0
      %5401 = vmatprep.subr.mxu0 0.0
      %5402 = vmatpush2.msra.mxu0 0.0
      %5403 = vmatprep.subr.mxu0 0.0
      %5404 = vmatpush2.msra.mxu0 0.0
      %5405 = vmatprep.subr.mxu0 0.0
      %5406 = vmatpush2.msra.mxu0 0.0
      %5407 = vmatprep.subr.mxu0 0.0
      %5408 = vmatpush2.msra.mxu0 0.0
      %5409 = vmatprep.subr.mxu0 0.0
      %5410 = vmatpush2.msra.mxu0 0.0
      %5411 = vmatprep.subr.mxu0 0.0
      %5412 = vmatpush2.msra.mxu0 0.0
      %5413 = vmatprep.mubr.f32.mxu0 0.0
      %5414 = vmatmul.mubr.f32.gmra.mxu0 %v5338
      %v5415 = vpop.f32.mrf.mxu0
      %v5416 = vadd.f32 %v5320, %v5415
      %v5417 = vpop.f32.mrf.mxu0
      %v5418 = vadd.f32 %v5320, %v5417
      %5419 = vmatprep.mubr.f32.mxu0 0.0
      %5420 = vmatmul.mubr.f32.gmra.mxu0 %v5341
      %v5421 = vpop.f32.mrf.mxu0
      %v5422 = vadd.f32 %v5325, %v5421
      %v5423 = vpop.f32.mrf.mxu0
      %v5424 = vadd.f32 %v5325, %v5423
      %5425 = vmatprep.mubr.f32.mxu0 0.0
      %5426 = vmatmul.mubr.f32.gmra.mxu0 %v5344
      %v5427 = vpop.f32.mrf.mxu0
      %v5428 = vadd.f32 %v5330, %v5427
      %v5429 = vpop.f32.mrf.mxu0
      %v5430 = vadd.f32 %v5330, %v5429
      %5431 = vmatprep.mubr.f32.mxu0 0.0
      %5432 = vmatmul.mubr.f32.gmra.mxu0 %v5347
      %v5433 = vpop.f32.mrf.mxu0
      %v5434 = vadd.f32 %v5335, %v5433
      %v5435 = vpop.f32.mrf.mxu0
      %v5436 = vadd.f32 %v5335, %v5435
      %5437 = vdwg.mxu0
      %v5438 = vxor.u32 %v5416, 2147483648
      %v5439 = vxor.u32 %v5418, 2147483648
      %v5440 = vxor.u32 %v5422, 2147483648
      %v5441 = vxor.u32 %v5424, 2147483648
      %v5442 = vxor.u32 %v5428, 2147483648
      %v5443 = vxor.u32 %v5430, 2147483648
      %v5444 = vxor.u32 %v5434, 2147483648
      %v5445 = vxor.u32 %v5436, 2147483648
      %v5446 = vmul.f32 %v5438, 1.442695
      %v5447 = vpow.pop %v5446
      %v5448 = vmul.f32 %v5439, 1.442695
      %v5449 = vpow.pop %v5448
      %v5450 = vmul.f32 %v5440, 1.442695
      %v5451 = vpow.pop %v5450
      %v5452 = vmul.f32 %v5441, 1.442695
      %v5453 = vpow.pop %v5452
      %v5454 = vmul.f32 %v5442, 1.442695
      %v5455 = vpow.pop %v5454
      %v5456 = vmul.f32 %v5443, 1.442695
      %v5457 = vpow.pop %v5456
      %v5458 = vmul.f32 %v5444, 1.442695
      %v5459 = vpow.pop %v5458
      %v5460 = vmul.f32 %v5445, 1.442695
      %v5461 = vpow.pop %v5460
      %v5462 = vadd.f32 %v5447, 1.0
      %v5463 = vadd.f32 %v5449, 1.0
      %v5464 = vadd.f32 %v5451, 1.0
      %v5465 = vadd.f32 %v5453, 1.0
      %v5466 = vadd.f32 %v5455, 1.0
      %v5467 = vadd.f32 %v5457, 1.0
      %v5468 = vadd.f32 %v5459, 1.0
      %v5469 = vadd.f32 %v5461, 1.0
      %v5470 = vrcp.pop %v5462
      %v5471 = vmul.f32 1.0, %v5470
      %v5472 = vrcp.pop %v5463
      %v5473 = vmul.f32 1.0, %v5472
      %v5474 = vrcp.pop %v5464
      %v5475 = vmul.f32 1.0, %v5474
      %v5476 = vrcp.pop %v5465
      %v5477 = vmul.f32 1.0, %v5476
      %v5478 = vrcp.pop %v5466
      %v5479 = vmul.f32 1.0, %v5478
      %v5480 = vrcp.pop %v5467
      %v5481 = vmul.f32 1.0, %v5480
      %v5482 = vrcp.pop %v5468
      %v5483 = vmul.f32 1.0, %v5482
      %v5484 = vrcp.pop %v5469
      %v5485 = vmul.f32 1.0, %v5484
      %v5486 = vmul.f32 %v5416, %v5471
      %v5487 = vmul.f32 %v5418, %v5473
      %v5488 = vmul.f32 %v5422, %v5475
      %v5489 = vmul.f32 %v5424, %v5477
      %v5490 = vmul.f32 %v5428, %v5479
      %v5491 = vmul.f32 %v5430, %v5481
      %v5492 = vmul.f32 %v5434, %v5483
      %v5493 = vmul.f32 %v5436, %v5485
      %5494 = vst [vmem:[%s575] sm:$0xff] %v5486
      %5495 = vst [vmem:[%s575 + $0x8] sm:$0xff] %v5487
      %5496 = vst [vmem:[%s575 + $0x10] sm:$0xff] %v5488
      %5497 = vst [vmem:[%s575 + $0x18] sm:$0xff] %v5489
      %5498 = vst [vmem:[%s575 + $0x20] sm:$0xff] %v5490
      %5499 = vst [vmem:[%s575 + $0x28] sm:$0xff] %v5491
      %5500 = vst [vmem:[%s575 + $0x30] sm:$0xff] %v5492
      %5501 = vst [vmem:[%s575 + $0x38] sm:$0xff] %v5493
      %p5502 = scmp.lt.s32.totalorder %s29, 1
      %s5503 = scalar_select %p5502, %s29, 1
      %s5504 = smul.addr %s5503, 8
      %s5505 = smul.addr %s5504, 8
      %s5506 = scalar_lea.vmem %s18, %s5505
      // Predicated region
      $region93: #{cspstage_rtm_forward.1} parent=91 // pred_check
        %p5507 = pneg %p430
      $region94: #{cspstage_rtm_forward.1} parent=91 // pred_check_branch
        %5509 = sbr.rel (%p5507) target = $region96
      $region95: #{cspstage_rtm_forward.1} parent=91 // pred_region
        _
      $region96: #{cspstage_rtm_forward.1} parent=91 // pred_fallthru
        _
    $region92: #{cspstage_rtm_forward.1} parent=5 // pred_fallthru
      _
    %p5510 = scmp.le.s32.totalorder 2, %s24
    // Predicated region
    $region97: #{cspstage_rtm_forward.1} parent=5 // pred_check
      %p5511 = pneg %p5510
    $region98: #{cspstage_rtm_forward.1} parent=5 // pred_check_branch
      %5513 = sbr.rel (%p5511) target = $region100
    $region99: #{cspstage_rtm_forward.1} parent=5 // pred_region
      %s5514 = ssub.s32 %s24, 2
      // Predicated region
      $region101: #{cspstage_rtm_forward.1} parent=99 // pred_check
        %p5515 = pneg %p436
      $region102: #{cspstage_rtm_forward.1} parent=99 // pred_check_branch
        %5517 = sbr.rel (%p5515) target = $region104
      $region103: #{cspstage_rtm_forward.1} parent=99 // pred_region
        %p5518 = scmp.lt.s32.totalorder %s30, 1
        %s5519 = scalar_select %p5518, %s30, 1
        %s5520 = smul.addr %s5519, 8
        %s5521 = smul.addr %s5520, 8
        %s5522 = scalar_lea.vmem %s18, %s5521
      $region104: #{cspstage_rtm_forward.1} parent=99 // pred_fallthru
        _
    $region100: #{cspstage_rtm_forward.1} parent=5 // pred_fallthru
      _
  $region6: #{cspstage_rtm_forward.1} parent=0 // loop_footer
    %s28 = sadd.s32 1, %s24
  $region7: #{cspstage_rtm_forward.1} parent=0 // loop_footer_branch
    %23 = sbr.rel target = $region3
  $region8: #{cspstage_rtm_forward.1} parent=0 // loop_exit
    _

</llo_original>
